<compile_context>
chip_gen: v7x
topology: tpu7x:2x2x1
jax: 0.10.0
libtpu: 0.0.40
codegen_flags: <defaults>
</compile_context>

<pallas_src>
import functools

import jax
import jax.numpy as jnp
from jax import lax
from jax.experimental import pallas as pl
from jax.experimental.pallas import tpu as pltpu

LN_EPS = 1e-5
_HAS_BUFFERED = hasattr(pl, "Buffered")


def _round_up(x, m):
    return ((x + m - 1) // m) * m


def _pad_last(x, new_last):
    pad = new_last - x.shape[-1]
    if pad == 0:
        return x
    return jnp.pad(x, [(0, 0)] * (x.ndim - 1) + [(0, pad)])


def _vmem_capacity_bytes():
    """Physical VMEM per core; conservative 64 MiB (v7x) fallback."""
    try:
        cap = int(getattr(pltpu.get_tpu_info(), "vmem_capacity_bytes"))
        if cap > 0:
            return cap
    except Exception:
        pass
    return 64 * 1024 * 1024


def _per_step_vmem_bytes(bb, tt_blk, tap, dp):
    """Rough per-grid-step VMEM footprint estimate (bytes)."""
    bf2, f4 = 2, 4
    dbl = 2  # default double-buffering for pipelined activation blocks
    act = dbl * (bb * tt_blk * dp * bf2        # text block (bf16)
                 + bb * tt_blk * dp * bf2      # output block (bf16)
                 + bb * tap * f4)              # mask-bias block (f32)
    act += dbl * bb * tap * dp * bf2           # audio block (bf16)
    weights = (dp * dp + dp * 2 * dp) * bf2 + (8 * dp + 2 * dp) * f4  # single-buffered
    kv_scratch = bb * tap * 2 * dp * bf2       # persistent bf16 K/V scratch
    inter = 3 * bb * tt_blk * dp * f4          # t2 / q2 / cross (f32)
    inter += bb * tap * dp * f4                # a2 (f32, only at tt step 0)
    inter += bb * tap * 2 * dp * f4            # kv2 f32 before bf16 cast (tt step 0)
    inter += 2 * bb * tt_blk * tap * f4        # scores + exp (f32)
    inter += bb * tt_blk * tap * bf2           # attn probabilities (bf16)
    return act + weights + kv_scratch + inter


def _pick_block_b(batch, tt_blk, tap, dp, budget, target=8):
    """Largest divisor of batch that fits the VMEM budget; capped at batch//2 so the
    parallel grid axis has >= 2 steps (keeps both v7x TensorCores busy)."""
    cap = min(target, batch if batch == 1 else max(1, batch // 2))
    best = 1
    for bb in range(1, cap + 1):
        if batch % bb:
            continue
        if _per_step_vmem_bytes(bb, tt_blk, tap, dp) <= budget:
            best = bb
    return best


def _cross_attention_kernel(
    text_ref, audio_ref, bias_ref,
    gt_ref, bt_ref,            # norm_text  gamma/beta (1, Dp) f32
    ga_ref, ba_ref,            # norm_audio gamma/beta (1, Dp) f32
    wq_ref, bq_ref,            # query  W (Dp, Dp) bf16 (scale folded), b (1, Dp) f32
    wkv_ref, bkv_ref,          # fused key/value W (Dp, 2*Dp) bf16, b (1, 2*Dp) f32
    gp_ref, bp_ref,            # norm_post gamma/beta (1, Dp)
    out_ref,
    kv_ref,                    # persistent bf16 K/V scratch (bb, Tap, 2*Dp)
    *, inv_d, n_pad,
):
    f32 = jnp.float32
    bf16 = jnp.bfloat16

    def layer_norm(x, gamma, beta):
        # x: (rows, Dp) f32; padded lanes are exactly zero.  Two-pass variance over
        # the REAL embed dim: padded lanes each contribute mu^2 to sum((x-mu)^2),
        # subtract that exactly, then divide by real D (inv_d).
        mu = jnp.sum(x, axis=-1, keepdims=True) * inv_d
        d = x - mu
        var = (jnp.sum(d * d, axis=-1, keepdims=True) - n_pad * mu * mu) * inv_d
        var = jnp.maximum(var, 0.0)
        # gamma/beta are zero in padded lanes -> padded output lanes stay 0.
        return d * lax.rsqrt(var + LN_EPS) * gamma + beta

    dp = text_ref.shape[-1]

    # ---- K/V: compute once per batch-block (first Tt tile), keep bf16 in scratch ----
    @pl.when(pl.program_id(1) == 0)
    def _():
        audio = audio_ref[...].astype(f32)            # (bb, Tap, Dp)
        bb_a, tap, _ = audio.shape
        a2 = layer_norm(audio.reshape(bb_a * tap, dp), ga_ref[...], ba_ref[...])
        kv2 = jnp.dot(a2.astype(bf16), wkv_ref[...],
                      preferred_element_type=f32) + bkv_ref[...]
        kv_ref[...] = kv2.astype(bf16).reshape(bb_a, tap, 2 * dp)

    # ---- Q projection for this (batch-block, Tt tile) ----
    text = text_ref[...].astype(f32)                  # (bb, Tt_blk, Dp)
    bb, tt, _ = text.shape
    t2 = layer_norm(text.reshape(bb * tt, dp), gt_ref[...], bt_ref[...])
    # 1/sqrt(D) attention scale is already folded into wq/bq.
    q2 = jnp.dot(t2.astype(bf16), wq_ref[...],
                 preferred_element_type=f32) + bq_ref[...]
    q = q2.reshape(bb, tt, dp).astype(bf16)

    k = kv_ref[:, :, :dp]                             # (bb, Tap, Dp) bf16
    v = kv_ref[:, :, dp:]                             # (bb, Tap, Dp) bf16

    # Scores on the MXU, f32 accumulation; additive mask bias (0 or -1e9).
    scores = jnp.einsum("bqd,bkd->bqk", q, k, preferred_element_type=f32)
    scores = scores + bias_ref[...]                   # (bb, 1, Tap) broadcast

    # Softmax over keys: f32 VPU math, reciprocal on the EUP.
    m = jnp.max(scores, axis=-1, keepdims=True)
    e = jnp.exp(scores - m)
    attn = (e * pl.reciprocal(jnp.sum(e, axis=-1, keepdims=True),
                              approx=True)).astype(bf16)
    # TODO(synk): nn.Dropout(0.1) is identity in eval mode; training-mode dropout omitted.
    # TODO(synk): a fully-masked query row becomes uniform over Tap (incl. padded audio
    # positions); not exercised here and identical to masked_fill up to that edge case.

    cross = jnp.einsum("bqk,bkd->bqd", attn, v, preferred_element_type=f32)

    out = layer_norm(cross.reshape(bb * tt, dp), gp_ref[...], bp_ref[...])
    out_ref[...] = out.reshape(bb, tt, dp).astype(out_ref.dtype)


def _prepare_params(params, D, Dp):
    """Zero-pad to Dp, fuse K/V, fold 1/sqrt(D) into the query projection, bf16 weights."""
    (gt, bt, ga, ba, wq, bq, wk, bk, wv, bv, gp, bp) = params
    scale = 1.0 / float(D) ** 0.5

    def pad_vec(v):   # (1, D) -> (1, Dp) f32
        return _pad_last(v.astype(jnp.float32), Dp)

    def pad_mat(w):   # (D, D) -> (Dp, Dp) f32
        return jnp.pad(w.astype(jnp.float32), ((0, Dp - D), (0, Dp - D)))

    wq_p = (pad_mat(wq) * scale).astype(jnp.bfloat16)
    bq_p = pad_vec(bq) * scale
    wkv_p = jnp.concatenate([pad_mat(wk), pad_mat(wv)], axis=1).astype(jnp.bfloat16)
    bkv_p = jnp.concatenate([pad_vec(bk), pad_vec(bv)], axis=1)
    return (pad_vec(gt), pad_vec(bt), pad_vec(ga), pad_vec(ba),
            wq_p, bq_p, wkv_p, bkv_p, pad_vec(gp), pad_vec(bp))


def _run_pallas(args, *, B, bb, Tt_pad, tt_blk, Tap, Dp, vmem_limit, single_buffer):
    def const_spec(shape):
        # Shared parameters: constant index_map -> fetched once; single-buffered so
        # they do not burn a dead double-buffer copy of VMEM.
        if single_buffer and _HAS_BUFFERED:
            return pl.BlockSpec(shape, lambda i, j: (0, 0),
                                pipeline_mode=pl.Buffered(1))
        return pl.BlockSpec(shape, lambda i, j: (0, 0))

    grid_spec = pltpu.PrefetchScalarGridSpec(
        num_scalar_prefetch=0,
        grid=(B // bb, Tt_pad // tt_blk),
        in_specs=[
            pl.BlockSpec((bb, tt_blk, Dp), lambda i, j: (i, j, 0)),   # text tile
            pl.BlockSpec((bb, Tap, Dp), lambda i, j: (i, 0, 0)),      # audio block
            pl.BlockSpec((bb, 1, Tap), lambda i, j: (i, 0, 0)),       # mask bias
            const_spec((1, Dp)), const_spec((1, Dp)),                 # norm_text
            const_spec((1, Dp)), const_spec((1, Dp)),                 # norm_audio
            const_spec((Dp, Dp)), const_spec((1, Dp)),                # query (scaled)
            const_spec((Dp, 2 * Dp)), const_spec((1, 2 * Dp)),        # fused key/value
            const_spec((1, Dp)), const_spec((1, Dp)),                 # norm_post
        ],
        out_specs=pl.BlockSpec((bb, tt_blk, Dp), lambda i, j: (i, j, 0)),
        scratch_shapes=[pltpu.VMEM((bb, Tap, 2 * Dp), jnp.bfloat16)],  # K/V bf16
    )

    D_real = args[-1]  # real embed dim (last positional arg is an int, see caller)
    kernel = functools.partial(_cross_attention_kernel,
                               inv_d=1.0 / D_real, n_pad=float(Dp - D_real))

    return pl.pallas_call(
        kernel,
        out_shape=jax.ShapeDtypeStruct((B, Tt_pad, Dp), jnp.bfloat16),
        grid_spec=grid_spec,
        compiler_params=pltpu.CompilerParams(
            dimension_semantics=("parallel", "arbitrary"),
            vmem_limit_bytes=vmem_limit,
        ),
    )(*args[:-1])


def cross_attention(text, audio, audio_masks, params, *, block_b=8, block_tt=256):
    """text: (B, Tt, D); audio: (B, Ta, D); audio_masks: (B, Ta) with 0 => masked."""
    B, Tt, D = text.shape
    _, Ta, _ = audio.shape
    Dp = _round_up(D, 128)
    Tap = _round_up(Ta, 128)

    # Query-length tiling: sublane-align Tt, then tile it if it is large.
    block_tt = _round_up(max(8, block_tt), 8)
    Tt8 = _round_up(Tt, 8)
    tt_blk = Tt8 if Tt8 <= block_tt else block_tt
    Tt_pad = _round_up(Tt8, tt_blk)

    # Shape-aware VMEM budgeting (v5e/v6e: 128 MiB physical, v7x: 64 MiB).
    capacity = _vmem_capacity_bytes()
    budget = max(32 * 1024 * 1024, int(capacity * 0.75))
    bb = _pick_block_b(B, tt_blk, Tap, Dp, budget, target=block_b)
    footprint = _per_step_vmem_bytes(bb, tt_blk, Tap, Dp)
    vmem_limit = int(min(budget, max(32 * 1024 * 1024, int(footprint * 1.4))))

    # Lane-dense activation padding, bf16 on the wire (halves input DMA).
    # For production shapes keep D/Ta multiples of 128 upstream so these are no-ops.
    text_p = jnp.pad(_pad_last(text, Dp), ((0, 0), (0, Tt_pad - Tt), (0, 0)))
    text_p = text_p.astype(jnp.bfloat16)
    audio_p = jnp.pad(_pad_last(audio, Dp), ((0, 0), (0, Tap - Ta), (0, 0)))
    audio_p = audio_p.astype(jnp.bfloat16)
    # Additive mask bias: 0 where kept, -1e9 where masked (incl. padded audio positions).
    mask_p = _pad_last(audio_masks.astype(jnp.float32), Tap)
    bias_p = ((mask_p - 1.0) * 1e9).reshape(B, 1, Tap)

    params_p = _prepare_params(params, D, Dp)
    args = (text_p, audio_p, bias_p) + params_p + (D,)

    try:
        out_p = _run_pallas(args, B=B, bb=bb, Tt_pad=Tt_pad, tt_blk=tt_blk,
                            Tap=Tap, Dp=Dp, vmem_limit=vmem_limit,
                            single_buffer=True)
    except Exception:
        # Fallback for jax versions without BlockSpec pipeline_mode / Buffered(1).
        out_p = _run_pallas(args, B=B, bb=bb, Tt_pad=Tt_pad, tt_blk=tt_blk,
                            Tap=Tap, Dp=Dp, vmem_limit=vmem_limit,
                            single_buffer=False)

    return out_p[:, :Tt, :D].astype(text.dtype)


def init_params(key, D):
    ks = jax.random.split(key, 6)
    scale = 1.0 / jnp.sqrt(jnp.float32(D))
    gt = jnp.ones((1, D), jnp.float32); bt = jnp.zeros((1, D), jnp.float32)
    ga = jnp.ones((1, D), jnp.float32); ba = jnp.zeros((1, D), jnp.float32)
    gp = jnp.ones((1, D), jnp.float32); bp = jnp.zeros((1, D), jnp.float32)
    wq = jax.random.uniform(ks[0], (D, D), jnp.float32, -scale, scale)
    bq = jax.random.uniform(ks[1], (1, D), jnp.float32, -scale, scale)
    wk = jax.random.uniform(ks[2], (D, D), jnp.float32, -scale, scale)
    bk = jax.random.uniform(ks[3], (1, D), jnp.float32, -scale, scale)
    wv = jax.random.uniform(ks[4], (D, D), jnp.float32, -scale, scale)
    bv = jax.random.uniform(ks[5], (1, D), jnp.float32, -scale, scale)
    return (gt, bt, ga, ba, wq, bq, wk, bk, wv, bv, gp, bp)


def reference(text, audio, audio_masks, params):
    (gt, bt, ga, ba, wq, bq, wk, bk, wv, bv, gp, bp) = params

    def ln(x, g, b):
        mu = jnp.mean(x, axis=-1, keepdims=True)
        var = jnp.mean((x - mu) ** 2, axis=-1, keepdims=True)
        return (x - mu) * lax.rsqrt(var + LN_EPS) * g + b

    t = ln(text, gt, bt)
    a = ln(audio, ga, ba)
    q = t @ wq + bq
    k = a @ wk + bk
    v = a @ wv + bv
    scores = jnp.einsum("btd,bsd->bts", q, k) / jnp.sqrt(jnp.float32(audio.shape[-1]))
    scores = jnp.where(audio_masks[:, None, :] == 0, -1e9, scores)
    attn = jax.nn.softmax(scores, axis=-1)
    cross = jnp.einsum("bts,bsd->btd", attn, v)
    return ln(cross, gp, bp)


if __name__ == "__main__":
    B, Tt, Ta, D = 2, 8, 16, 32
    key = jax.random.PRNGKey(0)
    k_text, k_audio, k_params = jax.random.split(key, 3)

    text = jax.random.normal(k_text, (B, Tt, D), jnp.float32)
    audio = jax.random.normal(k_audio, (B, Ta, D), jnp.float32)
    audio_masks = jnp.ones((B, Ta), jnp.float32)
    audio_masks = audio_masks.at[1, 3 * Ta // 4:].set(0.0)

    params = init_params(k_params, D)

    out = cross_attention(text, audio, audio_masks, params)
    out = jax.block_until_ready(out)

    ref = reference(text, audio, audio_masks, params)
    assert out.shape == (B, Tt, D)
    # Tolerance reflects bf16 activation/weight/output storage (f32 accumulation)
    # and the approximate EUP reciprocal in the softmax normalization.
    err = float(jnp.max(jnp.abs(out - ref)))
    assert jnp.allclose(out, ref, atol=1e-1, rtol=1e-1), err
    print("KERNEL_OK")
</pallas_src>

<mosaic_0001>
module attributes {stable_mosaic.version = 11 : i64} {
  func.func @_cross_attention_kernel(%arg0: i32, %arg1: i32, %arg2: memref<1x8x128xbf16, #tpu.memory_space<vmem>>, %arg3: memref<1x128x128xbf16, #tpu.memory_space<vmem>>, %arg4: memref<1x1x128xf32, #tpu.memory_space<vmem>>, %arg5: memref<1x128xf32, #tpu.memory_space<vmem>>, %arg6: memref<1x128xf32, #tpu.memory_space<vmem>>, %arg7: memref<1x128xf32, #tpu.memory_space<vmem>>, %arg8: memref<1x128xf32, #tpu.memory_space<vmem>>, %arg9: memref<128x128xbf16, #tpu.memory_space<vmem>>, %arg10: memref<1x128xf32, #tpu.memory_space<vmem>>, %arg11: memref<128x256xbf16, #tpu.memory_space<vmem>>, %arg12: memref<1x256xf32, #tpu.memory_space<vmem>>, %arg13: memref<1x128xf32, #tpu.memory_space<vmem>>, %arg14: memref<1x128xf32, #tpu.memory_space<vmem>>, %arg15: memref<1x8x128xbf16, #tpu.memory_space<vmem>>, %arg16: memref<1x128x256xbf16, #tpu.memory_space<vmem>>) attributes {dimension_semantics = [#tpu.dimension_semantics<parallel>, #tpu.dimension_semantics<arbitrary>], iteration_bounds = array<i64: 2, 1>, scalar_prefetch = 0 : i64, scratch_operands = 1 : i64, tpu.core_type = #tpu.core_type<tc>, window_params = [{transform_indices = @transform_0, window_bounds = array<i64: 1, 8, 128>}, {transform_indices = @transform_1, window_bounds = array<i64: 1, 128, 128>}, {transform_indices = @transform_2, window_bounds = array<i64: 1, 1, 128>}, {pipeline_mode = #tpu.pipeline_mode<synchronous>, transform_indices = @transform_3, window_bounds = array<i64: 1, 128>}, {pipeline_mode = #tpu.pipeline_mode<synchronous>, transform_indices = @transform_4, window_bounds = array<i64: 1, 128>}, {pipeline_mode = #tpu.pipeline_mode<synchronous>, transform_indices = @transform_5, window_bounds = array<i64: 1, 128>}, {pipeline_mode = #tpu.pipeline_mode<synchronous>, transform_indices = @transform_6, window_bounds = array<i64: 1, 128>}, {pipeline_mode = #tpu.pipeline_mode<synchronous>, transform_indices = @transform_7, window_bounds = array<i64: 128, 128>}, {pipeline_mode = #tpu.pipeline_mode<synchronous>, transform_indices = @transform_8, window_bounds = array<i64: 1, 128>}, {pipeline_mode = #tpu.pipeline_mode<synchronous>, transform_indices = @transform_9, window_bounds = array<i64: 128, 256>}, {pipeline_mode = #tpu.pipeline_mode<synchronous>, transform_indices = @transform_10, window_bounds = array<i64: 1, 256>}, {pipeline_mode = #tpu.pipeline_mode<synchronous>, transform_indices = @transform_11, window_bounds = array<i64: 1, 128>}, {pipeline_mode = #tpu.pipeline_mode<synchronous>, transform_indices = @transform_12, window_bounds = array<i64: 1, 128>}, {transform_indices = @transform_13, window_bounds = array<i64: 1, 8, 128>}]} {
    %c0_i32 = arith.constant 0 : i32
    %0 = arith.cmpi eq, %arg1, %c0_i32 : i32
    %1 = arith.extui %0 : i1 to i32
    %c0_i32_0 = arith.constant 0 : i32
    %2 = arith.cmpi ne, %1, %c0_i32_0 : i32
    scf.if %2 {
      %c0_44 = arith.constant 0 : index
      %c0_45 = arith.constant 0 : index
      %c0_46 = arith.constant 0 : index
      %92 = vector.load %arg3[%c0_44, %c0_45, %c0_46] : memref<1x128x128xbf16, #tpu.memory_space<vmem>>, vector<1x128x128xbf16>
      %93 = arith.extf %92 : vector<1x128x128xbf16> to vector<1x128x128xf32>
      %94 = vector.shape_cast %93 : vector<1x128x128xf32> to vector<128x128xf32>
      %c0_47 = arith.constant 0 : index
      %c0_48 = arith.constant 0 : index
      %95 = vector.load %arg7[%c0_47, %c0_48] : memref<1x128xf32, #tpu.memory_space<vmem>>, vector<1x128xf32>
      %c0_49 = arith.constant 0 : index
      %c0_50 = arith.constant 0 : index
      %96 = vector.load %arg8[%c0_49, %c0_50] : memref<1x128xf32, #tpu.memory_space<vmem>>, vector<1x128xf32>
      %cst_51 = arith.constant dense<0.000000e+00> : vector<128xf32>
      %97 = vector.multi_reduction <add>, %94, %cst_51 [1] : vector<128x128xf32> to vector<128xf32>
      %98 = vector.shape_cast %97 : vector<128xf32> to vector<128x1xf32>
      %cst_52 = arith.constant 3.125000e-02 : f32
      %99 = vector.broadcast %cst_52 : f32 to vector<128x1xf32>
      %100 = arith.mulf %98, %99 : vector<128x1xf32>
      %101 = vector.broadcast %100 : vector<128x1xf32> to vector<128x128xf32>
      %102 = arith.subf %94, %101 : vector<128x128xf32>
      %103 = arith.mulf %102, %102 : vector<128x128xf32>
      %cst_53 = arith.constant dense<0.000000e+00> : vector<128xf32>
      %104 = vector.multi_reduction <add>, %103, %cst_53 [1] : vector<128x128xf32> to vector<128xf32>
      %105 = vector.shape_cast %104 : vector<128xf32> to vector<128x1xf32>
      %cst_54 = arith.constant 9.600000e+01 : f32
      %106 = vector.broadcast %cst_54 : f32 to vector<128x1xf32>
      %107 = arith.mulf %106, %100 : vector<128x1xf32>
      %108 = arith.mulf %107, %100 : vector<128x1xf32>
      %109 = arith.subf %105, %108 : vector<128x1xf32>
      %cst_55 = arith.constant 3.125000e-02 : f32
      %110 = vector.broadcast %cst_55 : f32 to vector<128x1xf32>
      %111 = arith.mulf %109, %110 : vector<128x1xf32>
      %cst_56 = arith.constant 0.000000e+00 : f32
      %112 = vector.broadcast %cst_56 : f32 to vector<128x1xf32>
      %113 = arith.maximumf %111, %112 : vector<128x1xf32>
      %cst_57 = arith.constant 9.99999974E-6 : f32
      %114 = vector.broadcast %cst_57 : f32 to vector<128x1xf32>
      %115 = arith.addf %113, %114 : vector<128x1xf32>
      %116 = math.rsqrt %115 : vector<128x1xf32>
      %117 = vector.broadcast %116 : vector<128x1xf32> to vector<128x128xf32>
      %118 = arith.mulf %102, %117 : vector<128x128xf32>
      %119 = vector.broadcast %95 : vector<1x128xf32> to vector<128x128xf32>
      %120 = arith.mulf %118, %119 : vector<128x128xf32>
      %121 = vector.broadcast %96 : vector<1x128xf32> to vector<128x128xf32>
      %122 = arith.addf %120, %121 : vector<128x128xf32>
      %123 = arith.truncf %122 : vector<128x128xf32> to vector<128x128xbf16>
      %c0_58 = arith.constant 0 : index
      %c0_59 = arith.constant 0 : index
      %124 = vector.load %arg11[%c0_58, %c0_59] : memref<128x256xbf16, #tpu.memory_space<vmem>>, vector<128x256xbf16>
      %cst_60 = arith.constant dense<0.000000e+00> : vector<128x256xf32>
      %125 = tpu.matmul %123, %124, %cst_60 {dimension_numbers = #tpu.dot_dimension_numbers<[1], [0], [0], [1], [0, 0, 1, 1], [], []>} : vector<128x128xbf16>, vector<128x256xbf16>, vector<128x256xf32> -> vector<128x256xf32>
      %c0_61 = arith.constant 0 : index
      %c0_62 = arith.constant 0 : index
      %126 = vector.load %arg12[%c0_61, %c0_62] : memref<1x256xf32, #tpu.memory_space<vmem>>, vector<1x256xf32>
      %127 = vector.broadcast %126 : vector<1x256xf32> to vector<128x256xf32>
      %128 = arith.addf %125, %127 : vector<128x256xf32>
      %129 = arith.truncf %128 : vector<128x256xf32> to vector<128x256xbf16>
      %130 = vector.shape_cast %129 : vector<128x256xbf16> to vector<1x128x256xbf16>
      %c0_63 = arith.constant 0 : index
      %c0_64 = arith.constant 0 : index
      %c0_65 = arith.constant 0 : index
      %131 = vector.load %arg16[%c0_63, %c0_64, %c0_65] : memref<1x128x256xbf16, #tpu.memory_space<vmem>>, vector<1x128x256xbf16>
      tpu.vector_store %arg16[%c0_63, %c0_64, %c0_65], %130 {strides = array<i32>} : memref<1x128x256xbf16, #tpu.memory_space<vmem>>, vector<1x128x256xbf16>,
    } else {
    }
    %c0 = arith.constant 0 : index
    %c0_1 = arith.constant 0 : index
    %c0_2 = arith.constant 0 : index
    %3 = vector.load %arg2[%c0, %c0_1, %c0_2] : memref<1x8x128xbf16, #tpu.memory_space<vmem>>, vector<1x8x128xbf16>
    %4 = arith.extf %3 : vector<1x8x128xbf16> to vector<1x8x128xf32>
    %5 = vector.shape_cast %4 : vector<1x8x128xf32> to vector<8x128xf32>
    %c0_3 = arith.constant 0 : index
    %c0_4 = arith.constant 0 : index
    %6 = vector.load %arg5[%c0_3, %c0_4] : memref<1x128xf32, #tpu.memory_space<vmem>>, vector<1x128xf32>
    %c0_5 = arith.constant 0 : index
    %c0_6 = arith.constant 0 : index
    %7 = vector.load %arg6[%c0_5, %c0_6] : memref<1x128xf32, #tpu.memory_space<vmem>>, vector<1x128xf32>
    %cst = arith.constant dense<0.000000e+00> : vector<8xf32>
    %8 = vector.multi_reduction <add>, %5, %cst [1] : vector<8x128xf32> to vector<8xf32>
    %9 = vector.shape_cast %8 : vector<8xf32> to vector<8x1xf32>
    %cst_7 = arith.constant 3.125000e-02 : f32
    %10 = vector.broadcast %cst_7 : f32 to vector<8x1xf32>
    %11 = arith.mulf %9, %10 : vector<8x1xf32>
    %12 = vector.broadcast %11 : vector<8x1xf32> to vector<8x128xf32>
    %13 = arith.subf %5, %12 : vector<8x128xf32>
    %14 = arith.mulf %13, %13 : vector<8x128xf32>
    %cst_8 = arith.constant dense<0.000000e+00> : vector<8xf32>
    %15 = vector.multi_reduction <add>, %14, %cst_8 [1] : vector<8x128xf32> to vector<8xf32>
    %16 = vector.shape_cast %15 : vector<8xf32> to vector<8x1xf32>
    %cst_9 = arith.constant 9.600000e+01 : f32
    %17 = vector.broadcast %cst_9 : f32 to vector<8x1xf32>
    %18 = arith.mulf %17, %11 : vector<8x1xf32>
    %19 = arith.mulf %18, %11 : vector<8x1xf32>
    %20 = arith.subf %16, %19 : vector<8x1xf32>
    %cst_10 = arith.constant 3.125000e-02 : f32
    %21 = vector.broadcast %cst_10 : f32 to vector<8x1xf32>
    %22 = arith.mulf %20, %21 : vector<8x1xf32>
    %cst_11 = arith.constant 0.000000e+00 : f32
    %23 = vector.broadcast %cst_11 : f32 to vector<8x1xf32>
    %24 = arith.maximumf %22, %23 : vector<8x1xf32>
    %cst_12 = arith.constant 9.99999974E-6 : f32
    %25 = vector.broadcast %cst_12 : f32 to vector<8x1xf32>
    %26 = arith.addf %24, %25 : vector<8x1xf32>
    %27 = math.rsqrt %26 : vector<8x1xf32>
    %28 = vector.broadcast %27 : vector<8x1xf32> to vector<8x128xf32>
    %29 = arith.mulf %13, %28 : vector<8x128xf32>
    %30 = vector.broadcast %6 : vector<1x128xf32> to vector<8x128xf32>
    %31 = arith.mulf %29, %30 : vector<8x128xf32>
    %32 = vector.broadcast %7 : vector<1x128xf32> to vector<8x128xf32>
    %33 = arith.addf %31, %32 : vector<8x128xf32>
    %34 = arith.truncf %33 : vector<8x128xf32> to vector<8x128xbf16>
    %c0_13 = arith.constant 0 : index
    %c0_14 = arith.constant 0 : index
    %35 = vector.load %arg9[%c0_13, %c0_14] : memref<128x128xbf16, #tpu.memory_space<vmem>>, vector<128x128xbf16>
    %cst_15 = arith.constant dense<0.000000e+00> : vector<8x128xf32>
    %36 = tpu.matmul %34, %35, %cst_15 {dimension_numbers = #tpu.dot_dimension_numbers<[1], [0], [0], [1], [0, 0, 1, 1], [], []>} : vector<8x128xbf16>, vector<128x128xbf16>, vector<8x128xf32> -> vector<8x128xf32>
    %c0_16 = arith.constant 0 : index
    %c0_17 = arith.constant 0 : index
    %37 = vector.load %arg10[%c0_16, %c0_17] : memref<1x128xf32, #tpu.memory_space<vmem>>, vector<1x128xf32>
    %38 = vector.broadcast %37 : vector<1x128xf32> to vector<8x128xf32>
    %39 = arith.addf %36, %38 : vector<8x128xf32>
    %40 = vector.shape_cast %39 : vector<8x128xf32> to vector<1x8x128xf32>
    %41 = arith.truncf %40 : vector<1x8x128xf32> to vector<1x8x128xbf16>
    %c0_18 = arith.constant 0 : index
    %c0_19 = arith.constant 0 : index
    %c0_20 = arith.constant 0 : index
    %42 = vector.load %arg16[%c0_18, %c0_19, %c0_20] : memref<1x128x256xbf16, #tpu.memory_space<vmem>>, vector<1x128x128xbf16>
    %c0_21 = arith.constant 0 : index
    %c0_22 = arith.constant 0 : index
    %c128 = arith.constant 128 : index
    %43 = vector.load %arg16[%c0_21, %c0_22, %c128] : memref<1x128x256xbf16, #tpu.memory_space<vmem>>, vector<1x128x128xbf16>
    "tpu.trace_start"() <{level = 10 : i32, message = "bqd,bkd->bqk"}> : () -> ()
    %cst_23 = arith.constant dense<0.000000e+00> : vector<1x8x128xf32>
    %44 = tpu.matmul %41, %42, %cst_23 {dimension_numbers = #tpu.dot_dimension_numbers<[2], [2], [1], [1], [0, 0, 0, 1, 1, 1], [0], [0]>} : vector<1x8x128xbf16>, vector<1x128x128xbf16>, vector<1x8x128xf32> -> vector<1x8x128xf32>
    "tpu.trace_stop"() : () -> ()
    %c0_24 = arith.constant 0 : index
    %c0_25 = arith.constant 0 : index
    %c0_26 = arith.constant 0 : index
    %45 = vector.load %arg4[%c0_24, %c0_25, %c0_26] : memref<1x1x128xf32, #tpu.memory_space<vmem>>, vector<1x1x128xf32>
    %46 = vector.broadcast %45 : vector<1x1x128xf32> to vector<1x8x128xf32>
    %47 = arith.addf %44, %46 : vector<1x8x128xf32>
    %cst_27 = arith.constant dense<0xFF800000> : vector<1x8xf32>
    %48 = vector.multi_reduction <maximumf>, %47, %cst_27 [2] : vector<1x8x128xf32> to vector<1x8xf32>
    %49 = vector.shape_cast %48 : vector<1x8xf32> to vector<1x8x1xf32>
    %50 = vector.broadcast %49 : vector<1x8x1xf32> to vector<1x8x128xf32>
    %51 = arith.subf %47, %50 : vector<1x8x128xf32>
    %52 = math.exp %51 : vector<1x8x128xf32>
    %cst_28 = arith.constant dense<0.000000e+00> : vector<1x8xf32>
    %53 = vector.multi_reduction <add>, %52, %cst_28 [2] : vector<1x8x128xf32> to vector<1x8xf32>
    %54 = vector.shape_cast %53 : vector<1x8xf32> to vector<1x8x1xf32>
    %55 = tpu.reciprocal %54 {approx = true} : vector<1x8x1xf32> -> vector<1x8x1xf32>
    %56 = vector.broadcast %55 : vector<1x8x1xf32> to vector<1x8x128xf32>
    %57 = arith.mulf %52, %56 : vector<1x8x128xf32>
    %58 = arith.truncf %57 : vector<1x8x128xf32> to vector<1x8x128xbf16>
    "tpu.trace_start"() <{level = 10 : i32, message = "bqk,bkd->bqd"}> : () -> ()
    %cst_29 = arith.constant dense<0.000000e+00> : vector<1x8x128xf32>
    %59 = tpu.matmul %58, %43, %cst_29 {dimension_numbers = #tpu.dot_dimension_numbers<[2], [1], [1], [2], [0, 0, 0, 1, 1, 2], [0], [0]>} : vector<1x8x128xbf16>, vector<1x128x128xbf16>, vector<1x8x128xf32> -> vector<1x8x128xf32>
    "tpu.trace_stop"() : () -> ()
    %60 = vector.shape_cast %59 : vector<1x8x128xf32> to vector<8x128xf32>
    %c0_30 = arith.constant 0 : index
    %c0_31 = arith.constant 0 : index
    %61 = vector.load %arg13[%c0_30, %c0_31] : memref<1x128xf32, #tpu.memory_space<vmem>>, vector<1x128xf32>
    %c0_32 = arith.constant 0 : index
    %c0_33 = arith.constant 0 : index
    %62 = vector.load %arg14[%c0_32, %c0_33] : memref<1x128xf32, #tpu.memory_space<vmem>>, vector<1x128xf32>
    %cst_34 = arith.constant dense<0.000000e+00> : vector<8xf32>
    %63 = vector.multi_reduction <add>, %60, %cst_34 [1] : vector<8x128xf32> to vector<8xf32>
    %64 = vector.shape_cast %63 : vector<8xf32> to vector<8x1xf32>
    %cst_35 = arith.constant 3.125000e-02 : f32
    %65 = vector.broadcast %cst_35 : f32 to vector<8x1xf32>
    %66 = arith.mulf %64, %65 : vector<8x1xf32>
    %67 = vector.broadcast %66 : vector<8x1xf32> to vector<8x128xf32>
    %68 = arith.subf %60, %67 : vector<8x128xf32>
    %69 = arith.mulf %68, %68 : vector<8x128xf32>
    %cst_36 = arith.constant dense<0.000000e+00> : vector<8xf32>
    %70 = vector.multi_reduction <add>, %69, %cst_36 [1] : vector<8x128xf32> to vector<8xf32>
    %71 = vector.shape_cast %70 : vector<8xf32> to vector<8x1xf32>
    %cst_37 = arith.constant 9.600000e+01 : f32
    %72 = vector.broadcast %cst_37 : f32 to vector<8x1xf32>
    %73 = arith.mulf %72, %66 : vector<8x1xf32>
    %74 = arith.mulf %73, %66 : vector<8x1xf32>
    %75 = arith.subf %71, %74 : vector<8x1xf32>
    %cst_38 = arith.constant 3.125000e-02 : f32
    %76 = vector.broadcast %cst_38 : f32 to vector<8x1xf32>
    %77 = arith.mulf %75, %76 : vector<8x1xf32>
    %cst_39 = arith.constant 0.000000e+00 : f32
    %78 = vector.broadcast %cst_39 : f32 to vector<8x1xf32>
    %79 = arith.maximumf %77, %78 : vector<8x1xf32>
    %cst_40 = arith.constant 9.99999974E-6 : f32
    %80 = vector.broadcast %cst_40 : f32 to vector<8x1xf32>
    %81 = arith.addf %79, %80 : vector<8x1xf32>
    %82 = math.rsqrt %81 : vector<8x1xf32>
    %83 = vector.broadcast %82 : vector<8x1xf32> to vector<8x128xf32>
    %84 = arith.mulf %68, %83 : vector<8x128xf32>
    %85 = vector.broadcast %61 : vector<1x128xf32> to vector<8x128xf32>
    %86 = arith.mulf %84, %85 : vector<8x128xf32>
    %87 = vector.broadcast %62 : vector<1x128xf32> to vector<8x128xf32>
    %88 = arith.addf %86, %87 : vector<8x128xf32>
    %89 = vector.shape_cast %88 : vector<8x128xf32> to vector<1x8x128xf32>
    %90 = arith.truncf %89 : vector<1x8x128xf32> to vector<1x8x128xbf16>
    %c0_41 = arith.constant 0 : index
    %c0_42 = arith.constant 0 : index
    %c0_43 = arith.constant 0 : index
    %91 = vector.load %arg15[%c0_41, %c0_42, %c0_43] : memref<1x8x128xbf16, #tpu.memory_space<vmem>>, vector<1x8x128xbf16>
    tpu.vector_store %arg15[%c0_41, %c0_42, %c0_43], %90 {strides = array<i32>} : memref<1x8x128xbf16, #tpu.memory_space<vmem>>, vector<1x8x128xbf16>,
    return
  }
  func.func @transform_0(%arg0: i32, %arg1: i32) -> (i32, i32, i32) {
    %c0_i32 = arith.constant 0 : i32
    %c0_i32_0 = arith.constant 0 : i32
    return %arg0, %arg1, %c0_i32 : i32, i32, i32
  }
  func.func @transform_1(%arg0: i32, %arg1: i32) -> (i32, i32, i32) {
    %c0_i32 = arith.constant 0 : i32
    %c0_i32_0 = arith.constant 0 : i32
    %c0_i32_1 = arith.constant 0 : i32
    return %arg0, %c0_i32, %c0_i32_0 : i32, i32, i32
  }
  func.func @transform_2(%arg0: i32, %arg1: i32) -> (i32, i32, i32) {
    %c0_i32 = arith.constant 0 : i32
    %c0_i32_0 = arith.constant 0 : i32
    %c0_i32_1 = arith.constant 0 : i32
    return %arg0, %c0_i32, %c0_i32_0 : i32, i32, i32
  }
  func.func @transform_3(%arg0: i32, %arg1: i32) -> (i32, i32) {
    %c0_i32 = arith.constant 0 : i32
    %c0_i32_0 = arith.constant 0 : i32
    %c0_i32_1 = arith.constant 0 : i32
    return %c0_i32, %c0_i32_0 : i32, i32
  }
  func.func @transform_4(%arg0: i32, %arg1: i32) -> (i32, i32) {
    %c0_i32 = arith.constant 0 : i32
    %c0_i32_0 = arith.constant 0 : i32
    %c0_i32_1 = arith.constant 0 : i32
    return %c0_i32, %c0_i32_0 : i32, i32
  }
  func.func @transform_5(%arg0: i32, %arg1: i32) -> (i32, i32) {
    %c0_i32 = arith.constant 0 : i32
    %c0_i32_0 = arith.constant 0 : i32
    %c0_i32_1 = arith.constant 0 : i32
    return %c0_i32, %c0_i32_0 : i32, i32
  }
  func.func @transform_6(%arg0: i32, %arg1: i32) -> (i32, i32) {
    %c0_i32 = arith.constant 0 : i32
    %c0_i32_0 = arith.constant 0 : i32
    %c0_i32_1 = arith.constant 0 : i32
    return %c0_i32, %c0_i32_0 : i32, i32
  }
  func.func @transform_7(%arg0: i32, %arg1: i32) -> (i32, i32) {
    %c0_i32 = arith.constant 0 : i32
    %c0_i32_0 = arith.constant 0 : i32
    %c0_i32_1 = arith.constant 0 : i32
    return %c0_i32, %c0_i32_0 : i32, i32
  }
  func.func @transform_8(%arg0: i32, %arg1: i32) -> (i32, i32) {
    %c0_i32 = arith.constant 0 : i32
    %c0_i32_0 = arith.constant 0 : i32
    %c0_i32_1 = arith.constant 0 : i32
    return %c0_i32, %c0_i32_0 : i32, i32
  }
  func.func @transform_9(%arg0: i32, %arg1: i32) -> (i32, i32) {
    %c0_i32 = arith.constant 0 : i32
    %c0_i32_0 = arith.constant 0 : i32
    %c0_i32_1 = arith.constant 0 : i32
    return %c0_i32, %c0_i32_0 : i32, i32
  }
  func.func @transform_10(%arg0: i32, %arg1: i32) -> (i32, i32) {
    %c0_i32 = arith.constant 0 : i32
    %c0_i32_0 = arith.constant 0 : i32
    %c0_i32_1 = arith.constant 0 : i32
    return %c0_i32, %c0_i32_0 : i32, i32
  }
  func.func @transform_11(%arg0: i32, %arg1: i32) -> (i32, i32) {
    %c0_i32 = arith.constant 0 : i32
    %c0_i32_0 = arith.constant 0 : i32
    %c0_i32_1 = arith.constant 0 : i32
    return %c0_i32, %c0_i32_0 : i32, i32
  }
  func.func @transform_12(%arg0: i32, %arg1: i32) -> (i32, i32) {
    %c0_i32 = arith.constant 0 : i32
    %c0_i32_0 = arith.constant 0 : i32
    %c0_i32_1 = arith.constant 0 : i32
    return %c0_i32, %c0_i32_0 : i32, i32
  }
  func.func @transform_13(%arg0: i32, %arg1: i32) -> (i32, i32, i32) {
    %c0_i32 = arith.constant 0 : i32
    %c0_i32_0 = arith.constant 0 : i32
    return %arg0, %arg1, %c0_i32 : i32, i32, i32
  }
}

module attributes {stable_mosaic.version = 11 : i64} {
  func.func @_cross_attention_kernel(%arg0: i32, %arg1: i32, %arg2: memref<1x8x128xbf16, #tpu.memory_space<vmem>>, %arg3: memref<1x128x128xbf16, #tpu.memory_space<vmem>>, %arg4: memref<1x1x128xf32, #tpu.memory_space<vmem>>, %arg5: memref<1x128xf32, #tpu.memory_space<vmem>>, %arg6: memref<1x128xf32, #tpu.memory_space<vmem>>, %arg7: memref<1x128xf32, #tpu.memory_space<vmem>>, %arg8: memref<1x128xf32, #tpu.memory_space<vmem>>, %arg9: memref<128x128xbf16, #tpu.memory_space<vmem>>, %arg10: memref<1x128xf32, #tpu.memory_space<vmem>>, %arg11: memref<128x256xbf16, #tpu.memory_space<vmem>>, %arg12: memref<1x256xf32, #tpu.memory_space<vmem>>, %arg13: memref<1x128xf32, #tpu.memory_space<vmem>>, %arg14: memref<1x128xf32, #tpu.memory_space<vmem>>, %arg15: memref<1x8x128xbf16, #tpu.memory_space<vmem>>, %arg16: memref<1x128x256xbf16, #tpu.memory_space<vmem>>) attributes {dimension_semantics = [#tpu.dimension_semantics<parallel>, #tpu.dimension_semantics<arbitrary>], iteration_bounds = array<i64: 2, 1>, scalar_prefetch = 0 : i64, scratch_operands = 1 : i64, tpu.core_type = #tpu.core_type<tc>, window_params = [{transform_indices = @transform_0, window_bounds = array<i64: 1, 8, 128>}, {transform_indices = @transform_1, window_bounds = array<i64: 1, 128, 128>}, {transform_indices = @transform_2, window_bounds = array<i64: 1, 1, 128>}, {pipeline_mode = #tpu.pipeline_mode<synchronous>, transform_indices = @transform_3, window_bounds = array<i64: 1, 128>}, {pipeline_mode = #tpu.pipeline_mode<synchronous>, transform_indices = @transform_4, window_bounds = array<i64: 1, 128>}, {pipeline_mode = #tpu.pipeline_mode<synchronous>, transform_indices = @transform_5, window_bounds = array<i64: 1, 128>}, {pipeline_mode = #tpu.pipeline_mode<synchronous>, transform_indices = @transform_6, window_bounds = array<i64: 1, 128>}, {pipeline_mode = #tpu.pipeline_mode<synchronous>, transform_indices = @transform_7, window_bounds = array<i64: 128, 128>}, {pipeline_mode = #tpu.pipeline_mode<synchronous>, transform_indices = @transform_8, window_bounds = array<i64: 1, 128>}, {pipeline_mode = #tpu.pipeline_mode<synchronous>, transform_indices = @transform_9, window_bounds = array<i64: 128, 256>}, {pipeline_mode = #tpu.pipeline_mode<synchronous>, transform_indices = @transform_10, window_bounds = array<i64: 1, 256>}, {pipeline_mode = #tpu.pipeline_mode<synchronous>, transform_indices = @transform_11, window_bounds = array<i64: 1, 128>}, {pipeline_mode = #tpu.pipeline_mode<synchronous>, transform_indices = @transform_12, window_bounds = array<i64: 1, 128>}, {transform_indices = @transform_13, window_bounds = array<i64: 1, 8, 128>}]} {
    %c0_i32 = arith.constant 0 : i32
    %0 = arith.cmpi eq, %arg1, %c0_i32 : i32
    %1 = arith.extui %0 : i1 to i32
    %c0_i32_0 = arith.constant 0 : i32
    %2 = arith.cmpi ne, %1, %c0_i32_0 : i32
    scf.if %2 {
      %c0_44 = arith.constant 0 : index
      %c0_45 = arith.constant 0 : index
      %c0_46 = arith.constant 0 : index
      %92 = vector.load %arg3[%c0_44, %c0_45, %c0_46] : memref<1x128x128xbf16, #tpu.memory_space<vmem>>, vector<1x128x128xbf16>
      %93 = arith.extf %92 : vector<1x128x128xbf16> to vector<1x128x128xf32>
      %94 = vector.shape_cast %93 : vector<1x128x128xf32> to vector<128x128xf32>
      %c0_47 = arith.constant 0 : index
      %c0_48 = arith.constant 0 : index
      %95 = vector.load %arg7[%c0_47, %c0_48] : memref<1x128xf32, #tpu.memory_space<vmem>>, vector<1x128xf32>
      %c0_49 = arith.constant 0 : index
      %c0_50 = arith.constant 0 : index
      %96 = vector.load %arg8[%c0_49, %c0_50] : memref<1x128xf32, #tpu.memory_space<vmem>>, vector<1x128xf32>
      %cst_51 = arith.constant dense<0.000000e+00> : vector<128xf32>
      %97 = vector.multi_reduction <add>, %94, %cst_51 [1] : vector<128x128xf32> to vector<128xf32>
      %98 = vector.shape_cast %97 : vector<128xf32> to vector<128x1xf32>
      %cst_52 = arith.constant 3.125000e-02 : f32
      %99 = vector.broadcast %cst_52 : f32 to vector<128x1xf32>
      %100 = arith.mulf %98, %99 : vector<128x1xf32>
      %101 = vector.broadcast %100 : vector<128x1xf32> to vector<128x128xf32>
      %102 = arith.subf %94, %101 : vector<128x128xf32>
      %103 = arith.mulf %102, %102 : vector<128x128xf32>
      %cst_53 = arith.constant dense<0.000000e+00> : vector<128xf32>
      %104 = vector.multi_reduction <add>, %103, %cst_53 [1] : vector<128x128xf32> to vector<128xf32>
      %105 = vector.shape_cast %104 : vector<128xf32> to vector<128x1xf32>
      %cst_54 = arith.constant 9.600000e+01 : f32
      %106 = vector.broadcast %cst_54 : f32 to vector<128x1xf32>
      %107 = arith.mulf %106, %100 : vector<128x1xf32>
      %108 = arith.mulf %107, %100 : vector<128x1xf32>
      %109 = arith.subf %105, %108 : vector<128x1xf32>
      %cst_55 = arith.constant 3.125000e-02 : f32
      %110 = vector.broadcast %cst_55 : f32 to vector<128x1xf32>
      %111 = arith.mulf %109, %110 : vector<128x1xf32>
      %cst_56 = arith.constant 0.000000e+00 : f32
      %112 = vector.broadcast %cst_56 : f32 to vector<128x1xf32>
      %113 = arith.maximumf %111, %112 : vector<128x1xf32>
      %cst_57 = arith.constant 9.99999974E-6 : f32
      %114 = vector.broadcast %cst_57 : f32 to vector<128x1xf32>
      %115 = arith.addf %113, %114 : vector<128x1xf32>
      %116 = math.rsqrt %115 : vector<128x1xf32>
      %117 = vector.broadcast %116 : vector<128x1xf32> to vector<128x128xf32>
      %118 = arith.mulf %102, %117 : vector<128x128xf32>
      %119 = vector.broadcast %95 : vector<1x128xf32> to vector<128x128xf32>
      %120 = arith.mulf %118, %119 : vector<128x128xf32>
      %121 = vector.broadcast %96 : vector<1x128xf32> to vector<128x128xf32>
      %122 = arith.addf %120, %121 : vector<128x128xf32>
      %123 = arith.truncf %122 : vector<128x128xf32> to vector<128x128xbf16>
      %c0_58 = arith.constant 0 : index
      %c0_59 = arith.constant 0 : index
      %124 = vector.load %arg11[%c0_58, %c0_59] : memref<128x256xbf16, #tpu.memory_space<vmem>>, vector<128x256xbf16>
      %cst_60 = arith.constant dense<0.000000e+00> : vector<128x256xf32>
      %125 = tpu.matmul %123, %124, %cst_60 {dimension_numbers = #tpu.dot_dimension_numbers<[1], [0], [0], [1], [0, 0, 1, 1], [], []>} : vector<128x128xbf16>, vector<128x256xbf16>, vector<128x256xf32> -> vector<128x256xf32>
      %c0_61 = arith.constant 0 : index
      %c0_62 = arith.constant 0 : index
      %126 = vector.load %arg12[%c0_61, %c0_62] : memref<1x256xf32, #tpu.memory_space<vmem>>, vector<1x256xf32>
      %127 = vector.broadcast %126 : vector<1x256xf32> to vector<128x256xf32>
      %128 = arith.addf %125, %127 : vector<128x256xf32>
      %129 = arith.truncf %128 : vector<128x256xf32> to vector<128x256xbf16>
      %130 = vector.shape_cast %129 : vector<128x256xbf16> to vector<1x128x256xbf16>
      %c0_63 = arith.constant 0 : index
      %c0_64 = arith.constant 0 : index
      %c0_65 = arith.constant 0 : index
      %131 = vector.load %arg16[%c0_63, %c0_64, %c0_65] : memref<1x128x256xbf16, #tpu.memory_space<vmem>>, vector<1x128x256xbf16>
      tpu.vector_store %arg16[%c0_63, %c0_64, %c0_65], %130 {strides = array<i32>} : memref<1x128x256xbf16, #tpu.memory_space<vmem>>, vector<1x128x256xbf16>,
    } else {
    }
    %c0 = arith.constant 0 : index
    %c0_1 = arith.constant 0 : index
    %c0_2 = arith.constant 0 : index
    %3 = vector.load %arg2[%c0, %c0_1, %c0_2] : memref<1x8x128xbf16, #tpu.memory_space<vmem>>, vector<1x8x128xbf16>
    %4 = arith.extf %3 : vector<1x8x128xbf16> to vector<1x8x128xf32>
    %5 = vector.shape_cast %4 : vector<1x8x128xf32> to vector<8x128xf32>
    %c0_3 = arith.constant 0 : index
    %c0_4 = arith.constant 0 : index
    %6 = vector.load %arg5[%c0_3, %c0_4] : memref<1x128xf32, #tpu.memory_space<vmem>>, vector<1x128xf32>
    %c0_5 = arith.constant 0 : index
    %c0_6 = arith.constant 0 : index
    %7 = vector.load %arg6[%c0_5, %c0_6] : memref<1x128xf32, #tpu.memory_space<vmem>>, vector<1x128xf32>
    %cst = arith.constant dense<0.000000e+00> : vector<8xf32>
    %8 = vector.multi_reduction <add>, %5, %cst [1] : vector<8x128xf32> to vector<8xf32>
    %9 = vector.shape_cast %8 : vector<8xf32> to vector<8x1xf32>
    %cst_7 = arith.constant 3.125000e-02 : f32
    %10 = vector.broadcast %cst_7 : f32 to vector<8x1xf32>
    %11 = arith.mulf %9, %10 : vector<8x1xf32>
    %12 = vector.broadcast %11 : vector<8x1xf32> to vector<8x128xf32>
    %13 = arith.subf %5, %12 : vector<8x128xf32>
    %14 = arith.mulf %13, %13 : vector<8x128xf32>
    %cst_8 = arith.constant dense<0.000000e+00> : vector<8xf32>
    %15 = vector.multi_reduction <add>, %14, %cst_8 [1] : vector<8x128xf32> to vector<8xf32>
    %16 = vector.shape_cast %15 : vector<8xf32> to vector<8x1xf32>
    %cst_9 = arith.constant 9.600000e+01 : f32
    %17 = vector.broadcast %cst_9 : f32 to vector<8x1xf32>
    %18 = arith.mulf %17, %11 : vector<8x1xf32>
    %19 = arith.mulf %18, %11 : vector<8x1xf32>
    %20 = arith.subf %16, %19 : vector<8x1xf32>
    %cst_10 = arith.constant 3.125000e-02 : f32
    %21 = vector.broadcast %cst_10 : f32 to vector<8x1xf32>
    %22 = arith.mulf %20, %21 : vector<8x1xf32>
    %cst_11 = arith.constant 0.000000e+00 : f32
    %23 = vector.broadcast %cst_11 : f32 to vector<8x1xf32>
    %24 = arith.maximumf %22, %23 : vector<8x1xf32>
    %cst_12 = arith.constant 9.99999974E-6 : f32
    %25 = vector.broadcast %cst_12 : f32 to vector<8x1xf32>
    %26 = arith.addf %24, %25 : vector<8x1xf32>
    %27 = math.rsqrt %26 : vector<8x1xf32>
    %28 = vector.broadcast %27 : vector<8x1xf32> to vector<8x128xf32>
    %29 = arith.mulf %13, %28 : vector<8x128xf32>
    %30 = vector.broadcast %6 : vector<1x128xf32> to vector<8x128xf32>
    %31 = arith.mulf %29, %30 : vector<8x128xf32>
    %32 = vector.broadcast %7 : vector<1x128xf32> to vector<8x128xf32>
    %33 = arith.addf %31, %32 : vector<8x128xf32>
    %34 = arith.truncf %33 : vector<8x128xf32> to vector<8x128xbf16>
    %c0_13 = arith.constant 0 : index
    %c0_14 = arith.constant 0 : index
    %35 = vector.load %arg9[%c0_13, %c0_14] : memref<128x128xbf16, #tpu.memory_space<vmem>>, vector<128x128xbf16>
    %cst_15 = arith.constant dense<0.000000e+00> : vector<8x128xf32>
    %36 = tpu.matmul %34, %35, %cst_15 {dimension_numbers = #tpu.dot_dimension_numbers<[1], [0], [0], [1], [0, 0, 1, 1], [], []>} : vector<8x128xbf16>, vector<128x128xbf16>, vector<8x128xf32> -> vector<8x128xf32>
    %c0_16 = arith.constant 0 : index
    %c0_17 = arith.constant 0 : index
    %37 = vector.load %arg10[%c0_16, %c0_17] : memref<1x128xf32, #tpu.memory_space<vmem>>, vector<1x128xf32>
    %38 = vector.broadcast %37 : vector<1x128xf32> to vector<8x128xf32>
    %39 = arith.addf %36, %38 : vector<8x128xf32>
    %40 = vector.shape_cast %39 : vector<8x128xf32> to vector<1x8x128xf32>
    %41 = arith.truncf %40 : vector<1x8x128xf32> to vector<1x8x128xbf16>
    %c0_18 = arith.constant 0 : index
    %c0_19 = arith.constant 0 : index
    %c0_20 = arith.constant 0 : index
    %42 = vector.load %arg16[%c0_18, %c0_19, %c0_20] : memref<1x128x256xbf16, #tpu.memory_space<vmem>>, vector<1x128x128xbf16>
    %c0_21 = arith.constant 0 : index
    %c0_22 = arith.constant 0 : index
    %c128 = arith.constant 128 : index
    %43 = vector.load %arg16[%c0_21, %c0_22, %c128] : memref<1x128x256xbf16, #tpu.memory_space<vmem>>, vector<1x128x128xbf16>
    "tpu.trace_start"() <{level = 10 : i32, message = "bqd,bkd->bqk"}> : () -> ()
    %cst_23 = arith.constant dense<0.000000e+00> : vector<1x8x128xf32>
    %44 = tpu.matmul %41, %42, %cst_23 {dimension_numbers = #tpu.dot_dimension_numbers<[2], [2], [1], [1], [0, 0, 0, 1, 1, 1], [0], [0]>} : vector<1x8x128xbf16>, vector<1x128x128xbf16>, vector<1x8x128xf32> -> vector<1x8x128xf32>
    "tpu.trace_stop"() : () -> ()
    %c0_24 = arith.constant 0 : index
    %c0_25 = arith.constant 0 : index
    %c0_26 = arith.constant 0 : index
    %45 = vector.load %arg4[%c0_24, %c0_25, %c0_26] : memref<1x1x128xf32, #tpu.memory_space<vmem>>, vector<1x1x128xf32>
    %46 = vector.broadcast %45 : vector<1x1x128xf32> to vector<1x8x128xf32>
    %47 = arith.addf %44, %46 : vector<1x8x128xf32>
    %cst_27 = arith.constant dense<0xFF800000> : vector<1x8xf32>
    %48 = vector.multi_reduction <maximumf>, %47, %cst_27 [2] : vector<1x8x128xf32> to vector<1x8xf32>
    %49 = vector.shape_cast %48 : vector<1x8xf32> to vector<1x8x1xf32>
    %50 = vector.broadcast %49 : vector<1x8x1xf32> to vector<1x8x128xf32>
    %51 = arith.subf %47, %50 : vector<1x8x128xf32>
    %52 = math.exp %51 : vector<1x8x128xf32>
    %cst_28 = arith.constant dense<0.000000e+00> : vector<1x8xf32>
    %53 = vector.multi_reduction <add>, %52, %cst_28 [2] : vector<1x8x128xf32> to vector<1x8xf32>
    %54 = vector.shape_cast %53 : vector<1x8xf32> to vector<1x8x1xf32>
    %55 = tpu.reciprocal %54 {approx = true} : vector<1x8x1xf32> -> vector<1x8x1xf32>
    %56 = vector.broadcast %55 : vector<1x8x1xf32> to vector<1x8x128xf32>
    %57 = arith.mulf %52, %56 : vector<1x8x128xf32>
    %58 = arith.truncf %57 : vector<1x8x128xf32> to vector<1x8x128xbf16>
    "tpu.trace_start"() <{level = 10 : i32, message = "bqk,bkd->bqd"}> : () -> ()
    %cst_29 = arith.constant dense<0.000000e+00> : vector<1x8x128xf32>
    %59 = tpu.matmul %58, %43, %cst_29 {dimension_numbers = #tpu.dot_dimension_numbers<[2], [1], [1], [2], [0, 0, 0, 1, 1, 2], [0], [0]>} : vector<1x8x128xbf16>, vector<1x128x128xbf16>, vector<1x8x128xf32> -> vector<1x8x128xf32>
    "tpu.trace_stop"() : () -> ()
    %60 = vector.shape_cast %59 : vector<1x8x128xf32> to vector<8x128xf32>
    %c0_30 = arith.constant 0 : index
    %c0_31 = arith.constant 0 : index
    %61 = vector.load %arg13[%c0_30, %c0_31] : memref<1x128xf32, #tpu.memory_space<vmem>>, vector<1x128xf32>
    %c0_32 = arith.constant 0 : index
    %c0_33 = arith.constant 0 : index
    %62 = vector.load %arg14[%c0_32, %c0_33] : memref<1x128xf32, #tpu.memory_space<vmem>>, vector<1x128xf32>
    %cst_34 = arith.constant dense<0.000000e+00> : vector<8xf32>
    %63 = vector.multi_reduction <add>, %60, %cst_34 [1] : vector<8x128xf32> to vector<8xf32>
    %64 = vector.shape_cast %63 : vector<8xf32> to vector<8x1xf32>
    %cst_35 = arith.constant 3.125000e-02 : f32
    %65 = vector.broadcast %cst_35 : f32 to vector<8x1xf32>
    %66 = arith.mulf %64, %65 : vector<8x1xf32>
    %67 = vector.broadcast %66 : vector<8x1xf32> to vector<8x128xf32>
    %68 = arith.subf %60, %67 : vector<8x128xf32>
    %69 = arith.mulf %68, %68 : vector<8x128xf32>
    %cst_36 = arith.constant dense<0.000000e+00> : vector<8xf32>
    %70 = vector.multi_reduction <add>, %69, %cst_36 [1] : vector<8x128xf32> to vector<8xf32>
    %71 = vector.shape_cast %70 : vector<8xf32> to vector<8x1xf32>
    %cst_37 = arith.constant 9.600000e+01 : f32
    %72 = vector.broadcast %cst_37 : f32 to vector<8x1xf32>
    %73 = arith.mulf %72, %66 : vector<8x1xf32>
    %74 = arith.mulf %73, %66 : vector<8x1xf32>
    %75 = arith.subf %71, %74 : vector<8x1xf32>
    %cst_38 = arith.constant 3.125000e-02 : f32
    %76 = vector.broadcast %cst_38 : f32 to vector<8x1xf32>
    %77 = arith.mulf %75, %76 : vector<8x1xf32>
    %cst_39 = arith.constant 0.000000e+00 : f32
    %78 = vector.broadcast %cst_39 : f32 to vector<8x1xf32>
    %79 = arith.maximumf %77, %78 : vector<8x1xf32>
    %cst_40 = arith.constant 9.99999974E-6 : f32
    %80 = vector.broadcast %cst_40 : f32 to vector<8x1xf32>
    %81 = arith.addf %79, %80 : vector<8x1xf32>
    %82 = math.rsqrt %81 : vector<8x1xf32>
    %83 = vector.broadcast %82 : vector<8x1xf32> to vector<8x128xf32>
    %84 = arith.mulf %68, %83 : vector<8x128xf32>
    %85 = vector.broadcast %61 : vector<1x128xf32> to vector<8x128xf32>
    %86 = arith.mulf %84, %85 : vector<8x128xf32>
    %87 = vector.broadcast %62 : vector<1x128xf32> to vector<8x128xf32>
    %88 = arith.addf %86, %87 : vector<8x128xf32>
    %89 = vector.shape_cast %88 : vector<8x128xf32> to vector<1x8x128xf32>
    %90 = arith.truncf %89 : vector<1x8x128xf32> to vector<1x8x128xbf16>
    %c0_41 = arith.constant 0 : index
    %c0_42 = arith.constant 0 : index
    %c0_43 = arith.constant 0 : index
    %91 = vector.load %arg15[%c0_41, %c0_42, %c0_43] : memref<1x8x128xbf16, #tpu.memory_space<vmem>>, vector<1x8x128xbf16>
    tpu.vector_store %arg15[%c0_41, %c0_42, %c0_43], %90 {strides = array<i32>} : memref<1x8x128xbf16, #tpu.memory_space<vmem>>, vector<1x8x128xbf16>,
    return
  }
  func.func @transform_0(%arg0: i32, %arg1: i32) -> (i32, i32, i32) {
    %c0_i32 = arith.constant 0 : i32
    %c0_i32_0 = arith.constant 0 : i32
    return %arg0, %arg1, %c0_i32 : i32, i32, i32
  }
  func.func @transform_1(%arg0: i32, %arg1: i32) -> (i32, i32, i32) {
    %c0_i32 = arith.constant 0 : i32
    %c0_i32_0 = arith.constant 0 : i32
    %c0_i32_1 = arith.constant 0 : i32
    return %arg0, %c0_i32, %c0_i32_0 : i32, i32, i32
  }
  func.func @transform_2(%arg0: i32, %arg1: i32) -> (i32, i32, i32) {
    %c0_i32 = arith.constant 0 : i32
    %c0_i32_0 = arith.constant 0 : i32
    %c0_i32_1 = arith.constant 0 : i32
    return %arg0, %c0_i32, %c0_i32_0 : i32, i32, i32
  }
  func.func @transform_3(%arg0: i32, %arg1: i32) -> (i32, i32) {
    %c0_i32 = arith.constant 0 : i32
    %c0_i32_0 = arith.constant 0 : i32
    %c0_i32_1 = arith.constant 0 : i32
    return %c0_i32, %c0_i32_0 : i32, i32
  }
  func.func @transform_4(%arg0: i32, %arg1: i32) -> (i32, i32) {
    %c0_i32 = arith.constant 0 : i32
    %c0_i32_0 = arith.constant 0 : i32
    %c0_i32_1 = arith.constant 0 : i32
    return %c0_i32, %c0_i32_0 : i32, i32
  }
  func.func @transform_5(%arg0: i32, %arg1: i32) -> (i32, i32) {
    %c0_i32 = arith.constant 0 : i32
    %c0_i32_0 = arith.constant 0 : i32
    %c0_i32_1 = arith.constant 0 : i32
    return %c0_i32, %c0_i32_0 : i32, i32
  }
  func.func @transform_6(%arg0: i32, %arg1: i32) -> (i32, i32) {
    %c0_i32 = arith.constant 0 : i32
    %c0_i32_0 = arith.constant 0 : i32
    %c0_i32_1 = arith.constant 0 : i32
    return %c0_i32, %c0_i32_0 : i32, i32
  }
  func.func @transform_7(%arg0: i32, %arg1: i32) -> (i32, i32) {
    %c0_i32 = arith.constant 0 : i32
    %c0_i32_0 = arith.constant 0 : i32
    %c0_i32_1 = arith.constant 0 : i32
    return %c0_i32, %c0_i32_0 : i32, i32
  }
  func.func @transform_8(%arg0: i32, %arg1: i32) -> (i32, i32) {
    %c0_i32 = arith.constant 0 : i32
    %c0_i32_0 = arith.constant 0 : i32
    %c0_i32_1 = arith.constant 0 : i32
    return %c0_i32, %c0_i32_0 : i32, i32
  }
  func.func @transform_9(%arg0: i32, %arg1: i32) -> (i32, i32) {
    %c0_i32 = arith.constant 0 : i32
    %c0_i32_0 = arith.constant 0 : i32
    %c0_i32_1 = arith.constant 0 : i32
    return %c0_i32, %c0_i32_0 : i32, i32
  }
  func.func @transform_10(%arg0: i32, %arg1: i32) -> (i32, i32) {
    %c0_i32 = arith.constant 0 : i32
    %c0_i32_0 = arith.constant 0 : i32
    %c0_i32_1 = arith.constant 0 : i32
    return %c0_i32, %c0_i32_0 : i32, i32
  }
  func.func @transform_11(%arg0: i32, %arg1: i32) -> (i32, i32) {
    %c0_i32 = arith.constant 0 : i32
    %c0_i32_0 = arith.constant 0 : i32
    %c0_i32_1 = arith.constant 0 : i32
    return %c0_i32, %c0_i32_0 : i32, i32
  }
  func.func @transform_12(%arg0: i32, %arg1: i32) -> (i32, i32) {
    %c0_i32 = arith.constant 0 : i32
    %c0_i32_0 = arith.constant 0 : i32
    %c0_i32_1 = arith.constant 0 : i32
    return %c0_i32, %c0_i32_0 : i32, i32
  }
  func.func @transform_13(%arg0: i32, %arg1: i32) -> (i32, i32, i32) {
    %c0_i32 = arith.constant 0 : i32
    %c0_i32_0 = arith.constant 0 : i32
    return %arg0, %arg1, %c0_i32 : i32, i32, i32
  }
}

</mosaic_0001>

<llo_original>
// kernel: tpu_custom_call.1
$region0: #{tpu_custom_call.1}
  #allocation0 [shape = 'u32[]', space=smem, size = 0x4, offset = 0x4, fixed_abs, tag = 'smem constant byte address 0x4 - core index']
  #allocation1 [shape = 'u32[144,128]{1,0:T(1,128)}', space=vmem, size = 0x12000, scoped, tag = 'internal scratch']
  #allocation2 [shape = 'bf16[1,128,256]{2,1,0:T(16,128)(2,1)}', space=vmem, size = 0x10000, scoped, tag = 'scratch operand']
  %s0 = inlined_call_operand.hbm [shape: bf16[2,8,128], index: 0, kind: input, shape index: {}]
  %s1 = inlined_call_operand.hbm [shape: bf16[2,128,128], index: 1, kind: input, shape index: {}]
  %s2 = inlined_call_operand.vmem [shape: f32[2,1,128], index: 2, kind: input, shape index: {}]
  %s3 = inlined_call_operand.vmem [shape: f32[1,128], index: 3, kind: input, shape index: {}]
  %s4 = inlined_call_operand.vmem [shape: f32[1,128], index: 4, kind: input, shape index: {}]
  %s5 = inlined_call_operand.vmem [shape: f32[1,128], index: 5, kind: input, shape index: {}]
  %s6 = inlined_call_operand.vmem [shape: f32[1,128], index: 6, kind: input, shape index: {}]
  %s7 = inlined_call_operand.hbm [shape: bf16[128,128], index: 7, kind: input, shape index: {}]
  %s8 = inlined_call_operand.vmem [shape: f32[1,128], index: 8, kind: input, shape index: {}]
  %s9 = inlined_call_operand.hbm [shape: bf16[128,256], index: 9, kind: input, shape index: {}]
  %s10 = inlined_call_operand.vmem [shape: f32[1,256], index: 10, kind: input, shape index: {}]
  %s11 = inlined_call_operand.vmem [shape: f32[1,128], index: 11, kind: input, shape index: {}]
  %s12 = inlined_call_operand.vmem [shape: f32[1,128], index: 12, kind: input, shape index: {}]
  %s13 = inlined_call_operand.hbm [shape: bf16[2,8,128], index: 13, kind: output, shape index: {}]
  %s14 = sld [smem:[#allocation0]]
  $region105: #{tpu_custom_call.1} parent=0
    _
  %s16 = ssub.s32 1, %s14
  %s17 = scalar_select 0, %s16, %s14
  $region1: #{tpu_custom_call.1} parent=0
    #allocation3 [shape = 'u8[4096]{0}', space=vmem, size = 0x1000, scoped, tag = 'input window, operand 0']
    #allocation4 [shape = 's32[2]{0}', space=sflag, size = 0x8, scoped, tag = 'scoped memory for tpu_custom_call.1']
    #allocation5 [shape = 's32[2]{0}', space=sflag, size = 0x8, scoped, tag = 'scoped memory for tpu_custom_call.1']
    #allocation6 [shape = 'u8[65536]{0}', space=vmem, size = 0x10000, scoped, tag = 'input window, operand 1']
    #allocation7 [shape = 's32[2]{0}', space=sflag, size = 0x8, scoped, tag = 'scoped memory for tpu_custom_call.1']
    #allocation8 [shape = 'u8[32768]{0}', space=vmem, size = 0x8000, scoped, tag = 'input window, operand 7, single buffered']
    #allocation9 [shape = 'u8[65536]{0}', space=vmem, size = 0x10000, scoped, tag = 'input window, operand 9, single buffered']
    #allocation10 [shape = 's32[1]{0}', space=sflag, size = 0x4, scoped, tag = 'scoped memory for tpu_custom_call.1']
    #allocation11 [shape = 'u8[4096]{0}', space=vmem, size = 0x1000, scoped, tag = 'output window, operand 0']
    %18 = vsyncpa [#allocation4], 0
    %s19 = scalar_lea.sflag [#allocation4], 1
    %20 = vsyncpa %s19, 0
    %21 = vsyncpa [#allocation7], 0
    %s22 = scalar_lea.sflag [#allocation7], 1
    %23 = vsyncpa %s22, 0
    %24 = vsyncpa [#allocation10], 0
    %25 = vsyncpa [#allocation5], 0
    %s26 = scalar_lea.sflag [#allocation5], 1
    %27 = vsyncpa %s26, 0
    loop: start=0, step=1, limit=4
    $region2: #{tpu_custom_call.1} parent=1 // loop_pre_header
      _
    $region3: #{tpu_custom_call.1} parent=1 // loop_header
      %s29 = sphi 0, %s33
      %p30 = scmp.ge.s32.totalorder %s29, 4
      %s36 = sphi 0, %s48
      %s37 = sphi 0, %s44
      %s38 = sphi 0, %s36
      %s39 = sphi 0, %s37
      %s40 = sphi 0, %s38
      %s41 = sphi 0, %s39
      %s53 = sphi 0, %s55
      %s56 = sphi 0, %s53
      %s57 = sphi 0, %s56
      %s73 = sphi 0, %s57
      %s79 = sphi 0, %s81
      %s82 = sphi 0, %s79
      %s83 = sphi 0, %s82
      %s99 = sphi 0, %s83
      %s105 = sphi 0, %s107
      %s108 = sphi 0, %s105
      %s109 = sphi 0, %s108
      %s125 = sphi 0, %s109
      %s129 = sphi 0, %s129
      %s131 = sphi 0, %s129
      %s132 = sphi 0, %s131
      %s146 = sphi 0, %s132
      %s150 = sphi 0, %s150
      %s152 = sphi 0, %s150
      %s153 = sphi 0, %s152
      %s167 = sphi 0, %s153
      %s171 = sphi 0, %s171
      %s173 = sphi 0, %s171
      %s174 = sphi 0, %s173
      %s188 = sphi 0, %s174
      %s192 = sphi 0, %s192
      %s194 = sphi 0, %s192
      %s195 = sphi 0, %s194
      %s209 = sphi 0, %s195
      %s213 = sphi 0, %s213
      %s215 = sphi 0, %s213
      %s216 = sphi 0, %s215
      %s230 = sphi 0, %s216
      %s234 = sphi 0, %s234
      %s236 = sphi 0, %s234
      %s237 = sphi 0, %s236
      %s251 = sphi 0, %s237
      %s255 = sphi 0, %s255
      %s257 = sphi 0, %s255
      %s258 = sphi 0, %s257
      %s272 = sphi 0, %s258
      %s276 = sphi 0, %s276
      %s278 = sphi 0, %s276
      %s279 = sphi 0, %s278
      %s293 = sphi 0, %s279
      %s297 = sphi 0, %s297
      %s299 = sphi 0, %s297
      %s300 = sphi 0, %s299
      %s314 = sphi 0, %s300
      %s318 = sphi 0, %s318
      %s320 = sphi 0, %s318
      %s321 = sphi 0, %s320
      %s335 = sphi 0, %s321
      %s343 = sphi 0, %s345
      %s346 = sphi 0, %s343
      %s347 = sphi 0, %s346
      %s363 = sphi 0, %s347
    $region4: #{tpu_custom_call.1} parent=1 // loop_header_branch
      %32 = sbr.rel (%p30) target = $region8
    $region5: #{tpu_custom_call.1} parent=1 // loop_body
      %s34 = ssub.s32 %s29, 1
      %s35 = ssub.s32 %s29, 2
      %s42 = sadd.s32 1, %s37
      %p43 = scmp.ge.s32.totalorder %s42, 1
      %s44 = scalar_select %p43, 0, %s42
      %s45 = sadd.s32 1, %s36
      %s46 = scalar_select %p43, %s45, %s36
      %p47 = scmp.ge.s32.totalorder %s46, 2
      %s48 = scalar_select %p47, 0, %s46
      %s49 = ssub.s32 %s36, %s48
      %s50 = ssub.s32 %s37, %s44
      %s51 = sor.u32 %s49, %s50
      %p52 = scmp.eq.s32.totalorder %s51, 0
      %s54 = sadd.s32 %s53, 1
      %s55 = scalar_select %p52, %s53, %s54
      %p58 = pneg %p52
      %p59 = scmp.eq.s32.totalorder %s29, 1
      %p60 = por %p58, %p59
      %p61 = scmp.ne.s32.totalorder %s53, %s56
      %p62 = scmp.eq.s32.totalorder %s29, 0
      %p63 = por %p61, %p62
      %p64 = scmp.ne.s32.totalorder %s53, %s56
      %p65 = scmp.eq.s32.totalorder %s34, 1
      %p66 = por %p64, %p65
      %p67 = scmp.ne.s32.totalorder %s56, %s57
      %p68 = scmp.eq.s32.totalorder %s34, 0
      %p69 = por %p67, %p68
      %p70 = scmp.ne.s32.totalorder %s56, %s57
      %p71 = scmp.eq.s32.totalorder %s35, 1
      %p72 = por %p70, %p71
      %p74 = scmp.ne.s32.totalorder %s57, %s73
      %p75 = scmp.eq.s32.totalorder %s35, 0
      %p76 = por %p74, %p75
      %s77 = ssub.s32 %s36, %s48
      %p78 = scmp.eq.s32.totalorder %s77, 0
      %s80 = sadd.s32 %s79, 1
      %s81 = scalar_select %p78, %s79, %s80
      %p84 = pneg %p78
      %p85 = scmp.eq.s32.totalorder %s29, 1
      %p86 = por %p84, %p85
      %p87 = scmp.ne.s32.totalorder %s79, %s82
      %p88 = scmp.eq.s32.totalorder %s29, 0
      %p89 = por %p87, %p88
      %p90 = scmp.ne.s32.totalorder %s79, %s82
      %p91 = scmp.eq.s32.totalorder %s34, 1
      %p92 = por %p90, %p91
      %p93 = scmp.ne.s32.totalorder %s82, %s83
      %p94 = scmp.eq.s32.totalorder %s34, 0
      %p95 = por %p93, %p94
      %p96 = scmp.ne.s32.totalorder %s82, %s83
      %p97 = scmp.eq.s32.totalorder %s35, 1
      %p98 = por %p96, %p97
      %p100 = scmp.ne.s32.totalorder %s83, %s99
      %p101 = scmp.eq.s32.totalorder %s35, 0
      %p102 = por %p100, %p101
      %s103 = ssub.s32 %s36, %s48
      %p104 = scmp.eq.s32.totalorder %s103, 0
      %s106 = sadd.s32 %s105, 1
      %s107 = scalar_select %p104, %s105, %s106
      %p110 = pneg %p104
      %p111 = scmp.eq.s32.totalorder %s29, 1
      %p112 = por %p110, %p111
      %p113 = scmp.ne.s32.totalorder %s105, %s108
      %p114 = scmp.eq.s32.totalorder %s29, 0
      %p115 = por %p113, %p114
      %p116 = scmp.ne.s32.totalorder %s105, %s108
      %p117 = scmp.eq.s32.totalorder %s34, 1
      %p118 = por %p116, %p117
      %p119 = scmp.ne.s32.totalorder %s108, %s109
      %p120 = scmp.eq.s32.totalorder %s34, 0
      %p121 = por %p119, %p120
      %p122 = scmp.ne.s32.totalorder %s108, %s109
      %p123 = scmp.eq.s32.totalorder %s35, 1
      %p124 = por %p122, %p123
      %p126 = scmp.ne.s32.totalorder %s109, %s125
      %p127 = scmp.eq.s32.totalorder %s35, 0
      %p128 = por %p126, %p127
      %s130 = sadd.s32 %s129, 1
      %p133 = scmp.eq.s32.totalorder %s29, 1
      %p134 = scmp.ne.s32.totalorder %s129, %s131
      %p135 = scmp.eq.s32.totalorder %s29, 0
      %p136 = por %p134, %p135
      %p137 = scmp.ne.s32.totalorder %s129, %s131
      %p138 = scmp.eq.s32.totalorder %s34, 1
      %p139 = por %p137, %p138
      %p140 = scmp.ne.s32.totalorder %s131, %s132
      %p141 = scmp.eq.s32.totalorder %s34, 0
      %p142 = por %p140, %p141
      %p143 = scmp.ne.s32.totalorder %s131, %s132
      %p144 = scmp.eq.s32.totalorder %s35, 1
      %p145 = por %p143, %p144
      %p147 = scmp.ne.s32.totalorder %s132, %s146
      %p148 = scmp.eq.s32.totalorder %s35, 0
      %p149 = por %p147, %p148
      %s151 = sadd.s32 %s150, 1
      %p154 = scmp.eq.s32.totalorder %s29, 1
      %p155 = scmp.ne.s32.totalorder %s150, %s152
      %p156 = scmp.eq.s32.totalorder %s29, 0
      %p157 = por %p155, %p156
      %p158 = scmp.ne.s32.totalorder %s150, %s152
      %p159 = scmp.eq.s32.totalorder %s34, 1
      %p160 = por %p158, %p159
      %p161 = scmp.ne.s32.totalorder %s152, %s153
      %p162 = scmp.eq.s32.totalorder %s34, 0
      %p163 = por %p161, %p162
      %p164 = scmp.ne.s32.totalorder %s152, %s153
      %p165 = scmp.eq.s32.totalorder %s35, 1
      %p166 = por %p164, %p165
      %p168 = scmp.ne.s32.totalorder %s153, %s167
      %p169 = scmp.eq.s32.totalorder %s35, 0
      %p170 = por %p168, %p169
      %s172 = sadd.s32 %s171, 1
      %p175 = scmp.eq.s32.totalorder %s29, 1
      %p176 = scmp.ne.s32.totalorder %s171, %s173
      %p177 = scmp.eq.s32.totalorder %s29, 0
      %p178 = por %p176, %p177
      %p179 = scmp.ne.s32.totalorder %s171, %s173
      %p180 = scmp.eq.s32.totalorder %s34, 1
      %p181 = por %p179, %p180
      %p182 = scmp.ne.s32.totalorder %s173, %s174
      %p183 = scmp.eq.s32.totalorder %s34, 0
      %p184 = por %p182, %p183
      %p185 = scmp.ne.s32.totalorder %s173, %s174
      %p186 = scmp.eq.s32.totalorder %s35, 1
      %p187 = por %p185, %p186
      %p189 = scmp.ne.s32.totalorder %s174, %s188
      %p190 = scmp.eq.s32.totalorder %s35, 0
      %p191 = por %p189, %p190
      %s193 = sadd.s32 %s192, 1
      %p196 = scmp.eq.s32.totalorder %s29, 1
      %p197 = scmp.ne.s32.totalorder %s192, %s194
      %p198 = scmp.eq.s32.totalorder %s29, 0
      %p199 = por %p197, %p198
      %p200 = scmp.ne.s32.totalorder %s192, %s194
      %p201 = scmp.eq.s32.totalorder %s34, 1
      %p202 = por %p200, %p201
      %p203 = scmp.ne.s32.totalorder %s194, %s195
      %p204 = scmp.eq.s32.totalorder %s34, 0
      %p205 = por %p203, %p204
      %p206 = scmp.ne.s32.totalorder %s194, %s195
      %p207 = scmp.eq.s32.totalorder %s35, 1
      %p208 = por %p206, %p207
      %p210 = scmp.ne.s32.totalorder %s195, %s209
      %p211 = scmp.eq.s32.totalorder %s35, 0
      %p212 = por %p210, %p211
      %s214 = sadd.s32 %s213, 1
      %p217 = scmp.eq.s32.totalorder %s29, 1
      %p218 = scmp.ne.s32.totalorder %s213, %s215
      %p219 = scmp.eq.s32.totalorder %s29, 0
      %p220 = por %p218, %p219
      %p221 = scmp.ne.s32.totalorder %s213, %s215
      %p222 = scmp.eq.s32.totalorder %s34, 1
      %p223 = por %p221, %p222
      %p224 = scmp.ne.s32.totalorder %s215, %s216
      %p225 = scmp.eq.s32.totalorder %s34, 0
      %p226 = por %p224, %p225
      %p227 = scmp.ne.s32.totalorder %s215, %s216
      %p228 = scmp.eq.s32.totalorder %s35, 1
      %p229 = por %p227, %p228
      %p231 = scmp.ne.s32.totalorder %s216, %s230
      %p232 = scmp.eq.s32.totalorder %s35, 0
      %p233 = por %p231, %p232
      %s235 = sadd.s32 %s234, 1
      %p238 = scmp.eq.s32.totalorder %s29, 1
      %p239 = scmp.ne.s32.totalorder %s234, %s236
      %p240 = scmp.eq.s32.totalorder %s29, 0
      %p241 = por %p239, %p240
      %p242 = scmp.ne.s32.totalorder %s234, %s236
      %p243 = scmp.eq.s32.totalorder %s34, 1
      %p244 = por %p242, %p243
      %p245 = scmp.ne.s32.totalorder %s236, %s237
      %p246 = scmp.eq.s32.totalorder %s34, 0
      %p247 = por %p245, %p246
      %p248 = scmp.ne.s32.totalorder %s236, %s237
      %p249 = scmp.eq.s32.totalorder %s35, 1
      %p250 = por %p248, %p249
      %p252 = scmp.ne.s32.totalorder %s237, %s251
      %p253 = scmp.eq.s32.totalorder %s35, 0
      %p254 = por %p252, %p253
      %s256 = sadd.s32 %s255, 1
      %p259 = scmp.eq.s32.totalorder %s29, 1
      %p260 = scmp.ne.s32.totalorder %s255, %s257
      %p261 = scmp.eq.s32.totalorder %s29, 0
      %p262 = por %p260, %p261
      %p263 = scmp.ne.s32.totalorder %s255, %s257
      %p264 = scmp.eq.s32.totalorder %s34, 1
      %p265 = por %p263, %p264
      %p266 = scmp.ne.s32.totalorder %s257, %s258
      %p267 = scmp.eq.s32.totalorder %s34, 0
      %p268 = por %p266, %p267
      %p269 = scmp.ne.s32.totalorder %s257, %s258
      %p270 = scmp.eq.s32.totalorder %s35, 1
      %p271 = por %p269, %p270
      %p273 = scmp.ne.s32.totalorder %s258, %s272
      %p274 = scmp.eq.s32.totalorder %s35, 0
      %p275 = por %p273, %p274
      %s277 = sadd.s32 %s276, 1
      %p280 = scmp.eq.s32.totalorder %s29, 1
      %p281 = scmp.ne.s32.totalorder %s276, %s278
      %p282 = scmp.eq.s32.totalorder %s29, 0
      %p283 = por %p281, %p282
      %p284 = scmp.ne.s32.totalorder %s276, %s278
      %p285 = scmp.eq.s32.totalorder %s34, 1
      %p286 = por %p284, %p285
      %p287 = scmp.ne.s32.totalorder %s278, %s279
      %p288 = scmp.eq.s32.totalorder %s34, 0
      %p289 = por %p287, %p288
      %p290 = scmp.ne.s32.totalorder %s278, %s279
      %p291 = scmp.eq.s32.totalorder %s35, 1
      %p292 = por %p290, %p291
      %p294 = scmp.ne.s32.totalorder %s279, %s293
      %p295 = scmp.eq.s32.totalorder %s35, 0
      %p296 = por %p294, %p295
      %s298 = sadd.s32 %s297, 1
      %p301 = scmp.eq.s32.totalorder %s29, 1
      %p302 = scmp.ne.s32.totalorder %s297, %s299
      %p303 = scmp.eq.s32.totalorder %s29, 0
      %p304 = por %p302, %p303
      %p305 = scmp.ne.s32.totalorder %s297, %s299
      %p306 = scmp.eq.s32.totalorder %s34, 1
      %p307 = por %p305, %p306
      %p308 = scmp.ne.s32.totalorder %s299, %s300
      %p309 = scmp.eq.s32.totalorder %s34, 0
      %p310 = por %p308, %p309
      %p311 = scmp.ne.s32.totalorder %s299, %s300
      %p312 = scmp.eq.s32.totalorder %s35, 1
      %p313 = por %p311, %p312
      %p315 = scmp.ne.s32.totalorder %s300, %s314
      %p316 = scmp.eq.s32.totalorder %s35, 0
      %p317 = por %p315, %p316
      %s319 = sadd.s32 %s318, 1
      %p322 = scmp.eq.s32.totalorder %s29, 1
      %p323 = scmp.ne.s32.totalorder %s318, %s320
      %p324 = scmp.eq.s32.totalorder %s29, 0
      %p325 = por %p323, %p324
      %p326 = scmp.ne.s32.totalorder %s318, %s320
      %p327 = scmp.eq.s32.totalorder %s34, 1
      %p328 = por %p326, %p327
      %p329 = scmp.ne.s32.totalorder %s320, %s321
      %p330 = scmp.eq.s32.totalorder %s34, 0
      %p331 = por %p329, %p330
      %p332 = scmp.ne.s32.totalorder %s320, %s321
      %p333 = scmp.eq.s32.totalorder %s35, 1
      %p334 = por %p332, %p333
      %p336 = scmp.ne.s32.totalorder %s321, %s335
      %p337 = scmp.eq.s32.totalorder %s35, 0
      %p338 = por %p336, %p337
      %s339 = ssub.s32 %s36, %s48
      %s340 = ssub.s32 %s37, %s44
      %s341 = sor.u32 %s339, %s340
      %p342 = scmp.eq.s32.totalorder %s341, 0
      %s344 = sadd.s32 %s343, 1
      %s345 = scalar_select %p342, %s343, %s344
      %p348 = pneg %p342
      %p349 = scmp.eq.s32.totalorder %s29, 1
      %p350 = por %p348, %p349
      %p351 = scmp.ne.s32.totalorder %s343, %s346
      %p352 = scmp.eq.s32.totalorder %s29, 0
      %p353 = por %p351, %p352
      %p354 = scmp.ne.s32.totalorder %s343, %s346
      %p355 = scmp.eq.s32.totalorder %s34, 1
      %p356 = por %p354, %p355
      %p357 = scmp.ne.s32.totalorder %s346, %s347
      %p358 = scmp.eq.s32.totalorder %s34, 0
      %p359 = por %p357, %p358
      %p360 = scmp.ne.s32.totalorder %s346, %s347
      %p361 = scmp.eq.s32.totalorder %s35, 1
      %p362 = por %p360, %p361
      %p364 = scmp.ne.s32.totalorder %s347, %s363
      %p365 = scmp.eq.s32.totalorder %s35, 0
      %p366 = por %p364, %p365
      %p367 = scmp.le.s32.totalorder 1, %s29
      %p368 = scmp.lt.s32.totalorder %s29, 3
      %p369 = pnand %p367, %p368
      %p370 = pneg %p369
      // Predicated region
      $region9: #{tpu_custom_call.1} parent=5 // pred_check
        _
      $region10: #{tpu_custom_call.1} parent=5 // pred_check_branch
        %372 = sbr.rel (%p369) target = $region12
      $region11: #{tpu_custom_call.1} parent=5 // pred_region
        %s373 = ssub.s32 %s29, 1
        // Predicated region
        $region13: #{tpu_custom_call.1} parent=11 // pred_check
          %p374 = pneg %p142
        $region14: #{tpu_custom_call.1} parent=11 // pred_check_branch
          %376 = sbr.rel (%p374) target = $region16
        $region15: #{tpu_custom_call.1} parent=11 // pred_region
          _
        $region16: #{tpu_custom_call.1} parent=11 // pred_fallthru
          _
        // Predicated region
        $region17: #{tpu_custom_call.1} parent=11 // pred_check
          %p377 = pneg %p163
        $region18: #{tpu_custom_call.1} parent=11 // pred_check_branch
          %379 = sbr.rel (%p377) target = $region20
        $region19: #{tpu_custom_call.1} parent=11 // pred_region
          _
        $region20: #{tpu_custom_call.1} parent=11 // pred_fallthru
          _
        // Predicated region
        $region21: #{tpu_custom_call.1} parent=11 // pred_check
          %p380 = pneg %p184
        $region22: #{tpu_custom_call.1} parent=11 // pred_check_branch
          %382 = sbr.rel (%p380) target = $region24
        $region23: #{tpu_custom_call.1} parent=11 // pred_region
          _
        $region24: #{tpu_custom_call.1} parent=11 // pred_fallthru
          _
        // Predicated region
        $region25: #{tpu_custom_call.1} parent=11 // pred_check
          %p383 = pneg %p205
        $region26: #{tpu_custom_call.1} parent=11 // pred_check_branch
          %385 = sbr.rel (%p383) target = $region28
        $region27: #{tpu_custom_call.1} parent=11 // pred_region
          _
        $region28: #{tpu_custom_call.1} parent=11 // pred_fallthru
          _
        // Predicated region
        $region29: #{tpu_custom_call.1} parent=11 // pred_check
          %p386 = pneg %p226
        $region30: #{tpu_custom_call.1} parent=11 // pred_check_branch
          %388 = sbr.rel (%p386) target = $region32
        $region31: #{tpu_custom_call.1} parent=11 // pred_region
          %s390 = ssub.s32 1024, 1024
          %391 = vsyncadd [#allocation7], %s390
          %s392 = sshll.u32 [#allocation8], 4
          %s393 = int_to_ptr.vmem [resolvable:$true] %s392
          %398 = dma.hbm_to_vmem [thread:$0]  %s7, 1024, %s393, [#allocation7], 64, 64, 4
        $region32: #{tpu_custom_call.1} parent=11 // pred_fallthru
          _
        // Predicated region
        $region33: #{tpu_custom_call.1} parent=11 // pred_check
          %p399 = pneg %p247
        $region34: #{tpu_custom_call.1} parent=11 // pred_check_branch
          %401 = sbr.rel (%p399) target = $region36
        $region35: #{tpu_custom_call.1} parent=11 // pred_region
          _
        $region36: #{tpu_custom_call.1} parent=11 // pred_fallthru
          _
        // Predicated region
        $region37: #{tpu_custom_call.1} parent=11 // pred_check
          %p402 = pneg %p268
        $region38: #{tpu_custom_call.1} parent=11 // pred_check_branch
          %404 = sbr.rel (%p402) target = $region40
        $region39: #{tpu_custom_call.1} parent=11 // pred_region
          %s406 = ssub.s32 2048, 2048
          %407 = vsyncadd [#allocation10], %s406
          %s408 = sshll.u32 [#allocation9], 4
          %s409 = int_to_ptr.vmem [resolvable:$true] %s408
          %414 = dma.hbm_to_vmem [thread:$0]  %s9, 2048, %s409, [#allocation10], 128, 128, 8
        $region40: #{tpu_custom_call.1} parent=11 // pred_fallthru
          _
        // Predicated region
        $region41: #{tpu_custom_call.1} parent=11 // pred_check
          %p415 = pneg %p289
        $region42: #{tpu_custom_call.1} parent=11 // pred_check_branch
          %417 = sbr.rel (%p415) target = $region44
        $region43: #{tpu_custom_call.1} parent=11 // pred_region
          _
        $region44: #{tpu_custom_call.1} parent=11 // pred_fallthru
          _
        // Predicated region
        $region45: #{tpu_custom_call.1} parent=11 // pred_check
          %p418 = pneg %p310
        $region46: #{tpu_custom_call.1} parent=11 // pred_check_branch
          %420 = sbr.rel (%p418) target = $region48
        $region47: #{tpu_custom_call.1} parent=11 // pred_region
          _
        $region48: #{tpu_custom_call.1} parent=11 // pred_fallthru
          _
        // Predicated region
        $region49: #{tpu_custom_call.1} parent=11 // pred_check
          %p421 = pneg %p331
        $region50: #{tpu_custom_call.1} parent=11 // pred_check_branch
          %423 = sbr.rel (%p421) target = $region52
        $region51: #{tpu_custom_call.1} parent=11 // pred_region
          _
        $region52: #{tpu_custom_call.1} parent=11 // pred_fallthru
          _
      $region12: #{tpu_custom_call.1} parent=5 // pred_fallthru
        _
      %p424 = scmp.lt.s32.totalorder %s29, 2
      // Predicated region
      $region53: #{tpu_custom_call.1} parent=5 // pred_check
        %p425 = pneg %p424
      $region54: #{tpu_custom_call.1} parent=5 // pred_check_branch
        %427 = sbr.rel (%p425) target = $region56
      $region55: #{tpu_custom_call.1} parent=5 // pred_region
        // Predicated region
        $region57: #{tpu_custom_call.1} parent=55 // pred_check
          %p428 = pneg %p63
        $region58: #{tpu_custom_call.1} parent=55 // pred_check_branch
          %430 = sbr.rel (%p428) target = $region60
        $region59: #{tpu_custom_call.1} parent=55 // pred_region
          %s431 = sand.u32 %s53, 1
          %s432 = scalar_lea.sflag [#allocation4], %s431
          %s433 = sand.u32 %s53, 1
          %s434 = smul.addr %s433, 4
          %s435 = scalar_lea.vmem [#allocation3], %s434
          %s437 = ssub.s32 64, 64
          %438 = vsyncadd %s432, %s437
          %s439 = sadd.s32 %s37, %s36
          %s440 = smul.addr %s439, 64
          %s441 = scalar_lea.hbm %s0, %s440
          %s443 = sshll.u32 %s435, 4
          %s444 = int_to_ptr.vmem [resolvable:$true] %s443
          %446 = dma.hbm_to_vmem [thread:$0]  %s441, 64, %s444, %s432
        $region60: #{tpu_custom_call.1} parent=55 // pred_fallthru
          _
        // Predicated region
        $region61: #{tpu_custom_call.1} parent=55 // pred_check
          %p447 = pneg %p89
        $region62: #{tpu_custom_call.1} parent=55 // pred_check_branch
          %449 = sbr.rel (%p447) target = $region64
        $region63: #{tpu_custom_call.1} parent=55 // pred_region
          %s450 = sand.u32 %s29, 1
          %s451 = scalar_lea.sflag [#allocation7], %s450
          %s452 = sand.u32 %s79, 1
          %s453 = smul.addr %s452, 64
          %s454 = scalar_lea.vmem [#allocation6], %s453
          %s456 = ssub.s32 1024, 1024
          %457 = vsyncadd %s451, %s456
          %s458 = smul.addr %s36, 16
          %s459 = smul.addr %s458, 64
          %s460 = scalar_lea.hbm %s1, %s459
          %s461 = sshll.u32 %s454, 4
          %s462 = int_to_ptr.vmem [resolvable:$true] %s461
          %467 = dma.hbm_to_vmem [thread:$0]  %s460, 1024, %s462, %s451, 64, 64, 4
        $region64: #{tpu_custom_call.1} parent=55 // pred_fallthru
          _
        // Predicated region
        $region65: #{tpu_custom_call.1} parent=55 // pred_check
          %p468 = pneg %p115
        $region66: #{tpu_custom_call.1} parent=55 // pred_check_branch
          %470 = sbr.rel (%p468) target = $region68
        $region67: #{tpu_custom_call.1} parent=55 // pred_region
          %p471 = scmp.lt.s32.totalorder %s36, 1
          %s472 = scalar_select %p471, %s36, 1
          %s473 = scalar_lea.vmem %s2, %s472
        $region68: #{tpu_custom_call.1} parent=55 // pred_fallthru
          _
      $region56: #{tpu_custom_call.1} parent=5 // pred_fallthru
        _
      %p474 = scmp.le.s32.totalorder 1, %s29
      %p475 = scmp.lt.s32.totalorder %s29, 3
      %p476 = pnand %p474, %p475
      %p477 = pneg %p476
      // Predicated region
      $region69: #{tpu_custom_call.1} parent=5 // pred_check
        _
      $region70: #{tpu_custom_call.1} parent=5 // pred_check_branch
        %479 = sbr.rel (%p476) target = $region72
      $region71: #{tpu_custom_call.1} parent=5 // pred_region
        %s480 = ssub.s32 %s29, 1
        %s481 = sand.u32 %s56, 1
        %s482 = scalar_lea.sflag [#allocation4], %s481
        %s483 = sand.u32 %s56, 1
        %s484 = smul.addr %s483, 4
        %s485 = scalar_lea.vmem [#allocation3], %s484
        // Predicated region
        $region73: #{tpu_custom_call.1} parent=71 // pred_check
          %p486 = pneg %p69
        $region74: #{tpu_custom_call.1} parent=71 // pred_check_branch
          %488 = sbr.rel (%p486) target = $region76
        $region75: #{tpu_custom_call.1} parent=71 // pred_region
          %489 = dma.done %s482, 64
        $region76: #{tpu_custom_call.1} parent=71 // pred_fallthru
          _
        %s490 = sand.u32 %s34, 1
        %s491 = scalar_lea.sflag [#allocation7], %s490
        %s492 = sand.u32 %s82, 1
        %s493 = smul.addr %s492, 64
        %s494 = scalar_lea.vmem [#allocation6], %s493
        // Predicated region
        $region77: #{tpu_custom_call.1} parent=71 // pred_check
          %p495 = pneg %p95
        $region78: #{tpu_custom_call.1} parent=71 // pred_check_branch
          %497 = sbr.rel (%p495) target = $region80
        $region79: #{tpu_custom_call.1} parent=71 // pred_region
          %498 = dma.done %s491, 1024
        $region80: #{tpu_custom_call.1} parent=71 // pred_fallthru
          _
        // Predicated region
        $region81: #{tpu_custom_call.1} parent=71 // pred_check
          %p499 = pneg %p226
        $region82: #{tpu_custom_call.1} parent=71 // pred_check_branch
          %501 = sbr.rel (%p499) target = $region84
        $region83: #{tpu_custom_call.1} parent=71 // pred_region
          %502 = dma.done [#allocation7], 1024
        $region84: #{tpu_custom_call.1} parent=71 // pred_fallthru
          _
        // Predicated region
        $region85: #{tpu_custom_call.1} parent=71 // pred_check
          %p503 = pneg %p268
        $region86: #{tpu_custom_call.1} parent=71 // pred_check_branch
          %505 = sbr.rel (%p503) target = $region88
        $region87: #{tpu_custom_call.1} parent=71 // pred_region
          %506 = dma.done [#allocation10], 2048
        $region88: #{tpu_custom_call.1} parent=71 // pred_fallthru
          _
        %s507 = sand.u32 %s56, 1
        %s508 = scalar_lea.sflag [#allocation4], %s507
        %s509 = sand.u32 %s56, 1
        %s510 = smul.addr %s509, 4
        %s511 = scalar_lea.vmem [#allocation3], %s510
        %p512 = pneg %p69
        %p513 = pneg %p66
        %s514 = sand.u32 %s34, 1
        %s515 = scalar_lea.sflag [#allocation7], %s514
        %s516 = sand.u32 %s82, 1
        %s517 = smul.addr %s516, 64
        %s518 = scalar_lea.vmem [#allocation6], %s517
        %p519 = pneg %p95
        %p520 = pneg %p92
        %p521 = scmp.lt.s32.totalorder %s38, 1
        %s522 = scalar_select %p521, %s38, 1
        %s523 = scalar_lea.vmem %s2, %s522
        %p524 = pneg %p121
        %p525 = pneg %p118
        %p526 = pneg %p142
        %p527 = pneg %p139
        %p528 = pneg %p163
        %p529 = pneg %p160
        %p530 = pneg %p184
        %p531 = pneg %p181
        %p532 = pneg %p205
        %p533 = pneg %p202
        %p534 = pneg %p226
        %p535 = pneg %p223
        %p536 = pneg %p247
        %p537 = pneg %p244
        %p538 = pneg %p268
        %p539 = pneg %p265
        %p540 = pneg %p289
        %p541 = pneg %p286
        %p542 = pneg %p310
        %p543 = pneg %p307
        %p544 = pneg %p331
        %p545 = pneg %p328
        %p546 = pneg %p359
        %p547 = pneg %p356
        %s548 = sand.u32 %s346, 1
        %s549 = scalar_lea.sflag [#allocation5], %s548
        %s550 = sand.u32 %s346, 1
        %s551 = smul.addr %s550, 4
        %s552 = scalar_lea.vmem [#allocation11], %s551
        %p553 = scmp.lt.s32.totalorder %s38, 1
        %s554 = scalar_select %p553, %s38, 1
        %s555 = scalar_lea.vmem %s2, %s554
        %p557 = scmp.eq.s32.totalorder %s39, 0
        // Predicated region
        $region89: #{tpu_custom_call.1} parent=71 // pred_check
          %p558 = pneg %p557
        $region90: #{tpu_custom_call.1} parent=71 // pred_check_branch
          %560 = sbr.rel (%p558) target = $region92
        $region91: #{tpu_custom_call.1} parent=71 // pred_region
          %v561 = vld [vmem:[%s494] sm:$0xf]
          %v562 = vld [vmem:[%s494 + $0x4] sm:$0xf]
          %v563 = vld [vmem:[%s494 + $0x8] sm:$0xf]
          %v564 = vld [vmem:[%s494 + $0xc] sm:$0xf]
          %v565 = vld [vmem:[%s494 + $0x10] sm:$0xf]
          %v566 = vld [vmem:[%s494 + $0x14] sm:$0xf]
          %v567 = vld [vmem:[%s494 + $0x18] sm:$0xf]
          %v568 = vld [vmem:[%s494 + $0x1c] sm:$0xf]
          %v569 = vld [vmem:[%s494 + $0x20] sm:$0xf]
          %v570 = vld [vmem:[%s494 + $0x24] sm:$0xf]
          %v571 = vld [vmem:[%s494 + $0x28] sm:$0xf]
          %v572 = vld [vmem:[%s494 + $0x2c] sm:$0xf]
          %v573 = vld [vmem:[%s494 + $0x30] sm:$0xf]
          %v574 = vld [vmem:[%s494 + $0x34] sm:$0xf]
          %v575 = vld [vmem:[%s494 + $0x38] sm:$0xf]
          %v576 = vld [vmem:[%s494 + $0x3c] sm:$0xf]
          %v577 = vunpack.c.l.bf16 %v561
          %v578 = vunpack.c.l.bf16 %v562
          %v579 = vunpack.c.l.bf16 %v563
          %v580 = vunpack.c.l.bf16 %v564
          %v581 = vunpack.c.l.bf16 %v565
          %v582 = vunpack.c.l.bf16 %v566
          %v583 = vunpack.c.l.bf16 %v567
          %v584 = vunpack.c.l.bf16 %v568
          %v585 = vunpack.c.l.bf16 %v569
          %v586 = vunpack.c.l.bf16 %v570
          %v587 = vunpack.c.l.bf16 %v571
          %v588 = vunpack.c.l.bf16 %v572
          %v589 = vunpack.c.l.bf16 %v573
          %v590 = vunpack.c.l.bf16 %v574
          %v591 = vunpack.c.l.bf16 %v575
          %v592 = vunpack.c.l.bf16 %v576
          %v593 = vld [vmem:[%s5] sm:$0x1]
          %v594 = vld [vmem:[%s6] sm:$0x1]
          %595 = vadd.xlane.f32.xlu0 %v577
          %v596 = vpop.xlane.xlu0 %595
          %597 = vadd.xlane.f32.xlu0 %v578
          %v598 = vpop.xlane.xlu0 %597
          %599 = vadd.xlane.f32.xlu0 %v579
          %v600 = vpop.xlane.xlu0 %599
          %601 = vadd.xlane.f32.xlu0 %v580
          %v602 = vpop.xlane.xlu0 %601
          %603 = vadd.xlane.f32.xlu0 %v581
          %v604 = vpop.xlane.xlu0 %603
          %605 = vadd.xlane.f32.xlu0 %v582
          %v606 = vpop.xlane.xlu0 %605
          %607 = vadd.xlane.f32.xlu0 %v583
          %v608 = vpop.xlane.xlu0 %607
          %609 = vadd.xlane.f32.xlu0 %v584
          %v610 = vpop.xlane.xlu0 %609
          %611 = vadd.xlane.f32.xlu0 %v585
          %v612 = vpop.xlane.xlu0 %611
          %613 = vadd.xlane.f32.xlu0 %v586
          %v614 = vpop.xlane.xlu0 %613
          %615 = vadd.xlane.f32.xlu0 %v587
          %v616 = vpop.xlane.xlu0 %615
          %617 = vadd.xlane.f32.xlu0 %v588
          %v618 = vpop.xlane.xlu0 %617
          %619 = vadd.xlane.f32.xlu0 %v589
          %v620 = vpop.xlane.xlu0 %619
          %621 = vadd.xlane.f32.xlu0 %v590
          %v622 = vpop.xlane.xlu0 %621
          %623 = vadd.xlane.f32.xlu0 %v591
          %v624 = vpop.xlane.xlu0 %623
          %625 = vadd.xlane.f32.xlu0 %v592
          %v626 = vpop.xlane.xlu0 %625
          %v627 = vmul.f32 %v596, 0.03125
          %v628 = vmul.f32 %v598, 0.03125
          %v629 = vmul.f32 %v600, 0.03125
          %v630 = vmul.f32 %v602, 0.03125
          %v631 = vmul.f32 %v604, 0.03125
          %v632 = vmul.f32 %v606, 0.03125
          %v633 = vmul.f32 %v608, 0.03125
          %v634 = vmul.f32 %v610, 0.03125
          %v635 = vmul.f32 %v612, 0.03125
          %v636 = vmul.f32 %v614, 0.03125
          %v637 = vmul.f32 %v616, 0.03125
          %v638 = vmul.f32 %v618, 0.03125
          %v639 = vmul.f32 %v620, 0.03125
          %v640 = vmul.f32 %v622, 0.03125
          %v641 = vmul.f32 %v624, 0.03125
          %v642 = vmul.f32 %v626, 0.03125
          %v643 = vsub.f32 %v577, %v627
          %v644 = vsub.f32 %v578, %v628
          %v645 = vsub.f32 %v579, %v629
          %v646 = vsub.f32 %v580, %v630
          %v647 = vsub.f32 %v581, %v631
          %v648 = vsub.f32 %v582, %v632
          %v649 = vsub.f32 %v583, %v633
          %v650 = vsub.f32 %v584, %v634
          %v651 = vsub.f32 %v585, %v635
          %v652 = vsub.f32 %v586, %v636
          %v653 = vsub.f32 %v587, %v637
          %v654 = vsub.f32 %v588, %v638
          %v655 = vsub.f32 %v589, %v639
          %v656 = vsub.f32 %v590, %v640
          %v657 = vsub.f32 %v591, %v641
          %v658 = vsub.f32 %v592, %v642
          %v659 = vmul.f32 %v643, %v643
          %v660 = vmul.f32 %v644, %v644
          %v661 = vmul.f32 %v645, %v645
          %v662 = vmul.f32 %v646, %v646
          %v663 = vmul.f32 %v647, %v647
          %v664 = vmul.f32 %v648, %v648
          %v665 = vmul.f32 %v649, %v649
          %v666 = vmul.f32 %v650, %v650
          %v667 = vmul.f32 %v651, %v651
          %v668 = vmul.f32 %v652, %v652
          %v669 = vmul.f32 %v653, %v653
          %v670 = vmul.f32 %v654, %v654
          %v671 = vmul.f32 %v655, %v655
          %v672 = vmul.f32 %v656, %v656
          %v673 = vmul.f32 %v657, %v657
          %v674 = vmul.f32 %v658, %v658
          %675 = vadd.xlane.f32.xlu0 %v659
          %v676 = vpop.xlane.xlu0 %675
          %677 = vadd.xlane.f32.xlu0 %v660
          %v678 = vpop.xlane.xlu0 %677
          %679 = vadd.xlane.f32.xlu0 %v661
          %v680 = vpop.xlane.xlu0 %679
          %681 = vadd.xlane.f32.xlu0 %v662
          %v682 = vpop.xlane.xlu0 %681
          %683 = vadd.xlane.f32.xlu0 %v663
          %v684 = vpop.xlane.xlu0 %683
          %685 = vadd.xlane.f32.xlu0 %v664
          %v686 = vpop.xlane.xlu0 %685
          %687 = vadd.xlane.f32.xlu0 %v665
          %v688 = vpop.xlane.xlu0 %687
          %689 = vadd.xlane.f32.xlu0 %v666
          %v690 = vpop.xlane.xlu0 %689
          %691 = vadd.xlane.f32.xlu0 %v667
          %v692 = vpop.xlane.xlu0 %691
          %693 = vadd.xlane.f32.xlu0 %v668
          %v694 = vpop.xlane.xlu0 %693
          %695 = vadd.xlane.f32.xlu0 %v669
          %v696 = vpop.xlane.xlu0 %695
          %697 = vadd.xlane.f32.xlu0 %v670
          %v698 = vpop.xlane.xlu0 %697
          %699 = vadd.xlane.f32.xlu0 %v671
          %v700 = vpop.xlane.xlu0 %699
          %701 = vadd.xlane.f32.xlu0 %v672
          %v702 = vpop.xlane.xlu0 %701
          %703 = vadd.xlane.f32.xlu0 %v673
          %v704 = vpop.xlane.xlu0 %703
          %705 = vadd.xlane.f32.xlu0 %v674
          %v706 = vpop.xlane.xlu0 %705
          %v707 = vmul.f32 %v627, 96.0
          %v708 = vmul.f32 %v628, 96.0
          %v709 = vmul.f32 %v629, 96.0
          %v710 = vmul.f32 %v630, 96.0
          %v711 = vmul.f32 %v631, 96.0
          %v712 = vmul.f32 %v632, 96.0
          %v713 = vmul.f32 %v633, 96.0
          %v714 = vmul.f32 %v634, 96.0
          %v715 = vmul.f32 %v635, 96.0
          %v716 = vmul.f32 %v636, 96.0
          %v717 = vmul.f32 %v637, 96.0
          %v718 = vmul.f32 %v638, 96.0
          %v719 = vmul.f32 %v639, 96.0
          %v720 = vmul.f32 %v640, 96.0
          %v721 = vmul.f32 %v641, 96.0
          %v722 = vmul.f32 %v642, 96.0
          %v723 = vmul.f32 %v707, %v627
          %v724 = vmul.f32 %v708, %v628
          %v725 = vmul.f32 %v709, %v629
          %v726 = vmul.f32 %v710, %v630
          %v727 = vmul.f32 %v711, %v631
          %v728 = vmul.f32 %v712, %v632
          %v729 = vmul.f32 %v713, %v633
          %v730 = vmul.f32 %v714, %v634
          %v731 = vmul.f32 %v715, %v635
          %v732 = vmul.f32 %v716, %v636
          %v733 = vmul.f32 %v717, %v637
          %v734 = vmul.f32 %v718, %v638
          %v735 = vmul.f32 %v719, %v639
          %v736 = vmul.f32 %v720, %v640
          %v737 = vmul.f32 %v721, %v641
          %v738 = vmul.f32 %v722, %v642
          %v739 = vsub.f32 %v676, %v723
          %v740 = vsub.f32 %v678, %v724
          %v741 = vsub.f32 %v680, %v725
          %v742 = vsub.f32 %v682, %v726
          %v743 = vsub.f32 %v684, %v727
          %v744 = vsub.f32 %v686, %v728
          %v745 = vsub.f32 %v688, %v729
          %v746 = vsub.f32 %v690, %v730
          %v747 = vsub.f32 %v692, %v731
          %v748 = vsub.f32 %v694, %v732
          %v749 = vsub.f32 %v696, %v733
          %v750 = vsub.f32 %v698, %v734
          %v751 = vsub.f32 %v700, %v735
          %v752 = vsub.f32 %v702, %v736
          %v753 = vsub.f32 %v704, %v737
          %v754 = vsub.f32 %v706, %v738
          %v755 = vmul.f32 %v739, 0.03125
          %v756 = vmul.f32 %v740, 0.03125
          %v757 = vmul.f32 %v741, 0.03125
          %v758 = vmul.f32 %v742, 0.03125
          %v759 = vmul.f32 %v743, 0.03125
          %v760 = vmul.f32 %v744, 0.03125
          %v761 = vmul.f32 %v745, 0.03125
          %v762 = vmul.f32 %v746, 0.03125
          %v763 = vmul.f32 %v747, 0.03125
          %v764 = vmul.f32 %v748, 0.03125
          %v765 = vmul.f32 %v749, 0.03125
          %v766 = vmul.f32 %v750, 0.03125
          %v767 = vmul.f32 %v751, 0.03125
          %v768 = vmul.f32 %v752, 0.03125
          %v769 = vmul.f32 %v753, 0.03125
          %v770 = vmul.f32 %v754, 0.03125
          %v771 = vmax.f32 %v755, 0.0
          %v772 = vmax.f32 %v756, 0.0
          %v773 = vmax.f32 %v757, 0.0
          %v774 = vmax.f32 %v758, 0.0
          %v775 = vmax.f32 %v759, 0.0
          %v776 = vmax.f32 %v760, 0.0
          %v777 = vmax.f32 %v761, 0.0
          %v778 = vmax.f32 %v762, 0.0
          %v779 = vmax.f32 %v763, 0.0
          %v780 = vmax.f32 %v764, 0.0
          %v781 = vmax.f32 %v765, 0.0
          %v782 = vmax.f32 %v766, 0.0
          %v783 = vmax.f32 %v767, 0.0
          %v784 = vmax.f32 %v768, 0.0
          %v785 = vmax.f32 %v769, 0.0
          %v786 = vmax.f32 %v770, 0.0
          %v787 = vadd.f32 %v771, 1e-05
          %v788 = vadd.f32 %v772, 1e-05
          %v789 = vadd.f32 %v773, 1e-05
          %v790 = vadd.f32 %v774, 1e-05
          %v791 = vadd.f32 %v775, 1e-05
          %v792 = vadd.f32 %v776, 1e-05
          %v793 = vadd.f32 %v777, 1e-05
          %v794 = vadd.f32 %v778, 1e-05
          %v795 = vadd.f32 %v779, 1e-05
          %v796 = vadd.f32 %v780, 1e-05
          %v797 = vadd.f32 %v781, 1e-05
          %v798 = vadd.f32 %v782, 1e-05
          %v799 = vadd.f32 %v783, 1e-05
          %v800 = vadd.f32 %v784, 1e-05
          %v801 = vadd.f32 %v785, 1e-05
          %v802 = vadd.f32 %v786, 1e-05
          %v803 = vrsqrt.pop %v787
          %v804 = vrsqrt.pop %v788
          %v805 = vrsqrt.pop %v789
          %v806 = vrsqrt.pop %v790
          %v807 = vrsqrt.pop %v791
          %v808 = vrsqrt.pop %v792
          %v809 = vrsqrt.pop %v793
          %v810 = vrsqrt.pop %v794
          %v811 = vrsqrt.pop %v795
          %v812 = vrsqrt.pop %v796
          %v813 = vrsqrt.pop %v797
          %v814 = vrsqrt.pop %v798
          %v815 = vrsqrt.pop %v799
          %v816 = vrsqrt.pop %v800
          %v817 = vrsqrt.pop %v801
          %v818 = vrsqrt.pop %v802
          %v819 = vmul.f32 %v643, %v803
          %v820 = vmul.f32 %v644, %v804
          %v821 = vmul.f32 %v645, %v805
          %v822 = vmul.f32 %v646, %v806
          %v823 = vmul.f32 %v647, %v807
          %v824 = vmul.f32 %v648, %v808
          %v825 = vmul.f32 %v649, %v809
          %v826 = vmul.f32 %v650, %v810
          %v827 = vmul.f32 %v651, %v811
          %v828 = vmul.f32 %v652, %v812
          %v829 = vmul.f32 %v653, %v813
          %v830 = vmul.f32 %v654, %v814
          %v831 = vmul.f32 %v655, %v815
          %v832 = vmul.f32 %v656, %v816
          %v833 = vmul.f32 %v657, %v817
          %v834 = vmul.f32 %v658, %v818
          %v836 = vlaneseq
          %v837 = vshrl.u32 %v836, 7
          %v838 = vsub.s32 0, %v837
          %v839 = vrot.slane %v593, %v838
          %v841 = vmul.f32 %v819, %v839
          %v842 = vmul.f32 %v820, %v839
          %v843 = vmul.f32 %v821, %v839
          %v844 = vmul.f32 %v822, %v839
          %v845 = vmul.f32 %v823, %v839
          %v846 = vmul.f32 %v824, %v839
          %v847 = vmul.f32 %v825, %v839
          %v848 = vmul.f32 %v826, %v839
          %v849 = vmul.f32 %v827, %v839
          %v850 = vmul.f32 %v828, %v839
          %v851 = vmul.f32 %v829, %v839
          %v852 = vmul.f32 %v830, %v839
          %v853 = vmul.f32 %v831, %v839
          %v854 = vmul.f32 %v832, %v839
          %v855 = vmul.f32 %v833, %v839
          %v856 = vmul.f32 %v834, %v839
          %v858 = vlaneseq
          %v859 = vshrl.u32 %v858, 7
          %v860 = vsub.s32 0, %v859
          %v861 = vrot.slane %v594, %v860
          %v863 = vadd.f32 %v841, %v861
          %v864 = vadd.f32 %v842, %v861
          %v865 = vadd.f32 %v843, %v861
          %v866 = vadd.f32 %v844, %v861
          %v867 = vadd.f32 %v845, %v861
          %v868 = vadd.f32 %v846, %v861
          %v869 = vadd.f32 %v847, %v861
          %v870 = vadd.f32 %v848, %v861
          %v871 = vadd.f32 %v849, %v861
          %v872 = vadd.f32 %v850, %v861
          %v873 = vadd.f32 %v851, %v861
          %v874 = vadd.f32 %v852, %v861
          %v875 = vadd.f32 %v853, %v861
          %v876 = vadd.f32 %v854, %v861
          %v877 = vadd.f32 %v855, %v861
          %v878 = vadd.f32 %v856, %v861
          %v879 = vpack.c.bf16 %v864, %v863
          %v880 = vpack.c.bf16 %v866, %v865
          %v881 = vpack.c.bf16 %v868, %v867
          %v882 = vpack.c.bf16 %v870, %v869
          %v883 = vpack.c.bf16 %v872, %v871
          %v884 = vpack.c.bf16 %v874, %v873
          %v885 = vpack.c.bf16 %v876, %v875
          %v886 = vpack.c.bf16 %v878, %v877
          %v887 = vld [vmem:[#allocation9] sm:$0xff]
          %v888 = vld [vmem:[#allocation9 + $0x8] sm:$0xff]
          %v889 = vld [vmem:[#allocation9 + $0x10] sm:$0xff]
          %v890 = vld [vmem:[#allocation9 + $0x18] sm:$0xff]
          %v891 = vld [vmem:[#allocation9 + $0x20] sm:$0xff]
          %v892 = vld [vmem:[#allocation9 + $0x28] sm:$0xff]
          %v893 = vld [vmem:[#allocation9 + $0x30] sm:$0xff]
          %v894 = vld [vmem:[#allocation9 + $0x38] sm:$0xff]
          %v895 = vld [vmem:[#allocation9 + $0x40] sm:$0xff]
          %v896 = vld [vmem:[#allocation9 + $0x48] sm:$0xff]
          %v897 = vld [vmem:[#allocation9 + $0x50] sm:$0xff]
          %v898 = vld [vmem:[#allocation9 + $0x58] sm:$0xff]
          %v899 = vld [vmem:[#allocation9 + $0x60] sm:$0xff]
          %v900 = vld [vmem:[#allocation9 + $0x68] sm:$0xff]
          %v901 = vld [vmem:[#allocation9 + $0x70] sm:$0xff]
          %v902 = vld [vmem:[#allocation9 + $0x78] sm:$0xff]
          %v903 = vld [vmem:[%s10] sm:$0x3]
          %v905 = vlaneseq
          %v906 = vshrl.u32 %v905, 7
          %v907 = vsub.s32 0, %v906
          %v908 = vrot.slane %v903, %v907
          %v909 = vlaneseq
          %v910 = vshrl.u32 %v909, 7
          %v911 = vsub.s32 1, %v910
          %v912 = vrot.slane %v903, %v911
          %v931 = vunpack.c.l.b16 %v887
          %v932 = vunpack.c.h.b16 %v887
          %v933 = vunpack.c.l.b16 %v888
          %v934 = vunpack.c.h.b16 %v888
          %v935 = vunpack.c.l.b16 %v889
          %v936 = vunpack.c.h.b16 %v889
          %v937 = vunpack.c.l.b16 %v890
          %v938 = vunpack.c.h.b16 %v890
          %v939 = vunpack.c.l.b16 %v891
          %v940 = vunpack.c.h.b16 %v891
          %v941 = vunpack.c.l.b16 %v892
          %v942 = vunpack.c.h.b16 %v892
          %v943 = vunpack.c.l.b16 %v893
          %v944 = vunpack.c.h.b16 %v893
          %v945 = vunpack.c.l.b16 %v894
          %v946 = vunpack.c.h.b16 %v894
          %v947 = vunpack.c.l.b16 %v895
          %v948 = vunpack.c.h.b16 %v895
          %v949 = vunpack.c.l.b16 %v896
          %v950 = vunpack.c.h.b16 %v896
          %v951 = vunpack.c.l.b16 %v897
          %v952 = vunpack.c.h.b16 %v897
          %v953 = vunpack.c.l.b16 %v898
          %v954 = vunpack.c.h.b16 %v898
          %v955 = vunpack.c.l.b16 %v899
          %v956 = vunpack.c.h.b16 %v899
          %v957 = vunpack.c.l.b16 %v900
          %v958 = vunpack.c.h.b16 %v900
          %v959 = vunpack.c.l.b16 %v901
          %v960 = vunpack.c.h.b16 %v901
          %v961 = vunpack.c.l.b16 %v902
          %v962 = vunpack.c.h.b16 %v902
          %v963 = vpack.c.b16 %v933, %v931
          %v964 = vpack.c.b16 %v934, %v932
          %v965 = vpack.c.b16 %v937, %v935
          %v966 = vpack.c.b16 %v938, %v936
          %v967 = vpack.c.b16 %v941, %v939
          %v968 = vpack.c.b16 %v942, %v940
          %v969 = vpack.c.b16 %v945, %v943
          %v970 = vpack.c.b16 %v946, %v944
          %v971 = vpack.c.b16 %v949, %v947
          %v972 = vpack.c.b16 %v950, %v948
          %v973 = vpack.c.b16 %v953, %v951
          %v974 = vpack.c.b16 %v954, %v952
          %v975 = vpack.c.b16 %v957, %v955
          %v976 = vpack.c.b16 %v958, %v956
          %v977 = vpack.c.b16 %v961, %v959
          %v978 = vpack.c.b16 %v962, %v960
          %995 = vmatprep.subr.bf16.mxu0 %v964
          %996 = vmatpush1.bf16.msra.mxu0 %v963
          %997 = vmatprep.subr.bf16.mxu0 %v966
          %998 = vmatpush1.bf16.msra.mxu0 %v965
          %999 = vmatprep.subr.bf16.mxu0 %v968
          %1000 = vmatpush1.bf16.msra.mxu0 %v967
          %1001 = vmatprep.subr.bf16.mxu0 %v970
          %1002 = vmatpush1.bf16.msra.mxu0 %v969
          %1003 = vmatprep.subr.bf16.mxu0 %v972
          %1004 = vmatpush1.bf16.msra.mxu0 %v971
          %1005 = vmatprep.subr.bf16.mxu0 %v974
          %1006 = vmatpush1.bf16.msra.mxu0 %v973
          %1007 = vmatprep.subr.bf16.mxu0 %v976
          %1008 = vmatpush1.bf16.msra.mxu0 %v975
          %1009 = vmatprep.subr.bf16.mxu0 %v978
          %1010 = vmatpush1.bf16.msra.mxu0 %v977
          %1011 = vmatprep.subr.bf16.mxu0 0
          %1012 = vmatpush1.bf16.msra.mxu0 0
          %1013 = vmatprep.subr.bf16.mxu0 0
          %1014 = vmatpush1.bf16.msra.mxu0 0
          %1015 = vmatprep.subr.bf16.mxu0 0
          %1016 = vmatpush1.bf16.msra.mxu0 0
          %1017 = vmatprep.subr.bf16.mxu0 0
          %1018 = vmatpush1.bf16.msra.mxu0 0
          %1019 = vmatprep.subr.bf16.mxu0 0
          %1020 = vmatpush1.bf16.msra.mxu0 0
          %1021 = vmatprep.subr.bf16.mxu0 0
          %1022 = vmatpush1.bf16.msra.mxu0 0
          %1023 = vmatprep.subr.bf16.mxu0 0
          %1024 = vmatpush1.bf16.msra.mxu0 0
          %1025 = vmatprep.subr.bf16.mxu0 0
          %1026 = vmatpush1.bf16.msra.mxu0 0
          %1027 = vmatprep.mubr.bf16.mxu0 0
          %1028 = vmatmul.mubr.bf16.gmra.mrb[0].mxu0 %v879
          %v1029 = vpop.f32.mrb[0].mxu0
          %v1030 = vadd.f32 %v908, %v1029
          %v1031 = vpop.f32.mrb[0].mxu0
          %v1032 = vadd.f32 %v912, %v1031
          %v1033 = vpop.f32.mrb[0].mxu0
          %v1034 = vadd.f32 %v908, %v1033
          %v1035 = vpop.f32.mrb[0].mxu0
          %v1036 = vadd.f32 %v912, %v1035
          %1037 = vmatprep.mubr.bf16.mxu0 0
          %1038 = vmatmul.mubr.bf16.gmra.mrb[0].mxu0 %v880
          %v1039 = vpop.f32.mrb[0].mxu0
          %v1040 = vadd.f32 %v908, %v1039
          %v1041 = vpop.f32.mrb[0].mxu0
          %v1042 = vadd.f32 %v912, %v1041
          %v1043 = vpop.f32.mrb[0].mxu0
          %v1044 = vadd.f32 %v908, %v1043
          %v1045 = vpop.f32.mrb[0].mxu0
          %v1046 = vadd.f32 %v912, %v1045
          %1047 = vmatprep.mubr.bf16.mxu0 0
          %1048 = vmatmul.mubr.bf16.gmra.mrb[0].mxu0 %v881
          %v1049 = vpop.f32.mrb[0].mxu0
          %v1050 = vadd.f32 %v908, %v1049
          %v1051 = vpop.f32.mrb[0].mxu0
          %v1052 = vadd.f32 %v912, %v1051
          %v1053 = vpop.f32.mrb[0].mxu0
          %v1054 = vadd.f32 %v908, %v1053
          %v1055 = vpop.f32.mrb[0].mxu0
          %v1056 = vadd.f32 %v912, %v1055
          %1057 = vmatprep.mubr.bf16.mxu0 0
          %1058 = vmatmul.mubr.bf16.gmra.mrb[0].mxu0 %v882
          %v1059 = vpop.f32.mrb[0].mxu0
          %v1060 = vadd.f32 %v908, %v1059
          %v1061 = vpop.f32.mrb[0].mxu0
          %v1062 = vadd.f32 %v912, %v1061
          %v1063 = vpop.f32.mrb[0].mxu0
          %v1064 = vadd.f32 %v908, %v1063
          %v1065 = vpop.f32.mrb[0].mxu0
          %v1066 = vadd.f32 %v912, %v1065
          %1067 = vmatprep.mubr.bf16.mxu0 0
          %1068 = vmatmul.mubr.bf16.gmra.mrb[0].mxu0 %v883
          %v1069 = vpop.f32.mrb[0].mxu0
          %v1070 = vadd.f32 %v908, %v1069
          %v1071 = vpop.f32.mrb[0].mxu0
          %v1072 = vadd.f32 %v912, %v1071
          %v1073 = vpop.f32.mrb[0].mxu0
          %v1074 = vadd.f32 %v908, %v1073
          %v1075 = vpop.f32.mrb[0].mxu0
          %v1076 = vadd.f32 %v912, %v1075
          %1077 = vmatprep.mubr.bf16.mxu0 0
          %1078 = vmatmul.mubr.bf16.gmra.mrb[0].mxu0 %v884
          %v1079 = vpop.f32.mrb[0].mxu0
          %v1080 = vadd.f32 %v908, %v1079
          %v1081 = vpop.f32.mrb[0].mxu0
          %v1082 = vadd.f32 %v912, %v1081
          %v1083 = vpop.f32.mrb[0].mxu0
          %v1084 = vadd.f32 %v908, %v1083
          %v1085 = vpop.f32.mrb[0].mxu0
          %v1086 = vadd.f32 %v912, %v1085
          %1087 = vmatprep.mubr.bf16.mxu0 0
          %1088 = vmatmul.mubr.bf16.gmra.mrb[0].mxu0 %v885
          %v1089 = vpop.f32.mrb[0].mxu0
          %v1090 = vadd.f32 %v908, %v1089
          %v1091 = vpop.f32.mrb[0].mxu0
          %v1092 = vadd.f32 %v912, %v1091
          %v1093 = vpop.f32.mrb[0].mxu0
          %v1094 = vadd.f32 %v908, %v1093
          %v1095 = vpop.f32.mrb[0].mxu0
          %v1096 = vadd.f32 %v912, %v1095
          %1097 = vmatprep.mubr.bf16.mxu0 0
          %1098 = vmatmul.mubr.bf16.gmra.mrb[0].mxu0 %v886
          %v1099 = vpop.f32.mrb[0].mxu0
          %v1100 = vadd.f32 %v908, %v1099
          %v1101 = vpop.f32.mrb[0].mxu0
          %v1102 = vadd.f32 %v912, %v1101
          %v1103 = vpop.f32.mrb[0].mxu0
          %v1104 = vadd.f32 %v908, %v1103
          %v1105 = vpop.f32.mrb[0].mxu0
          %v1106 = vadd.f32 %v912, %v1105
          %1107 = vdwg.mxu0
          %v1108 = vpack.c.bf16 %v1034, %v1030
          %v1109 = vpack.c.bf16 %v1036, %v1032
          %v1110 = vpack.c.bf16 %v1044, %v1040
          %v1111 = vpack.c.bf16 %v1046, %v1042
          %v1112 = vpack.c.bf16 %v1054, %v1050
          %v1113 = vpack.c.bf16 %v1056, %v1052
          %v1114 = vpack.c.bf16 %v1064, %v1060
          %v1115 = vpack.c.bf16 %v1066, %v1062
          %v1116 = vpack.c.bf16 %v1074, %v1070
          %v1117 = vpack.c.bf16 %v1076, %v1072
          %v1118 = vpack.c.bf16 %v1084, %v1080
          %v1119 = vpack.c.bf16 %v1086, %v1082
          %v1120 = vpack.c.bf16 %v1094, %v1090
          %v1121 = vpack.c.bf16 %v1096, %v1092
          %v1122 = vpack.c.bf16 %v1104, %v1100
          %v1123 = vpack.c.bf16 %v1106, %v1102
          %1124 = vst [vmem:[#allocation2] sm:$0xff] %v1108
          %1125 = vst [vmem:[#allocation2 + $0x8] sm:$0xff] %v1109
          %1126 = vst [vmem:[#allocation2 + $0x10] sm:$0xff] %v1110
          %1127 = vst [vmem:[#allocation2 + $0x18] sm:$0xff] %v1111
          %1128 = vst [vmem:[#allocation2 + $0x20] sm:$0xff] %v1112
          %1129 = vst [vmem:[#allocation2 + $0x28] sm:$0xff] %v1113
          %1130 = vst [vmem:[#allocation2 + $0x30] sm:$0xff] %v1114
          %1131 = vst [vmem:[#allocation2 + $0x38] sm:$0xff] %v1115
          %1132 = vst [vmem:[#allocation2 + $0x40] sm:$0xff] %v1116
          %1133 = vst [vmem:[#allocation2 + $0x48] sm:$0xff] %v1117
          %1134 = vst [vmem:[#allocation2 + $0x50] sm:$0xff] %v1118
          %1135 = vst [vmem:[#allocation2 + $0x58] sm:$0xff] %v1119
          %1136 = vst [vmem:[#allocation2 + $0x60] sm:$0xff] %v1120
          %1137 = vst [vmem:[#allocation2 + $0x68] sm:$0xff] %v1121
          %1138 = vst [vmem:[#allocation2 + $0x70] sm:$0xff] %v1122
          %1139 = vst [vmem:[#allocation2 + $0x78] sm:$0xff] %v1123
        $region92: #{tpu_custom_call.1} parent=71 // pred_fallthru
          _
        %v1140 = vld [vmem:[%s485] sm:$0xf]
        %v1141 = vunpack.c.l.bf16 %v1140
        %v1142 = vld [vmem:[%s3] sm:$0x1]
        %v1143 = vld [vmem:[%s4] sm:$0x1]
        %1144 = vadd.xlane.f32.xlu0 %v1141
        %v1145 = vpop.xlane.xlu0 %1144
        %v1146 = vmul.f32 %v1145, 0.03125
        %v1147 = vsub.f32 %v1141, %v1146
        %v1148 = vmul.f32 %v1147, %v1147
        %1149 = vadd.xlane.f32.xlu0 %v1148
        %v1150 = vpop.xlane.xlu0 %1149
        %v1151 = vmul.f32 %v1146, 96.0
        %v1152 = vmul.f32 %v1151, %v1146
        %v1153 = vsub.f32 %v1150, %v1152
        %v1154 = vmul.f32 %v1153, 0.03125
        %v1155 = vmax.f32 %v1154, 0.0
        %v1156 = vadd.f32 %v1155, 1e-05
        %v1157 = vrsqrt.pop %v1156
        %v1158 = vmul.f32 %v1147, %v1157
        %v1160 = vlaneseq
        %v1161 = vshrl.u32 %v1160, 7
        %v1162 = vsub.s32 0, %v1161
        %v1163 = vrot.slane %v1142, %v1162
        %v1165 = vmul.f32 %v1158, %v1163
        %v1167 = vlaneseq
        %v1168 = vshrl.u32 %v1167, 7
        %v1169 = vsub.s32 0, %v1168
        %v1170 = vrot.slane %v1143, %v1169
        %v1172 = vadd.f32 %v1165, %v1170
        %v1173 = vpack.c.bf16 %v1172, %v1172
        %v1174 = vld [vmem:[#allocation8] sm:$0xf]
        %v1175 = vld [vmem:[#allocation8 + $0x4] sm:$0xf]
        %v1176 = vld [vmem:[#allocation8 + $0x8] sm:$0xf]
        %v1177 = vld [vmem:[#allocation8 + $0xc] sm:$0xf]
        %v1178 = vld [vmem:[#allocation8 + $0x10] sm:$0xf]
        %v1179 = vld [vmem:[#allocation8 + $0x14] sm:$0xf]
        %v1180 = vld [vmem:[#allocation8 + $0x18] sm:$0xf]
        %v1181 = vld [vmem:[#allocation8 + $0x1c] sm:$0xf]
        %v1182 = vld [vmem:[#allocation8 + $0x20] sm:$0xf]
        %v1183 = vld [vmem:[#allocation8 + $0x24] sm:$0xf]
        %v1184 = vld [vmem:[#allocation8 + $0x28] sm:$0xf]
        %v1185 = vld [vmem:[#allocation8 + $0x2c] sm:$0xf]
        %v1186 = vld [vmem:[#allocation8 + $0x30] sm:$0xf]
        %v1187 = vld [vmem:[#allocation8 + $0x34] sm:$0xf]
        %v1188 = vld [vmem:[#allocation8 + $0x38] sm:$0xf]
        %v1189 = vld [vmem:[#allocation8 + $0x3c] sm:$0xf]
        %v1190 = vld [vmem:[%s8] sm:$0x1]
        %v1192 = vlaneseq
        %v1193 = vshrl.u32 %v1192, 7
        %v1194 = vsub.s32 0, %v1193
        %v1195 = vrot.slane %v1190, %v1194
        %v1213 = vunpack.c.l.b16 %v1174
        %v1214 = vunpack.c.l.b16 %v1175
        %v1215 = vunpack.c.l.b16 %v1176
        %v1216 = vunpack.c.l.b16 %v1177
        %v1217 = vunpack.c.l.b16 %v1178
        %v1218 = vunpack.c.l.b16 %v1179
        %v1219 = vunpack.c.l.b16 %v1180
        %v1220 = vunpack.c.l.b16 %v1181
        %v1221 = vunpack.c.l.b16 %v1182
        %v1222 = vunpack.c.l.b16 %v1183
        %v1223 = vunpack.c.l.b16 %v1184
        %v1224 = vunpack.c.l.b16 %v1185
        %v1225 = vunpack.c.l.b16 %v1186
        %v1226 = vunpack.c.l.b16 %v1187
        %v1227 = vunpack.c.l.b16 %v1188
        %v1228 = vunpack.c.l.b16 %v1189
        %v1229 = vpack.c.b16 %v1214, %v1213
        %v1230 = vpack.c.b16 %v1216, %v1215
        %v1231 = vpack.c.b16 %v1218, %v1217
        %v1232 = vpack.c.b16 %v1220, %v1219
        %v1233 = vpack.c.b16 %v1222, %v1221
        %v1234 = vpack.c.b16 %v1224, %v1223
        %v1235 = vpack.c.b16 %v1226, %v1225
        %v1236 = vpack.c.b16 %v1228, %v1227
        %1245 = vmatprep.subr.bf16.mxu0 0
        %1246 = vmatpush1.bf16.msra.mxu0 %v1229
        %1247 = vmatprep.subr.bf16.mxu0 0
        %1248 = vmatpush1.bf16.msra.mxu0 %v1230
        %1249 = vmatprep.subr.bf16.mxu0 0
        %1250 = vmatpush1.bf16.msra.mxu0 %v1231
        %1251 = vmatprep.subr.bf16.mxu0 0
        %1252 = vmatpush1.bf16.msra.mxu0 %v1232
        %1253 = vmatprep.subr.bf16.mxu0 0
        %1254 = vmatpush1.bf16.msra.mxu0 %v1233
        %1255 = vmatprep.subr.bf16.mxu0 0
        %1256 = vmatpush1.bf16.msra.mxu0 %v1234
        %1257 = vmatprep.subr.bf16.mxu0 0
        %1258 = vmatpush1.bf16.msra.mxu0 %v1235
        %1259 = vmatprep.subr.bf16.mxu0 0
        %1260 = vmatpush1.bf16.msra.mxu0 %v1236
        %1261 = vmatprep.subr.bf16.mxu0 0
        %1262 = vmatpush1.bf16.msra.mxu0 0
        %1263 = vmatprep.subr.bf16.mxu0 0
        %1264 = vmatpush1.bf16.msra.mxu0 0
        %1265 = vmatprep.subr.bf16.mxu0 0
        %1266 = vmatpush1.bf16.msra.mxu0 0
        %1267 = vmatprep.subr.bf16.mxu0 0
        %1268 = vmatpush1.bf16.msra.mxu0 0
        %1269 = vmatprep.subr.bf16.mxu0 0
        %1270 = vmatpush1.bf16.msra.mxu0 0
        %1271 = vmatprep.subr.bf16.mxu0 0
        %1272 = vmatpush1.bf16.msra.mxu0 0
        %1273 = vmatprep.subr.bf16.mxu0 0
        %1274 = vmatpush1.bf16.msra.mxu0 0
        %1275 = vmatprep.subr.bf16.mxu0 0
        %1276 = vmatpush1.bf16.msra.mxu0 0
        %1277 = vmatprep.mubr.bf16.mxu0 0
        %1278 = vmatmul.mubr.bf16.gmra.mrb[0].mxu0 %v1173
        %v1279 = vpop.f32.mrb[0].mxu0
        %v1280 = vadd.f32 %v1195, %v1279
        %v1281 = vpop.f32.mrb[0].mxu0
        %v1282 = vpop.f32.mrb[0].mxu0
        %v1283 = vpop.f32.mrb[0].mxu0
        %1284 = vdwg.mxu0
        %v1285 = vpack.c.bf16 %v1280, %v1280
        %v1286 = vld [vmem:[#allocation2] sm:$0xff]
        %v1287 = vld [vmem:[#allocation2 + $0x10] sm:$0xff]
        %v1288 = vld [vmem:[#allocation2 + $0x20] sm:$0xff]
        %v1289 = vld [vmem:[#allocation2 + $0x30] sm:$0xff]
        %v1290 = vld [vmem:[#allocation2 + $0x40] sm:$0xff]
        %v1291 = vld [vmem:[#allocation2 + $0x50] sm:$0xff]
        %v1292 = vld [vmem:[#allocation2 + $0x60] sm:$0xff]
        %v1293 = vld [vmem:[#allocation2 + $0x70] sm:$0xff]
        %v1294 = vld [vmem:[#allocation2 + $0x8] sm:$0xff]
        %v1295 = vld [vmem:[#allocation2 + $0x18] sm:$0xff]
        %v1296 = vld [vmem:[#allocation2 + $0x28] sm:$0xff]
        %v1297 = vld [vmem:[#allocation2 + $0x38] sm:$0xff]
        %v1298 = vld [vmem:[#allocation2 + $0x48] sm:$0xff]
        %v1299 = vld [vmem:[#allocation2 + $0x58] sm:$0xff]
        %v1300 = vld [vmem:[#allocation2 + $0x68] sm:$0xff]
        %v1301 = vld [vmem:[#allocation2 + $0x78] sm:$0xff]
        %v1302 = vld [vmem:[%s555] sm:$0x1]
        %v1304 = vlaneseq
        %v1305 = vshrl.u32 %v1304, 7
        %v1306 = vsub.s32 0, %v1305
        %v1307 = vrot.slane %v1302, %v1306
        %1309 = vmatprep.subr.bf16.mxu0 0
        %1310 = vmatpush1.bf16.xpose.msra.mxu0 %v1286
        %1311 = vmatprep.subr.bf16.mxu0 0
        %1312 = vmatpush1.bf16.xpose.msra.mxu0 %v1287
        %1313 = vmatprep.subr.bf16.mxu0 0
        %1314 = vmatpush1.bf16.xpose.msra.mxu0 %v1288
        %1315 = vmatprep.subr.bf16.mxu0 0
        %1316 = vmatpush1.bf16.xpose.msra.mxu0 %v1289
        %1317 = vmatprep.subr.bf16.mxu0 0
        %1318 = vmatpush1.bf16.xpose.msra.mxu0 %v1290
        %1319 = vmatprep.subr.bf16.mxu0 0
        %1320 = vmatpush1.bf16.xpose.msra.mxu0 %v1291
        %1321 = vmatprep.subr.bf16.mxu0 0
        %1322 = vmatpush1.bf16.xpose.msra.mxu0 %v1292
        %1323 = vmatprep.subr.bf16.mxu0 0
        %1324 = vmatpush1.bf16.xpose.msra.mxu0 %v1293
        %1325 = vmatprep.subr.bf16.mxu0 0
        %1326 = vmatpush1.bf16.xpose.msra.mxu0 0
        %1327 = vmatprep.subr.bf16.mxu0 0
        %1328 = vmatpush1.bf16.xpose.msra.mxu0 0
        %1329 = vmatprep.subr.bf16.mxu0 0
        %1330 = vmatpush1.bf16.xpose.msra.mxu0 0
        %1331 = vmatprep.subr.bf16.mxu0 0
        %1332 = vmatpush1.bf16.xpose.msra.mxu0 0
        %1333 = vmatprep.subr.bf16.mxu0 0
        %1334 = vmatpush1.bf16.xpose.msra.mxu0 0
        %1335 = vmatprep.subr.bf16.mxu0 0
        %1336 = vmatpush1.bf16.xpose.msra.mxu0 0
        %1337 = vmatprep.subr.bf16.mxu0 0
        %1338 = vmatpush1.bf16.xpose.msra.mxu0 0
        %1339 = vmatprep.subr.bf16.mxu0 0
        %1340 = vmatpush1.bf16.xpose.msra.mxu0 0
        %1341 = vmatprep.mubr.bf16.mxu0 0
        %1342 = vmatmul.mubr.bf16.gmra.mrb[0].mxu0 %v1285
        %v1343 = vpop.f32.mrb[0].mxu0
        %v1344 = vadd.f32 %v1307, %v1343
        %v1345 = vpop.f32.mrb[0].mxu0
        %v1346 = vpop.f32.mrb[0].mxu0
        %v1347 = vpop.f32.mrb[0].mxu0
        %1348 = vdwg.mxu0
        %1349 = vmax.xlane.f32.xlu0 %v1344
        %v1350 = vpop.xlane.xlu0 %1349
        %v1351 = vsub.f32 %v1344, %v1350
        %v1352 = vmul.f32 %v1351, 1.442695
        %v1353 = vpow.pop %v1352
        %1354 = vadd.xlane.f32.xlu0 %v1353
        %v1355 = vpop.xlane.xlu0 %1354
        %v1356 = vrcp.pop %v1355
        %v1357 = vmul.f32 %v1353, %v1356
        %v1358 = vpack.c.bf16 %v1357, %v1357
        %1359 = vmatprep.subr.bf16.mxu0 0
        %1360 = vmatpush1.bf16.msra.mxu0 %v1294
        %1361 = vmatprep.subr.bf16.mxu0 0
        %1362 = vmatpush1.bf16.msra.mxu0 %v1295
        %1363 = vmatprep.subr.bf16.mxu0 0
        %1364 = vmatpush1.bf16.msra.mxu0 %v1296
        %1365 = vmatprep.subr.bf16.mxu0 0
        %1366 = vmatpush1.bf16.msra.mxu0 %v1297
        %1367 = vmatprep.subr.bf16.mxu0 0
        %1368 = vmatpush1.bf16.msra.mxu0 %v1298
        %1369 = vmatprep.subr.bf16.mxu0 0
        %1370 = vmatpush1.bf16.msra.mxu0 %v1299
        %1371 = vmatprep.subr.bf16.mxu0 0
        %1372 = vmatpush1.bf16.msra.mxu0 %v1300
        %1373 = vmatprep.subr.bf16.mxu0 0
        %1374 = vmatpush1.bf16.msra.mxu0 %v1301
        %1375 = vmatprep.subr.bf16.mxu0 0
        %1376 = vmatpush1.bf16.msra.mxu0 0
        %1377 = vmatprep.subr.bf16.mxu0 0
        %1378 = vmatpush1.bf16.msra.mxu0 0
        %1379 = vmatprep.subr.bf16.mxu0 0
        %1380 = vmatpush1.bf16.msra.mxu0 0
        %1381 = vmatprep.subr.bf16.mxu0 0
        %1382 = vmatpush1.bf16.msra.mxu0 0
        %1383 = vmatprep.subr.bf16.mxu0 0
        %1384 = vmatpush1.bf16.msra.mxu0 0
        %1385 = vmatprep.subr.bf16.mxu0 0
        %1386 = vmatpush1.bf16.msra.mxu0 0
        %1387 = vmatprep.subr.bf16.mxu0 0
        %1388 = vmatpush1.bf16.msra.mxu0 0
        %1389 = vmatprep.subr.bf16.mxu0 0
        %1390 = vmatpush1.bf16.msra.mxu0 0
        %1391 = vmatprep.mubr.bf16.mxu0 0
        %1392 = vmatmul.mubr.bf16.gmra.mrb[0].mxu0 %v1358
        %v1393 = vpop.f32.mrb[0].mxu0
        %v1394 = vadd.f32 0.0, %v1393
        %v1395 = vpop.f32.mrb[0].mxu0
        %v1396 = vpop.f32.mrb[0].mxu0
        %v1397 = vpop.f32.mrb[0].mxu0
        %1398 = vdwg.mxu0
        %v1399 = vld [vmem:[%s11] sm:$0x1]
        %v1400 = vld [vmem:[%s12] sm:$0x1]
        %1401 = vadd.xlane.f32.xlu0 %v1394
        %v1402 = vpop.xlane.xlu0 %1401
        %v1403 = vmul.f32 %v1402, 0.03125
        %v1404 = vsub.f32 %v1394, %v1403
        %v1405 = vmul.f32 %v1404, %v1404
        %1406 = vadd.xlane.f32.xlu0 %v1405
        %v1407 = vpop.xlane.xlu0 %1406
        %v1408 = vmul.f32 %v1403, 96.0
        %v1409 = vmul.f32 %v1408, %v1403
        %v1410 = vsub.f32 %v1407, %v1409
        %v1411 = vmul.f32 %v1410, 0.03125
        %v1412 = vmax.f32 %v1411, 0.0
        %v1413 = vadd.f32 %v1412, 1e-05
        %v1414 = vrsqrt.pop %v1413
        %v1415 = vmul.f32 %v1404, %v1414
        %v1417 = vlaneseq
        %v1418 = vshrl.u32 %v1417, 7
        %v1419 = vsub.s32 0, %v1418
        %v1420 = vrot.slane %v1399, %v1419
        %v1422 = vmul.f32 %v1415, %v1420
        %v1424 = vlaneseq
        %v1425 = vshrl.u32 %v1424, 7
        %v1426 = vsub.s32 0, %v1425
        %v1427 = vrot.slane %v1400, %v1426
        %v1429 = vadd.f32 %v1422, %v1427
        %v1430 = vpack.c.bf16 %v1429, %v1429
        %1431 = vst [vmem:[%s552] sm:$0xf] %v1430
        %s1432 = sand.u32 %s346, 1
        %s1433 = scalar_lea.sflag [#allocation5], %s1432
        %s1434 = sand.u32 %s346, 1
        %s1435 = smul.addr %s1434, 4
        %s1436 = scalar_lea.vmem [#allocation11], %s1435
        // Predicated region
        $region93: #{tpu_custom_call.1} parent=71 // pred_check
          %p1437 = pneg %p356
        $region94: #{tpu_custom_call.1} parent=71 // pred_check_branch
          %1439 = sbr.rel (%p1437) target = $region96
        $region95: #{tpu_custom_call.1} parent=71 // pred_region
          %s1441 = ssub.s32 64, 64
          %1442 = vsyncadd %s1433, %s1441
          %s1443 = sadd.s32 %s39, %s38
          %s1444 = smul.addr %s1443, 64
          %s1445 = scalar_lea.hbm %s13, %s1444
          %s1447 = sshll.u32 %s1436, 4
          %s1448 = int_to_ptr.vmem [resolvable:$true] %s1447
          %1450 = dma.vmem_to_hbm [thread:$0]  %s1448, 64, %s1445, %s1433
        $region96: #{tpu_custom_call.1} parent=71 // pred_fallthru
          _
      $region72: #{tpu_custom_call.1} parent=5 // pred_fallthru
        _
      %p1451 = scmp.le.s32.totalorder 2, %s29
      // Predicated region
      $region97: #{tpu_custom_call.1} parent=5 // pred_check
        %p1452 = pneg %p1451
      $region98: #{tpu_custom_call.1} parent=5 // pred_check_branch
        %1454 = sbr.rel (%p1452) target = $region100
      $region99: #{tpu_custom_call.1} parent=5 // pred_region
        %s1455 = ssub.s32 %s29, 2
        // Predicated region
        $region101: #{tpu_custom_call.1} parent=99 // pred_check
          %p1456 = pneg %p362
        $region102: #{tpu_custom_call.1} parent=99 // pred_check_branch
          %1458 = sbr.rel (%p1456) target = $region104
        $region103: #{tpu_custom_call.1} parent=99 // pred_region
          %s1459 = sand.u32 %s347, 1
          %s1460 = scalar_lea.sflag [#allocation5], %s1459
          %s1461 = sand.u32 %s347, 1
          %s1462 = smul.addr %s1461, 4
          %s1463 = scalar_lea.vmem [#allocation11], %s1462
          %1464 = dma.done %s1460, 64
        $region104: #{tpu_custom_call.1} parent=99 // pred_fallthru
          _
      $region100: #{tpu_custom_call.1} parent=5 // pred_fallthru
        _
    $region6: #{tpu_custom_call.1} parent=1 // loop_footer
      %s33 = sadd.s32 1, %s29
    $region7: #{tpu_custom_call.1} parent=1 // loop_footer_branch
      %28 = sbr.rel target = $region3
    $region8: #{tpu_custom_call.1} parent=1 // loop_exit
      _
    %1465 = vsyncpa [#allocation4], 1
    %s1466 = scalar_lea.sflag [#allocation4], 1
    %1467 = vsyncpa %s1466, 1
    %1468 = vsyncpa [#allocation7], 1
    %s1469 = scalar_lea.sflag [#allocation7], 1
    %1470 = vsyncpa %s1469, 1
    %1471 = vsyncpa [#allocation10], 1
    %1472 = vsyncpa [#allocation5], 1
    %s1473 = scalar_lea.sflag [#allocation5], 1
    %1474 = vsyncpa %s1473, 1

// kernel: tpu_custom_call.1
$region0: #{tpu_custom_call.1}
  #allocation0 [shape = 'u32[]', space=smem, size = 0x4, offset = 0x4, fixed_abs, tag = 'smem constant byte address 0x4 - core index']
  #allocation1 [shape = 'u32[144,128]{1,0:T(1,128)}', space=vmem, size = 0x12000, scoped, tag = 'internal scratch']
  #allocation2 [shape = 'bf16[1,128,256]{2,1,0:T(16,128)(2,1)}', space=vmem, size = 0x10000, scoped, tag = 'scratch operand']
  %s0 = inlined_call_operand.hbm [shape: bf16[2,8,128], index: 0, kind: input, shape index: {}]
  %s1 = inlined_call_operand.hbm [shape: bf16[2,128,128], index: 1, kind: input, shape index: {}]
  %s2 = inlined_call_operand.vmem [shape: f32[2,1,128], index: 2, kind: input, shape index: {}]
  %s3 = inlined_call_operand.vmem [shape: f32[1,128], index: 3, kind: input, shape index: {}]
  %s4 = inlined_call_operand.vmem [shape: f32[1,128], index: 4, kind: input, shape index: {}]
  %s5 = inlined_call_operand.vmem [shape: f32[1,128], index: 5, kind: input, shape index: {}]
  %s6 = inlined_call_operand.vmem [shape: f32[1,128], index: 6, kind: input, shape index: {}]
  %s7 = inlined_call_operand.hbm [shape: bf16[128,128], index: 7, kind: input, shape index: {}]
  %s8 = inlined_call_operand.vmem [shape: f32[1,128], index: 8, kind: input, shape index: {}]
  %s9 = inlined_call_operand.hbm [shape: bf16[128,256], index: 9, kind: input, shape index: {}]
  %s10 = inlined_call_operand.vmem [shape: f32[1,256], index: 10, kind: input, shape index: {}]
  %s11 = inlined_call_operand.vmem [shape: f32[1,128], index: 11, kind: input, shape index: {}]
  %s12 = inlined_call_operand.vmem [shape: f32[1,128], index: 12, kind: input, shape index: {}]
  %s13 = inlined_call_operand.hbm [shape: bf16[2,8,128], index: 13, kind: output, shape index: {}]
  %s14 = sld [smem:[#allocation0]]
  $region105: #{tpu_custom_call.1} parent=0
    _
  %s16 = ssub.s32 1, %s14
  %s17 = scalar_select 0, %s16, %s14
  $region1: #{tpu_custom_call.1} parent=0
    #allocation3 [shape = 'u8[4096]{0}', space=vmem, size = 0x1000, scoped, tag = 'input window, operand 0']
    #allocation4 [shape = 's32[2]{0}', space=sflag, size = 0x8, scoped, tag = 'scoped memory for tpu_custom_call.1']
    #allocation5 [shape = 's32[2]{0}', space=sflag, size = 0x8, scoped, tag = 'scoped memory for tpu_custom_call.1']
    #allocation6 [shape = 'u8[65536]{0}', space=vmem, size = 0x10000, scoped, tag = 'input window, operand 1']
    #allocation7 [shape = 's32[2]{0}', space=sflag, size = 0x8, scoped, tag = 'scoped memory for tpu_custom_call.1']
    #allocation8 [shape = 'u8[32768]{0}', space=vmem, size = 0x8000, scoped, tag = 'input window, operand 7, single buffered']
    #allocation9 [shape = 'u8[65536]{0}', space=vmem, size = 0x10000, scoped, tag = 'input window, operand 9, single buffered']
    #allocation10 [shape = 's32[1]{0}', space=sflag, size = 0x4, scoped, tag = 'scoped memory for tpu_custom_call.1']
    #allocation11 [shape = 'u8[4096]{0}', space=vmem, size = 0x1000, scoped, tag = 'output window, operand 0']
    %18 = vsyncpa [#allocation4], 0
    %s19 = scalar_lea.sflag [#allocation4], 1
    %20 = vsyncpa %s19, 0
    %21 = vsyncpa [#allocation7], 0
    %s22 = scalar_lea.sflag [#allocation7], 1
    %23 = vsyncpa %s22, 0
    %24 = vsyncpa [#allocation10], 0
    %25 = vsyncpa [#allocation5], 0
    %s26 = scalar_lea.sflag [#allocation5], 1
    %27 = vsyncpa %s26, 0
    loop: start=0, step=1, limit=4
    $region2: #{tpu_custom_call.1} parent=1 // loop_pre_header
      _
    $region3: #{tpu_custom_call.1} parent=1 // loop_header
      %s29 = sphi 0, %s33
      %p30 = scmp.ge.s32.totalorder %s29, 4
      %s36 = sphi 0, %s48
      %s37 = sphi 0, %s44
      %s38 = sphi 0, %s36
      %s39 = sphi 0, %s37
      %s40 = sphi 0, %s38
      %s41 = sphi 0, %s39
      %s53 = sphi 0, %s55
      %s56 = sphi 0, %s53
      %s57 = sphi 0, %s56
      %s73 = sphi 0, %s57
      %s79 = sphi 0, %s81
      %s82 = sphi 0, %s79
      %s83 = sphi 0, %s82
      %s99 = sphi 0, %s83
      %s105 = sphi 0, %s107
      %s108 = sphi 0, %s105
      %s109 = sphi 0, %s108
      %s125 = sphi 0, %s109
      %s129 = sphi 0, %s129
      %s131 = sphi 0, %s129
      %s132 = sphi 0, %s131
      %s146 = sphi 0, %s132
      %s150 = sphi 0, %s150
      %s152 = sphi 0, %s150
      %s153 = sphi 0, %s152
      %s167 = sphi 0, %s153
      %s171 = sphi 0, %s171
      %s173 = sphi 0, %s171
      %s174 = sphi 0, %s173
      %s188 = sphi 0, %s174
      %s192 = sphi 0, %s192
      %s194 = sphi 0, %s192
      %s195 = sphi 0, %s194
      %s209 = sphi 0, %s195
      %s213 = sphi 0, %s213
      %s215 = sphi 0, %s213
      %s216 = sphi 0, %s215
      %s230 = sphi 0, %s216
      %s234 = sphi 0, %s234
      %s236 = sphi 0, %s234
      %s237 = sphi 0, %s236
      %s251 = sphi 0, %s237
      %s255 = sphi 0, %s255
      %s257 = sphi 0, %s255
      %s258 = sphi 0, %s257
      %s272 = sphi 0, %s258
      %s276 = sphi 0, %s276
      %s278 = sphi 0, %s276
      %s279 = sphi 0, %s278
      %s293 = sphi 0, %s279
      %s297 = sphi 0, %s297
      %s299 = sphi 0, %s297
      %s300 = sphi 0, %s299
      %s314 = sphi 0, %s300
      %s318 = sphi 0, %s318
      %s320 = sphi 0, %s318
      %s321 = sphi 0, %s320
      %s335 = sphi 0, %s321
      %s343 = sphi 0, %s345
      %s346 = sphi 0, %s343
      %s347 = sphi 0, %s346
      %s363 = sphi 0, %s347
    $region4: #{tpu_custom_call.1} parent=1 // loop_header_branch
      %32 = sbr.rel (%p30) target = $region8
    $region5: #{tpu_custom_call.1} parent=1 // loop_body
      %s34 = ssub.s32 %s29, 1
      %s35 = ssub.s32 %s29, 2
      %s42 = sadd.s32 1, %s37
      %p43 = scmp.ge.s32.totalorder %s42, 1
      %s44 = scalar_select %p43, 0, %s42
      %s45 = sadd.s32 1, %s36
      %s46 = scalar_select %p43, %s45, %s36
      %p47 = scmp.ge.s32.totalorder %s46, 2
      %s48 = scalar_select %p47, 0, %s46
      %s49 = ssub.s32 %s36, %s48
      %s50 = ssub.s32 %s37, %s44
      %s51 = sor.u32 %s49, %s50
      %p52 = scmp.eq.s32.totalorder %s51, 0
      %s54 = sadd.s32 %s53, 1
      %s55 = scalar_select %p52, %s53, %s54
      %p58 = pneg %p52
      %p59 = scmp.eq.s32.totalorder %s29, 1
      %p60 = por %p58, %p59
      %p61 = scmp.ne.s32.totalorder %s53, %s56
      %p62 = scmp.eq.s32.totalorder %s29, 0
      %p63 = por %p61, %p62
      %p64 = scmp.ne.s32.totalorder %s53, %s56
      %p65 = scmp.eq.s32.totalorder %s34, 1
      %p66 = por %p64, %p65
      %p67 = scmp.ne.s32.totalorder %s56, %s57
      %p68 = scmp.eq.s32.totalorder %s34, 0
      %p69 = por %p67, %p68
      %p70 = scmp.ne.s32.totalorder %s56, %s57
      %p71 = scmp.eq.s32.totalorder %s35, 1
      %p72 = por %p70, %p71
      %p74 = scmp.ne.s32.totalorder %s57, %s73
      %p75 = scmp.eq.s32.totalorder %s35, 0
      %p76 = por %p74, %p75
      %s77 = ssub.s32 %s36, %s48
      %p78 = scmp.eq.s32.totalorder %s77, 0
      %s80 = sadd.s32 %s79, 1
      %s81 = scalar_select %p78, %s79, %s80
      %p84 = pneg %p78
      %p85 = scmp.eq.s32.totalorder %s29, 1
      %p86 = por %p84, %p85
      %p87 = scmp.ne.s32.totalorder %s79, %s82
      %p88 = scmp.eq.s32.totalorder %s29, 0
      %p89 = por %p87, %p88
      %p90 = scmp.ne.s32.totalorder %s79, %s82
      %p91 = scmp.eq.s32.totalorder %s34, 1
      %p92 = por %p90, %p91
      %p93 = scmp.ne.s32.totalorder %s82, %s83
      %p94 = scmp.eq.s32.totalorder %s34, 0
      %p95 = por %p93, %p94
      %p96 = scmp.ne.s32.totalorder %s82, %s83
      %p97 = scmp.eq.s32.totalorder %s35, 1
      %p98 = por %p96, %p97
      %p100 = scmp.ne.s32.totalorder %s83, %s99
      %p101 = scmp.eq.s32.totalorder %s35, 0
      %p102 = por %p100, %p101
      %s103 = ssub.s32 %s36, %s48
      %p104 = scmp.eq.s32.totalorder %s103, 0
      %s106 = sadd.s32 %s105, 1
      %s107 = scalar_select %p104, %s105, %s106
      %p110 = pneg %p104
      %p111 = scmp.eq.s32.totalorder %s29, 1
      %p112 = por %p110, %p111
      %p113 = scmp.ne.s32.totalorder %s105, %s108
      %p114 = scmp.eq.s32.totalorder %s29, 0
      %p115 = por %p113, %p114
      %p116 = scmp.ne.s32.totalorder %s105, %s108
      %p117 = scmp.eq.s32.totalorder %s34, 1
      %p118 = por %p116, %p117
      %p119 = scmp.ne.s32.totalorder %s108, %s109
      %p120 = scmp.eq.s32.totalorder %s34, 0
      %p121 = por %p119, %p120
      %p122 = scmp.ne.s32.totalorder %s108, %s109
      %p123 = scmp.eq.s32.totalorder %s35, 1
      %p124 = por %p122, %p123
      %p126 = scmp.ne.s32.totalorder %s109, %s125
      %p127 = scmp.eq.s32.totalorder %s35, 0
      %p128 = por %p126, %p127
      %s130 = sadd.s32 %s129, 1
      %p133 = scmp.eq.s32.totalorder %s29, 1
      %p134 = scmp.ne.s32.totalorder %s129, %s131
      %p135 = scmp.eq.s32.totalorder %s29, 0
      %p136 = por %p134, %p135
      %p137 = scmp.ne.s32.totalorder %s129, %s131
      %p138 = scmp.eq.s32.totalorder %s34, 1
      %p139 = por %p137, %p138
      %p140 = scmp.ne.s32.totalorder %s131, %s132
      %p141 = scmp.eq.s32.totalorder %s34, 0
      %p142 = por %p140, %p141
      %p143 = scmp.ne.s32.totalorder %s131, %s132
      %p144 = scmp.eq.s32.totalorder %s35, 1
      %p145 = por %p143, %p144
      %p147 = scmp.ne.s32.totalorder %s132, %s146
      %p148 = scmp.eq.s32.totalorder %s35, 0
      %p149 = por %p147, %p148
      %s151 = sadd.s32 %s150, 1
      %p154 = scmp.eq.s32.totalorder %s29, 1
      %p155 = scmp.ne.s32.totalorder %s150, %s152
      %p156 = scmp.eq.s32.totalorder %s29, 0
      %p157 = por %p155, %p156
      %p158 = scmp.ne.s32.totalorder %s150, %s152
      %p159 = scmp.eq.s32.totalorder %s34, 1
      %p160 = por %p158, %p159
      %p161 = scmp.ne.s32.totalorder %s152, %s153
      %p162 = scmp.eq.s32.totalorder %s34, 0
      %p163 = por %p161, %p162
      %p164 = scmp.ne.s32.totalorder %s152, %s153
      %p165 = scmp.eq.s32.totalorder %s35, 1
      %p166 = por %p164, %p165
      %p168 = scmp.ne.s32.totalorder %s153, %s167
      %p169 = scmp.eq.s32.totalorder %s35, 0
      %p170 = por %p168, %p169
      %s172 = sadd.s32 %s171, 1
      %p175 = scmp.eq.s32.totalorder %s29, 1
      %p176 = scmp.ne.s32.totalorder %s171, %s173
      %p177 = scmp.eq.s32.totalorder %s29, 0
      %p178 = por %p176, %p177
      %p179 = scmp.ne.s32.totalorder %s171, %s173
      %p180 = scmp.eq.s32.totalorder %s34, 1
      %p181 = por %p179, %p180
      %p182 = scmp.ne.s32.totalorder %s173, %s174
      %p183 = scmp.eq.s32.totalorder %s34, 0
      %p184 = por %p182, %p183
      %p185 = scmp.ne.s32.totalorder %s173, %s174
      %p186 = scmp.eq.s32.totalorder %s35, 1
      %p187 = por %p185, %p186
      %p189 = scmp.ne.s32.totalorder %s174, %s188
      %p190 = scmp.eq.s32.totalorder %s35, 0
      %p191 = por %p189, %p190
      %s193 = sadd.s32 %s192, 1
      %p196 = scmp.eq.s32.totalorder %s29, 1
      %p197 = scmp.ne.s32.totalorder %s192, %s194
      %p198 = scmp.eq.s32.totalorder %s29, 0
      %p199 = por %p197, %p198
      %p200 = scmp.ne.s32.totalorder %s192, %s194
      %p201 = scmp.eq.s32.totalorder %s34, 1
      %p202 = por %p200, %p201
      %p203 = scmp.ne.s32.totalorder %s194, %s195
      %p204 = scmp.eq.s32.totalorder %s34, 0
      %p205 = por %p203, %p204
      %p206 = scmp.ne.s32.totalorder %s194, %s195
      %p207 = scmp.eq.s32.totalorder %s35, 1
      %p208 = por %p206, %p207
      %p210 = scmp.ne.s32.totalorder %s195, %s209
      %p211 = scmp.eq.s32.totalorder %s35, 0
      %p212 = por %p210, %p211
      %s214 = sadd.s32 %s213, 1
      %p217 = scmp.eq.s32.totalorder %s29, 1
      %p218 = scmp.ne.s32.totalorder %s213, %s215
      %p219 = scmp.eq.s32.totalorder %s29, 0
      %p220 = por %p218, %p219
      %p221 = scmp.ne.s32.totalorder %s213, %s215
      %p222 = scmp.eq.s32.totalorder %s34, 1
      %p223 = por %p221, %p222
      %p224 = scmp.ne.s32.totalorder %s215, %s216
      %p225 = scmp.eq.s32.totalorder %s34, 0
      %p226 = por %p224, %p225
      %p227 = scmp.ne.s32.totalorder %s215, %s216
      %p228 = scmp.eq.s32.totalorder %s35, 1
      %p229 = por %p227, %p228
      %p231 = scmp.ne.s32.totalorder %s216, %s230
      %p232 = scmp.eq.s32.totalorder %s35, 0
      %p233 = por %p231, %p232
      %s235 = sadd.s32 %s234, 1
      %p238 = scmp.eq.s32.totalorder %s29, 1
      %p239 = scmp.ne.s32.totalorder %s234, %s236
      %p240 = scmp.eq.s32.totalorder %s29, 0
      %p241 = por %p239, %p240
      %p242 = scmp.ne.s32.totalorder %s234, %s236
      %p243 = scmp.eq.s32.totalorder %s34, 1
      %p244 = por %p242, %p243
      %p245 = scmp.ne.s32.totalorder %s236, %s237
      %p246 = scmp.eq.s32.totalorder %s34, 0
      %p247 = por %p245, %p246
      %p248 = scmp.ne.s32.totalorder %s236, %s237
      %p249 = scmp.eq.s32.totalorder %s35, 1
      %p250 = por %p248, %p249
      %p252 = scmp.ne.s32.totalorder %s237, %s251
      %p253 = scmp.eq.s32.totalorder %s35, 0
      %p254 = por %p252, %p253
      %s256 = sadd.s32 %s255, 1
      %p259 = scmp.eq.s32.totalorder %s29, 1
      %p260 = scmp.ne.s32.totalorder %s255, %s257
      %p261 = scmp.eq.s32.totalorder %s29, 0
      %p262 = por %p260, %p261
      %p263 = scmp.ne.s32.totalorder %s255, %s257
      %p264 = scmp.eq.s32.totalorder %s34, 1
      %p265 = por %p263, %p264
      %p266 = scmp.ne.s32.totalorder %s257, %s258
      %p267 = scmp.eq.s32.totalorder %s34, 0
      %p268 = por %p266, %p267
      %p269 = scmp.ne.s32.totalorder %s257, %s258
      %p270 = scmp.eq.s32.totalorder %s35, 1
      %p271 = por %p269, %p270
      %p273 = scmp.ne.s32.totalorder %s258, %s272
      %p274 = scmp.eq.s32.totalorder %s35, 0
      %p275 = por %p273, %p274
      %s277 = sadd.s32 %s276, 1
      %p280 = scmp.eq.s32.totalorder %s29, 1
      %p281 = scmp.ne.s32.totalorder %s276, %s278
      %p282 = scmp.eq.s32.totalorder %s29, 0
      %p283 = por %p281, %p282
      %p284 = scmp.ne.s32.totalorder %s276, %s278
      %p285 = scmp.eq.s32.totalorder %s34, 1
      %p286 = por %p284, %p285
      %p287 = scmp.ne.s32.totalorder %s278, %s279
      %p288 = scmp.eq.s32.totalorder %s34, 0
      %p289 = por %p287, %p288
      %p290 = scmp.ne.s32.totalorder %s278, %s279
      %p291 = scmp.eq.s32.totalorder %s35, 1
      %p292 = por %p290, %p291
      %p294 = scmp.ne.s32.totalorder %s279, %s293
      %p295 = scmp.eq.s32.totalorder %s35, 0
      %p296 = por %p294, %p295
      %s298 = sadd.s32 %s297, 1
      %p301 = scmp.eq.s32.totalorder %s29, 1
      %p302 = scmp.ne.s32.totalorder %s297, %s299
      %p303 = scmp.eq.s32.totalorder %s29, 0
      %p304 = por %p302, %p303
      %p305 = scmp.ne.s32.totalorder %s297, %s299
      %p306 = scmp.eq.s32.totalorder %s34, 1
      %p307 = por %p305, %p306
      %p308 = scmp.ne.s32.totalorder %s299, %s300
      %p309 = scmp.eq.s32.totalorder %s34, 0
      %p310 = por %p308, %p309
      %p311 = scmp.ne.s32.totalorder %s299, %s300
      %p312 = scmp.eq.s32.totalorder %s35, 1
      %p313 = por %p311, %p312
      %p315 = scmp.ne.s32.totalorder %s300, %s314
      %p316 = scmp.eq.s32.totalorder %s35, 0
      %p317 = por %p315, %p316
      %s319 = sadd.s32 %s318, 1
      %p322 = scmp.eq.s32.totalorder %s29, 1
      %p323 = scmp.ne.s32.totalorder %s318, %s320
      %p324 = scmp.eq.s32.totalorder %s29, 0
      %p325 = por %p323, %p324
      %p326 = scmp.ne.s32.totalorder %s318, %s320
      %p327 = scmp.eq.s32.totalorder %s34, 1
      %p328 = por %p326, %p327
      %p329 = scmp.ne.s32.totalorder %s320, %s321
      %p330 = scmp.eq.s32.totalorder %s34, 0
      %p331 = por %p329, %p330
      %p332 = scmp.ne.s32.totalorder %s320, %s321
      %p333 = scmp.eq.s32.totalorder %s35, 1
      %p334 = por %p332, %p333
      %p336 = scmp.ne.s32.totalorder %s321, %s335
      %p337 = scmp.eq.s32.totalorder %s35, 0
      %p338 = por %p336, %p337
      %s339 = ssub.s32 %s36, %s48
      %s340 = ssub.s32 %s37, %s44
      %s341 = sor.u32 %s339, %s340
      %p342 = scmp.eq.s32.totalorder %s341, 0
      %s344 = sadd.s32 %s343, 1
      %s345 = scalar_select %p342, %s343, %s344
      %p348 = pneg %p342
      %p349 = scmp.eq.s32.totalorder %s29, 1
      %p350 = por %p348, %p349
      %p351 = scmp.ne.s32.totalorder %s343, %s346
      %p352 = scmp.eq.s32.totalorder %s29, 0
      %p353 = por %p351, %p352
      %p354 = scmp.ne.s32.totalorder %s343, %s346
      %p355 = scmp.eq.s32.totalorder %s34, 1
      %p356 = por %p354, %p355
      %p357 = scmp.ne.s32.totalorder %s346, %s347
      %p358 = scmp.eq.s32.totalorder %s34, 0
      %p359 = por %p357, %p358
      %p360 = scmp.ne.s32.totalorder %s346, %s347
      %p361 = scmp.eq.s32.totalorder %s35, 1
      %p362 = por %p360, %p361
      %p364 = scmp.ne.s32.totalorder %s347, %s363
      %p365 = scmp.eq.s32.totalorder %s35, 0
      %p366 = por %p364, %p365
      %p367 = scmp.le.s32.totalorder 1, %s29
      %p368 = scmp.lt.s32.totalorder %s29, 3
      %p369 = pnand %p367, %p368
      %p370 = pneg %p369
      // Predicated region
      $region9: #{tpu_custom_call.1} parent=5 // pred_check
        _
      $region10: #{tpu_custom_call.1} parent=5 // pred_check_branch
        %372 = sbr.rel (%p369) target = $region12
      $region11: #{tpu_custom_call.1} parent=5 // pred_region
        %s373 = ssub.s32 %s29, 1
        // Predicated region
        $region13: #{tpu_custom_call.1} parent=11 // pred_check
          %p374 = pneg %p142
        $region14: #{tpu_custom_call.1} parent=11 // pred_check_branch
          %376 = sbr.rel (%p374) target = $region16
        $region15: #{tpu_custom_call.1} parent=11 // pred_region
          _
        $region16: #{tpu_custom_call.1} parent=11 // pred_fallthru
          _
        // Predicated region
        $region17: #{tpu_custom_call.1} parent=11 // pred_check
          %p377 = pneg %p163
        $region18: #{tpu_custom_call.1} parent=11 // pred_check_branch
          %379 = sbr.rel (%p377) target = $region20
        $region19: #{tpu_custom_call.1} parent=11 // pred_region
          _
        $region20: #{tpu_custom_call.1} parent=11 // pred_fallthru
          _
        // Predicated region
        $region21: #{tpu_custom_call.1} parent=11 // pred_check
          %p380 = pneg %p184
        $region22: #{tpu_custom_call.1} parent=11 // pred_check_branch
          %382 = sbr.rel (%p380) target = $region24
        $region23: #{tpu_custom_call.1} parent=11 // pred_region
          _
        $region24: #{tpu_custom_call.1} parent=11 // pred_fallthru
          _
        // Predicated region
        $region25: #{tpu_custom_call.1} parent=11 // pred_check
          %p383 = pneg %p205
        $region26: #{tpu_custom_call.1} parent=11 // pred_check_branch
          %385 = sbr.rel (%p383) target = $region28
        $region27: #{tpu_custom_call.1} parent=11 // pred_region
          _
        $region28: #{tpu_custom_call.1} parent=11 // pred_fallthru
          _
        // Predicated region
        $region29: #{tpu_custom_call.1} parent=11 // pred_check
          %p386 = pneg %p226
        $region30: #{tpu_custom_call.1} parent=11 // pred_check_branch
          %388 = sbr.rel (%p386) target = $region32
        $region31: #{tpu_custom_call.1} parent=11 // pred_region
          %s390 = ssub.s32 1024, 1024
          %391 = vsyncadd [#allocation7], %s390
          %s392 = sshll.u32 [#allocation8], 4
          %s393 = int_to_ptr.vmem [resolvable:$true] %s392
          %398 = dma.hbm_to_vmem [thread:$0]  %s7, 1024, %s393, [#allocation7], 64, 64, 4
        $region32: #{tpu_custom_call.1} parent=11 // pred_fallthru
          _
        // Predicated region
        $region33: #{tpu_custom_call.1} parent=11 // pred_check
          %p399 = pneg %p247
        $region34: #{tpu_custom_call.1} parent=11 // pred_check_branch
          %401 = sbr.rel (%p399) target = $region36
        $region35: #{tpu_custom_call.1} parent=11 // pred_region
          _
        $region36: #{tpu_custom_call.1} parent=11 // pred_fallthru
          _
        // Predicated region
        $region37: #{tpu_custom_call.1} parent=11 // pred_check
          %p402 = pneg %p268
        $region38: #{tpu_custom_call.1} parent=11 // pred_check_branch
          %404 = sbr.rel (%p402) target = $region40
        $region39: #{tpu_custom_call.1} parent=11 // pred_region
          %s406 = ssub.s32 2048, 2048
          %407 = vsyncadd [#allocation10], %s406
          %s408 = sshll.u32 [#allocation9], 4
          %s409 = int_to_ptr.vmem [resolvable:$true] %s408
          %414 = dma.hbm_to_vmem [thread:$0]  %s9, 2048, %s409, [#allocation10], 128, 128, 8
        $region40: #{tpu_custom_call.1} parent=11 // pred_fallthru
          _
        // Predicated region
        $region41: #{tpu_custom_call.1} parent=11 // pred_check
          %p415 = pneg %p289
        $region42: #{tpu_custom_call.1} parent=11 // pred_check_branch
          %417 = sbr.rel (%p415) target = $region44
        $region43: #{tpu_custom_call.1} parent=11 // pred_region
          _
        $region44: #{tpu_custom_call.1} parent=11 // pred_fallthru
          _
        // Predicated region
        $region45: #{tpu_custom_call.1} parent=11 // pred_check
          %p418 = pneg %p310
        $region46: #{tpu_custom_call.1} parent=11 // pred_check_branch
          %420 = sbr.rel (%p418) target = $region48
        $region47: #{tpu_custom_call.1} parent=11 // pred_region
          _
        $region48: #{tpu_custom_call.1} parent=11 // pred_fallthru
          _
        // Predicated region
        $region49: #{tpu_custom_call.1} parent=11 // pred_check
          %p421 = pneg %p331
        $region50: #{tpu_custom_call.1} parent=11 // pred_check_branch
          %423 = sbr.rel (%p421) target = $region52
        $region51: #{tpu_custom_call.1} parent=11 // pred_region
          _
        $region52: #{tpu_custom_call.1} parent=11 // pred_fallthru
          _
      $region12: #{tpu_custom_call.1} parent=5 // pred_fallthru
        _
      %p424 = scmp.lt.s32.totalorder %s29, 2
      // Predicated region
      $region53: #{tpu_custom_call.1} parent=5 // pred_check
        %p425 = pneg %p424
      $region54: #{tpu_custom_call.1} parent=5 // pred_check_branch
        %427 = sbr.rel (%p425) target = $region56
      $region55: #{tpu_custom_call.1} parent=5 // pred_region
        // Predicated region
        $region57: #{tpu_custom_call.1} parent=55 // pred_check
          %p428 = pneg %p63
        $region58: #{tpu_custom_call.1} parent=55 // pred_check_branch
          %430 = sbr.rel (%p428) target = $region60
        $region59: #{tpu_custom_call.1} parent=55 // pred_region
          %s431 = sand.u32 %s53, 1
          %s432 = scalar_lea.sflag [#allocation4], %s431
          %s433 = sand.u32 %s53, 1
          %s434 = smul.addr %s433, 4
          %s435 = scalar_lea.vmem [#allocation3], %s434
          %s437 = ssub.s32 64, 64
          %438 = vsyncadd %s432, %s437
          %s439 = sadd.s32 %s37, %s36
          %s440 = smul.addr %s439, 64
          %s441 = scalar_lea.hbm %s0, %s440
          %s443 = sshll.u32 %s435, 4
          %s444 = int_to_ptr.vmem [resolvable:$true] %s443
          %446 = dma.hbm_to_vmem [thread:$0]  %s441, 64, %s444, %s432
        $region60: #{tpu_custom_call.1} parent=55 // pred_fallthru
          _
        // Predicated region
        $region61: #{tpu_custom_call.1} parent=55 // pred_check
          %p447 = pneg %p89
        $region62: #{tpu_custom_call.1} parent=55 // pred_check_branch
          %449 = sbr.rel (%p447) target = $region64
        $region63: #{tpu_custom_call.1} parent=55 // pred_region
          %s450 = sand.u32 %s29, 1
          %s451 = scalar_lea.sflag [#allocation7], %s450
          %s452 = sand.u32 %s79, 1
          %s453 = smul.addr %s452, 64
          %s454 = scalar_lea.vmem [#allocation6], %s453
          %s456 = ssub.s32 1024, 1024
          %457 = vsyncadd %s451, %s456
          %s458 = smul.addr %s36, 16
          %s459 = smul.addr %s458, 64
          %s460 = scalar_lea.hbm %s1, %s459
          %s461 = sshll.u32 %s454, 4
          %s462 = int_to_ptr.vmem [resolvable:$true] %s461
          %467 = dma.hbm_to_vmem [thread:$0]  %s460, 1024, %s462, %s451, 64, 64, 4
        $region64: #{tpu_custom_call.1} parent=55 // pred_fallthru
          _
        // Predicated region
        $region65: #{tpu_custom_call.1} parent=55 // pred_check
          %p468 = pneg %p115
        $region66: #{tpu_custom_call.1} parent=55 // pred_check_branch
          %470 = sbr.rel (%p468) target = $region68
        $region67: #{tpu_custom_call.1} parent=55 // pred_region
          %p471 = scmp.lt.s32.totalorder %s36, 1
          %s472 = scalar_select %p471, %s36, 1
          %s473 = scalar_lea.vmem %s2, %s472
        $region68: #{tpu_custom_call.1} parent=55 // pred_fallthru
          _
      $region56: #{tpu_custom_call.1} parent=5 // pred_fallthru
        _
      %p474 = scmp.le.s32.totalorder 1, %s29
      %p475 = scmp.lt.s32.totalorder %s29, 3
      %p476 = pnand %p474, %p475
      %p477 = pneg %p476
      // Predicated region
      $region69: #{tpu_custom_call.1} parent=5 // pred_check
        _
      $region70: #{tpu_custom_call.1} parent=5 // pred_check_branch
        %479 = sbr.rel (%p476) target = $region72
      $region71: #{tpu_custom_call.1} parent=5 // pred_region
        %s480 = ssub.s32 %s29, 1
        %s481 = sand.u32 %s56, 1
        %s482 = scalar_lea.sflag [#allocation4], %s481
        %s483 = sand.u32 %s56, 1
        %s484 = smul.addr %s483, 4
        %s485 = scalar_lea.vmem [#allocation3], %s484
        // Predicated region
        $region73: #{tpu_custom_call.1} parent=71 // pred_check
          %p486 = pneg %p69
        $region74: #{tpu_custom_call.1} parent=71 // pred_check_branch
          %488 = sbr.rel (%p486) target = $region76
        $region75: #{tpu_custom_call.1} parent=71 // pred_region
          %489 = dma.done %s482, 64
        $region76: #{tpu_custom_call.1} parent=71 // pred_fallthru
          _
        %s490 = sand.u32 %s34, 1
        %s491 = scalar_lea.sflag [#allocation7], %s490
        %s492 = sand.u32 %s82, 1
        %s493 = smul.addr %s492, 64
        %s494 = scalar_lea.vmem [#allocation6], %s493
        // Predicated region
        $region77: #{tpu_custom_call.1} parent=71 // pred_check
          %p495 = pneg %p95
        $region78: #{tpu_custom_call.1} parent=71 // pred_check_branch
          %497 = sbr.rel (%p495) target = $region80
        $region79: #{tpu_custom_call.1} parent=71 // pred_region
          %498 = dma.done %s491, 1024
        $region80: #{tpu_custom_call.1} parent=71 // pred_fallthru
          _
        // Predicated region
        $region81: #{tpu_custom_call.1} parent=71 // pred_check
          %p499 = pneg %p226
        $region82: #{tpu_custom_call.1} parent=71 // pred_check_branch
          %501 = sbr.rel (%p499) target = $region84
        $region83: #{tpu_custom_call.1} parent=71 // pred_region
          %502 = dma.done [#allocation7], 1024
        $region84: #{tpu_custom_call.1} parent=71 // pred_fallthru
          _
        // Predicated region
        $region85: #{tpu_custom_call.1} parent=71 // pred_check
          %p503 = pneg %p268
        $region86: #{tpu_custom_call.1} parent=71 // pred_check_branch
          %505 = sbr.rel (%p503) target = $region88
        $region87: #{tpu_custom_call.1} parent=71 // pred_region
          %506 = dma.done [#allocation10], 2048
        $region88: #{tpu_custom_call.1} parent=71 // pred_fallthru
          _
        %s507 = sand.u32 %s56, 1
        %s508 = scalar_lea.sflag [#allocation4], %s507
        %s509 = sand.u32 %s56, 1
        %s510 = smul.addr %s509, 4
        %s511 = scalar_lea.vmem [#allocation3], %s510
        %p512 = pneg %p69
        %p513 = pneg %p66
        %s514 = sand.u32 %s34, 1
        %s515 = scalar_lea.sflag [#allocation7], %s514
        %s516 = sand.u32 %s82, 1
        %s517 = smul.addr %s516, 64
        %s518 = scalar_lea.vmem [#allocation6], %s517
        %p519 = pneg %p95
        %p520 = pneg %p92
        %p521 = scmp.lt.s32.totalorder %s38, 1
        %s522 = scalar_select %p521, %s38, 1
        %s523 = scalar_lea.vmem %s2, %s522
        %p524 = pneg %p121
        %p525 = pneg %p118
        %p526 = pneg %p142
        %p527 = pneg %p139
        %p528 = pneg %p163
        %p529 = pneg %p160
        %p530 = pneg %p184
        %p531 = pneg %p181
        %p532 = pneg %p205
        %p533 = pneg %p202
        %p534 = pneg %p226
        %p535 = pneg %p223
        %p536 = pneg %p247
        %p537 = pneg %p244
        %p538 = pneg %p268
        %p539 = pneg %p265
        %p540 = pneg %p289
        %p541 = pneg %p286
        %p542 = pneg %p310
        %p543 = pneg %p307
        %p544 = pneg %p331
        %p545 = pneg %p328
        %p546 = pneg %p359
        %p547 = pneg %p356
        %s548 = sand.u32 %s346, 1
        %s549 = scalar_lea.sflag [#allocation5], %s548
        %s550 = sand.u32 %s346, 1
        %s551 = smul.addr %s550, 4
        %s552 = scalar_lea.vmem [#allocation11], %s551
        %p553 = scmp.lt.s32.totalorder %s38, 1
        %s554 = scalar_select %p553, %s38, 1
        %s555 = scalar_lea.vmem %s2, %s554
        %p557 = scmp.eq.s32.totalorder %s39, 0
        // Predicated region
        $region89: #{tpu_custom_call.1} parent=71 // pred_check
          %p558 = pneg %p557
        $region90: #{tpu_custom_call.1} parent=71 // pred_check_branch
          %560 = sbr.rel (%p558) target = $region92
        $region91: #{tpu_custom_call.1} parent=71 // pred_region
          %v561 = vld [vmem:[%s494] sm:$0xf]
          %v562 = vld [vmem:[%s494 + $0x4] sm:$0xf]
          %v563 = vld [vmem:[%s494 + $0x8] sm:$0xf]
          %v564 = vld [vmem:[%s494 + $0xc] sm:$0xf]
          %v565 = vld [vmem:[%s494 + $0x10] sm:$0xf]
          %v566 = vld [vmem:[%s494 + $0x14] sm:$0xf]
          %v567 = vld [vmem:[%s494 + $0x18] sm:$0xf]
          %v568 = vld [vmem:[%s494 + $0x1c] sm:$0xf]
          %v569 = vld [vmem:[%s494 + $0x20] sm:$0xf]
          %v570 = vld [vmem:[%s494 + $0x24] sm:$0xf]
          %v571 = vld [vmem:[%s494 + $0x28] sm:$0xf]
          %v572 = vld [vmem:[%s494 + $0x2c] sm:$0xf]
          %v573 = vld [vmem:[%s494 + $0x30] sm:$0xf]
          %v574 = vld [vmem:[%s494 + $0x34] sm:$0xf]
          %v575 = vld [vmem:[%s494 + $0x38] sm:$0xf]
          %v576 = vld [vmem:[%s494 + $0x3c] sm:$0xf]
          %v577 = vunpack.c.l.bf16 %v561
          %v578 = vunpack.c.l.bf16 %v562
          %v579 = vunpack.c.l.bf16 %v563
          %v580 = vunpack.c.l.bf16 %v564
          %v581 = vunpack.c.l.bf16 %v565
          %v582 = vunpack.c.l.bf16 %v566
          %v583 = vunpack.c.l.bf16 %v567
          %v584 = vunpack.c.l.bf16 %v568
          %v585 = vunpack.c.l.bf16 %v569
          %v586 = vunpack.c.l.bf16 %v570
          %v587 = vunpack.c.l.bf16 %v571
          %v588 = vunpack.c.l.bf16 %v572
          %v589 = vunpack.c.l.bf16 %v573
          %v590 = vunpack.c.l.bf16 %v574
          %v591 = vunpack.c.l.bf16 %v575
          %v592 = vunpack.c.l.bf16 %v576
          %v593 = vld [vmem:[%s5] sm:$0x1]
          %v594 = vld [vmem:[%s6] sm:$0x1]
          %595 = vadd.xlane.f32.xlu0 %v577
          %v596 = vpop.xlane.xlu0 %595
          %597 = vadd.xlane.f32.xlu0 %v578
          %v598 = vpop.xlane.xlu0 %597
          %599 = vadd.xlane.f32.xlu0 %v579
          %v600 = vpop.xlane.xlu0 %599
          %601 = vadd.xlane.f32.xlu0 %v580
          %v602 = vpop.xlane.xlu0 %601
          %603 = vadd.xlane.f32.xlu0 %v581
          %v604 = vpop.xlane.xlu0 %603
          %605 = vadd.xlane.f32.xlu0 %v582
          %v606 = vpop.xlane.xlu0 %605
          %607 = vadd.xlane.f32.xlu0 %v583
          %v608 = vpop.xlane.xlu0 %607
          %609 = vadd.xlane.f32.xlu0 %v584
          %v610 = vpop.xlane.xlu0 %609
          %611 = vadd.xlane.f32.xlu0 %v585
          %v612 = vpop.xlane.xlu0 %611
          %613 = vadd.xlane.f32.xlu0 %v586
          %v614 = vpop.xlane.xlu0 %613
          %615 = vadd.xlane.f32.xlu0 %v587
          %v616 = vpop.xlane.xlu0 %615
          %617 = vadd.xlane.f32.xlu0 %v588
          %v618 = vpop.xlane.xlu0 %617
          %619 = vadd.xlane.f32.xlu0 %v589
          %v620 = vpop.xlane.xlu0 %619
          %621 = vadd.xlane.f32.xlu0 %v590
          %v622 = vpop.xlane.xlu0 %621
          %623 = vadd.xlane.f32.xlu0 %v591
          %v624 = vpop.xlane.xlu0 %623
          %625 = vadd.xlane.f32.xlu0 %v592
          %v626 = vpop.xlane.xlu0 %625
          %v627 = vmul.f32 %v596, 0.03125
          %v628 = vmul.f32 %v598, 0.03125
          %v629 = vmul.f32 %v600, 0.03125
          %v630 = vmul.f32 %v602, 0.03125
          %v631 = vmul.f32 %v604, 0.03125
          %v632 = vmul.f32 %v606, 0.03125
          %v633 = vmul.f32 %v608, 0.03125
          %v634 = vmul.f32 %v610, 0.03125
          %v635 = vmul.f32 %v612, 0.03125
          %v636 = vmul.f32 %v614, 0.03125
          %v637 = vmul.f32 %v616, 0.03125
          %v638 = vmul.f32 %v618, 0.03125
          %v639 = vmul.f32 %v620, 0.03125
          %v640 = vmul.f32 %v622, 0.03125
          %v641 = vmul.f32 %v624, 0.03125
          %v642 = vmul.f32 %v626, 0.03125
          %v643 = vsub.f32 %v577, %v627
          %v644 = vsub.f32 %v578, %v628
          %v645 = vsub.f32 %v579, %v629
          %v646 = vsub.f32 %v580, %v630
          %v647 = vsub.f32 %v581, %v631
          %v648 = vsub.f32 %v582, %v632
          %v649 = vsub.f32 %v583, %v633
          %v650 = vsub.f32 %v584, %v634
          %v651 = vsub.f32 %v585, %v635
          %v652 = vsub.f32 %v586, %v636
          %v653 = vsub.f32 %v587, %v637
          %v654 = vsub.f32 %v588, %v638
          %v655 = vsub.f32 %v589, %v639
          %v656 = vsub.f32 %v590, %v640
          %v657 = vsub.f32 %v591, %v641
          %v658 = vsub.f32 %v592, %v642
          %v659 = vmul.f32 %v643, %v643
          %v660 = vmul.f32 %v644, %v644
          %v661 = vmul.f32 %v645, %v645
          %v662 = vmul.f32 %v646, %v646
          %v663 = vmul.f32 %v647, %v647
          %v664 = vmul.f32 %v648, %v648
          %v665 = vmul.f32 %v649, %v649
          %v666 = vmul.f32 %v650, %v650
          %v667 = vmul.f32 %v651, %v651
          %v668 = vmul.f32 %v652, %v652
          %v669 = vmul.f32 %v653, %v653
          %v670 = vmul.f32 %v654, %v654
          %v671 = vmul.f32 %v655, %v655
          %v672 = vmul.f32 %v656, %v656
          %v673 = vmul.f32 %v657, %v657
          %v674 = vmul.f32 %v658, %v658
          %675 = vadd.xlane.f32.xlu0 %v659
          %v676 = vpop.xlane.xlu0 %675
          %677 = vadd.xlane.f32.xlu0 %v660
          %v678 = vpop.xlane.xlu0 %677
          %679 = vadd.xlane.f32.xlu0 %v661
          %v680 = vpop.xlane.xlu0 %679
          %681 = vadd.xlane.f32.xlu0 %v662
          %v682 = vpop.xlane.xlu0 %681
          %683 = vadd.xlane.f32.xlu0 %v663
          %v684 = vpop.xlane.xlu0 %683
          %685 = vadd.xlane.f32.xlu0 %v664
          %v686 = vpop.xlane.xlu0 %685
          %687 = vadd.xlane.f32.xlu0 %v665
          %v688 = vpop.xlane.xlu0 %687
          %689 = vadd.xlane.f32.xlu0 %v666
          %v690 = vpop.xlane.xlu0 %689
          %691 = vadd.xlane.f32.xlu0 %v667
          %v692 = vpop.xlane.xlu0 %691
          %693 = vadd.xlane.f32.xlu0 %v668
          %v694 = vpop.xlane.xlu0 %693
          %695 = vadd.xlane.f32.xlu0 %v669
          %v696 = vpop.xlane.xlu0 %695
          %697 = vadd.xlane.f32.xlu0 %v670
          %v698 = vpop.xlane.xlu0 %697
          %699 = vadd.xlane.f32.xlu0 %v671
          %v700 = vpop.xlane.xlu0 %699
          %701 = vadd.xlane.f32.xlu0 %v672
          %v702 = vpop.xlane.xlu0 %701
          %703 = vadd.xlane.f32.xlu0 %v673
          %v704 = vpop.xlane.xlu0 %703
          %705 = vadd.xlane.f32.xlu0 %v674
          %v706 = vpop.xlane.xlu0 %705
          %v707 = vmul.f32 %v627, 96.0
          %v708 = vmul.f32 %v628, 96.0
          %v709 = vmul.f32 %v629, 96.0
          %v710 = vmul.f32 %v630, 96.0
          %v711 = vmul.f32 %v631, 96.0
          %v712 = vmul.f32 %v632, 96.0
          %v713 = vmul.f32 %v633, 96.0
          %v714 = vmul.f32 %v634, 96.0
          %v715 = vmul.f32 %v635, 96.0
          %v716 = vmul.f32 %v636, 96.0
          %v717 = vmul.f32 %v637, 96.0
          %v718 = vmul.f32 %v638, 96.0
          %v719 = vmul.f32 %v639, 96.0
          %v720 = vmul.f32 %v640, 96.0
          %v721 = vmul.f32 %v641, 96.0
          %v722 = vmul.f32 %v642, 96.0
          %v723 = vmul.f32 %v707, %v627
          %v724 = vmul.f32 %v708, %v628
          %v725 = vmul.f32 %v709, %v629
          %v726 = vmul.f32 %v710, %v630
          %v727 = vmul.f32 %v711, %v631
          %v728 = vmul.f32 %v712, %v632
          %v729 = vmul.f32 %v713, %v633
          %v730 = vmul.f32 %v714, %v634
          %v731 = vmul.f32 %v715, %v635
          %v732 = vmul.f32 %v716, %v636
          %v733 = vmul.f32 %v717, %v637
          %v734 = vmul.f32 %v718, %v638
          %v735 = vmul.f32 %v719, %v639
          %v736 = vmul.f32 %v720, %v640
          %v737 = vmul.f32 %v721, %v641
          %v738 = vmul.f32 %v722, %v642
          %v739 = vsub.f32 %v676, %v723
          %v740 = vsub.f32 %v678, %v724
          %v741 = vsub.f32 %v680, %v725
          %v742 = vsub.f32 %v682, %v726
          %v743 = vsub.f32 %v684, %v727
          %v744 = vsub.f32 %v686, %v728
          %v745 = vsub.f32 %v688, %v729
          %v746 = vsub.f32 %v690, %v730
          %v747 = vsub.f32 %v692, %v731
          %v748 = vsub.f32 %v694, %v732
          %v749 = vsub.f32 %v696, %v733
          %v750 = vsub.f32 %v698, %v734
          %v751 = vsub.f32 %v700, %v735
          %v752 = vsub.f32 %v702, %v736
          %v753 = vsub.f32 %v704, %v737
          %v754 = vsub.f32 %v706, %v738
          %v755 = vmul.f32 %v739, 0.03125
          %v756 = vmul.f32 %v740, 0.03125
          %v757 = vmul.f32 %v741, 0.03125
          %v758 = vmul.f32 %v742, 0.03125
          %v759 = vmul.f32 %v743, 0.03125
          %v760 = vmul.f32 %v744, 0.03125
          %v761 = vmul.f32 %v745, 0.03125
          %v762 = vmul.f32 %v746, 0.03125
          %v763 = vmul.f32 %v747, 0.03125
          %v764 = vmul.f32 %v748, 0.03125
          %v765 = vmul.f32 %v749, 0.03125
          %v766 = vmul.f32 %v750, 0.03125
          %v767 = vmul.f32 %v751, 0.03125
          %v768 = vmul.f32 %v752, 0.03125
          %v769 = vmul.f32 %v753, 0.03125
          %v770 = vmul.f32 %v754, 0.03125
          %v771 = vmax.f32 %v755, 0.0
          %v772 = vmax.f32 %v756, 0.0
          %v773 = vmax.f32 %v757, 0.0
          %v774 = vmax.f32 %v758, 0.0
          %v775 = vmax.f32 %v759, 0.0
          %v776 = vmax.f32 %v760, 0.0
          %v777 = vmax.f32 %v761, 0.0
          %v778 = vmax.f32 %v762, 0.0
          %v779 = vmax.f32 %v763, 0.0
          %v780 = vmax.f32 %v764, 0.0
          %v781 = vmax.f32 %v765, 0.0
          %v782 = vmax.f32 %v766, 0.0
          %v783 = vmax.f32 %v767, 0.0
          %v784 = vmax.f32 %v768, 0.0
          %v785 = vmax.f32 %v769, 0.0
          %v786 = vmax.f32 %v770, 0.0
          %v787 = vadd.f32 %v771, 1e-05
          %v788 = vadd.f32 %v772, 1e-05
          %v789 = vadd.f32 %v773, 1e-05
          %v790 = vadd.f32 %v774, 1e-05
          %v791 = vadd.f32 %v775, 1e-05
          %v792 = vadd.f32 %v776, 1e-05
          %v793 = vadd.f32 %v777, 1e-05
          %v794 = vadd.f32 %v778, 1e-05
          %v795 = vadd.f32 %v779, 1e-05
          %v796 = vadd.f32 %v780, 1e-05
          %v797 = vadd.f32 %v781, 1e-05
          %v798 = vadd.f32 %v782, 1e-05
          %v799 = vadd.f32 %v783, 1e-05
          %v800 = vadd.f32 %v784, 1e-05
          %v801 = vadd.f32 %v785, 1e-05
          %v802 = vadd.f32 %v786, 1e-05
          %v803 = vrsqrt.pop %v787
          %v804 = vrsqrt.pop %v788
          %v805 = vrsqrt.pop %v789
          %v806 = vrsqrt.pop %v790
          %v807 = vrsqrt.pop %v791
          %v808 = vrsqrt.pop %v792
          %v809 = vrsqrt.pop %v793
          %v810 = vrsqrt.pop %v794
          %v811 = vrsqrt.pop %v795
          %v812 = vrsqrt.pop %v796
          %v813 = vrsqrt.pop %v797
          %v814 = vrsqrt.pop %v798
          %v815 = vrsqrt.pop %v799
          %v816 = vrsqrt.pop %v800
          %v817 = vrsqrt.pop %v801
          %v818 = vrsqrt.pop %v802
          %v819 = vmul.f32 %v643, %v803
          %v820 = vmul.f32 %v644, %v804
          %v821 = vmul.f32 %v645, %v805
          %v822 = vmul.f32 %v646, %v806
          %v823 = vmul.f32 %v647, %v807
          %v824 = vmul.f32 %v648, %v808
          %v825 = vmul.f32 %v649, %v809
          %v826 = vmul.f32 %v650, %v810
          %v827 = vmul.f32 %v651, %v811
          %v828 = vmul.f32 %v652, %v812
          %v829 = vmul.f32 %v653, %v813
          %v830 = vmul.f32 %v654, %v814
          %v831 = vmul.f32 %v655, %v815
          %v832 = vmul.f32 %v656, %v816
          %v833 = vmul.f32 %v657, %v817
          %v834 = vmul.f32 %v658, %v818
          %v836 = vlaneseq
          %v837 = vshrl.u32 %v836, 7
          %v838 = vsub.s32 0, %v837
          %v839 = vrot.slane %v593, %v838
          %v841 = vmul.f32 %v819, %v839
          %v842 = vmul.f32 %v820, %v839
          %v843 = vmul.f32 %v821, %v839
          %v844 = vmul.f32 %v822, %v839
          %v845 = vmul.f32 %v823, %v839
          %v846 = vmul.f32 %v824, %v839
          %v847 = vmul.f32 %v825, %v839
          %v848 = vmul.f32 %v826, %v839
          %v849 = vmul.f32 %v827, %v839
          %v850 = vmul.f32 %v828, %v839
          %v851 = vmul.f32 %v829, %v839
          %v852 = vmul.f32 %v830, %v839
          %v853 = vmul.f32 %v831, %v839
          %v854 = vmul.f32 %v832, %v839
          %v855 = vmul.f32 %v833, %v839
          %v856 = vmul.f32 %v834, %v839
          %v858 = vlaneseq
          %v859 = vshrl.u32 %v858, 7
          %v860 = vsub.s32 0, %v859
          %v861 = vrot.slane %v594, %v860
          %v863 = vadd.f32 %v841, %v861
          %v864 = vadd.f32 %v842, %v861
          %v865 = vadd.f32 %v843, %v861
          %v866 = vadd.f32 %v844, %v861
          %v867 = vadd.f32 %v845, %v861
          %v868 = vadd.f32 %v846, %v861
          %v869 = vadd.f32 %v847, %v861
          %v870 = vadd.f32 %v848, %v861
          %v871 = vadd.f32 %v849, %v861
          %v872 = vadd.f32 %v850, %v861
          %v873 = vadd.f32 %v851, %v861
          %v874 = vadd.f32 %v852, %v861
          %v875 = vadd.f32 %v853, %v861
          %v876 = vadd.f32 %v854, %v861
          %v877 = vadd.f32 %v855, %v861
          %v878 = vadd.f32 %v856, %v861
          %v879 = vpack.c.bf16 %v864, %v863
          %v880 = vpack.c.bf16 %v866, %v865
          %v881 = vpack.c.bf16 %v868, %v867
          %v882 = vpack.c.bf16 %v870, %v869
          %v883 = vpack.c.bf16 %v872, %v871
          %v884 = vpack.c.bf16 %v874, %v873
          %v885 = vpack.c.bf16 %v876, %v875
          %v886 = vpack.c.bf16 %v878, %v877
          %v887 = vld [vmem:[#allocation9] sm:$0xff]
          %v888 = vld [vmem:[#allocation9 + $0x8] sm:$0xff]
          %v889 = vld [vmem:[#allocation9 + $0x10] sm:$0xff]
          %v890 = vld [vmem:[#allocation9 + $0x18] sm:$0xff]
          %v891 = vld [vmem:[#allocation9 + $0x20] sm:$0xff]
          %v892 = vld [vmem:[#allocation9 + $0x28] sm:$0xff]
          %v893 = vld [vmem:[#allocation9 + $0x30] sm:$0xff]
          %v894 = vld [vmem:[#allocation9 + $0x38] sm:$0xff]
          %v895 = vld [vmem:[#allocation9 + $0x40] sm:$0xff]
          %v896 = vld [vmem:[#allocation9 + $0x48] sm:$0xff]
          %v897 = vld [vmem:[#allocation9 + $0x50] sm:$0xff]
          %v898 = vld [vmem:[#allocation9 + $0x58] sm:$0xff]
          %v899 = vld [vmem:[#allocation9 + $0x60] sm:$0xff]
          %v900 = vld [vmem:[#allocation9 + $0x68] sm:$0xff]
          %v901 = vld [vmem:[#allocation9 + $0x70] sm:$0xff]
          %v902 = vld [vmem:[#allocation9 + $0x78] sm:$0xff]
          %v903 = vld [vmem:[%s10] sm:$0x3]
          %v905 = vlaneseq
          %v906 = vshrl.u32 %v905, 7
          %v907 = vsub.s32 0, %v906
          %v908 = vrot.slane %v903, %v907
          %v909 = vlaneseq
          %v910 = vshrl.u32 %v909, 7
          %v911 = vsub.s32 1, %v910
          %v912 = vrot.slane %v903, %v911
          %v931 = vunpack.c.l.b16 %v887
          %v932 = vunpack.c.h.b16 %v887
          %v933 = vunpack.c.l.b16 %v888
          %v934 = vunpack.c.h.b16 %v888
          %v935 = vunpack.c.l.b16 %v889
          %v936 = vunpack.c.h.b16 %v889
          %v937 = vunpack.c.l.b16 %v890
          %v938 = vunpack.c.h.b16 %v890
          %v939 = vunpack.c.l.b16 %v891
          %v940 = vunpack.c.h.b16 %v891
          %v941 = vunpack.c.l.b16 %v892
          %v942 = vunpack.c.h.b16 %v892
          %v943 = vunpack.c.l.b16 %v893
          %v944 = vunpack.c.h.b16 %v893
          %v945 = vunpack.c.l.b16 %v894
          %v946 = vunpack.c.h.b16 %v894
          %v947 = vunpack.c.l.b16 %v895
          %v948 = vunpack.c.h.b16 %v895
          %v949 = vunpack.c.l.b16 %v896
          %v950 = vunpack.c.h.b16 %v896
          %v951 = vunpack.c.l.b16 %v897
          %v952 = vunpack.c.h.b16 %v897
          %v953 = vunpack.c.l.b16 %v898
          %v954 = vunpack.c.h.b16 %v898
          %v955 = vunpack.c.l.b16 %v899
          %v956 = vunpack.c.h.b16 %v899
          %v957 = vunpack.c.l.b16 %v900
          %v958 = vunpack.c.h.b16 %v900
          %v959 = vunpack.c.l.b16 %v901
          %v960 = vunpack.c.h.b16 %v901
          %v961 = vunpack.c.l.b16 %v902
          %v962 = vunpack.c.h.b16 %v902
          %v963 = vpack.c.b16 %v933, %v931
          %v964 = vpack.c.b16 %v934, %v932
          %v965 = vpack.c.b16 %v937, %v935
          %v966 = vpack.c.b16 %v938, %v936
          %v967 = vpack.c.b16 %v941, %v939
          %v968 = vpack.c.b16 %v942, %v940
          %v969 = vpack.c.b16 %v945, %v943
          %v970 = vpack.c.b16 %v946, %v944
          %v971 = vpack.c.b16 %v949, %v947
          %v972 = vpack.c.b16 %v950, %v948
          %v973 = vpack.c.b16 %v953, %v951
          %v974 = vpack.c.b16 %v954, %v952
          %v975 = vpack.c.b16 %v957, %v955
          %v976 = vpack.c.b16 %v958, %v956
          %v977 = vpack.c.b16 %v961, %v959
          %v978 = vpack.c.b16 %v962, %v960
          %995 = vmatprep.subr.bf16.mxu0 %v964
          %996 = vmatpush1.bf16.msra.mxu0 %v963
          %997 = vmatprep.subr.bf16.mxu0 %v966
          %998 = vmatpush1.bf16.msra.mxu0 %v965
          %999 = vmatprep.subr.bf16.mxu0 %v968
          %1000 = vmatpush1.bf16.msra.mxu0 %v967
          %1001 = vmatprep.subr.bf16.mxu0 %v970
          %1002 = vmatpush1.bf16.msra.mxu0 %v969
          %1003 = vmatprep.subr.bf16.mxu0 %v972
          %1004 = vmatpush1.bf16.msra.mxu0 %v971
          %1005 = vmatprep.subr.bf16.mxu0 %v974
          %1006 = vmatpush1.bf16.msra.mxu0 %v973
          %1007 = vmatprep.subr.bf16.mxu0 %v976
          %1008 = vmatpush1.bf16.msra.mxu0 %v975
          %1009 = vmatprep.subr.bf16.mxu0 %v978
          %1010 = vmatpush1.bf16.msra.mxu0 %v977
          %1011 = vmatprep.subr.bf16.mxu0 0
          %1012 = vmatpush1.bf16.msra.mxu0 0
          %1013 = vmatprep.subr.bf16.mxu0 0
          %1014 = vmatpush1.bf16.msra.mxu0 0
          %1015 = vmatprep.subr.bf16.mxu0 0
          %1016 = vmatpush1.bf16.msra.mxu0 0
          %1017 = vmatprep.subr.bf16.mxu0 0
          %1018 = vmatpush1.bf16.msra.mxu0 0
          %1019 = vmatprep.subr.bf16.mxu0 0
          %1020 = vmatpush1.bf16.msra.mxu0 0
          %1021 = vmatprep.subr.bf16.mxu0 0
          %1022 = vmatpush1.bf16.msra.mxu0 0
          %1023 = vmatprep.subr.bf16.mxu0 0
          %1024 = vmatpush1.bf16.msra.mxu0 0
          %1025 = vmatprep.subr.bf16.mxu0 0
          %1026 = vmatpush1.bf16.msra.mxu0 0
          %1027 = vmatprep.mubr.bf16.mxu0 0
          %1028 = vmatmul.mubr.bf16.gmra.mrb[0].mxu0 %v879
          %v1029 = vpop.f32.mrb[0].mxu0
          %v1030 = vadd.f32 %v908, %v1029
          %v1031 = vpop.f32.mrb[0].mxu0
          %v1032 = vadd.f32 %v912, %v1031
          %v1033 = vpop.f32.mrb[0].mxu0
          %v1034 = vadd.f32 %v908, %v1033
          %v1035 = vpop.f32.mrb[0].mxu0
          %v1036 = vadd.f32 %v912, %v1035
          %1037 = vmatprep.mubr.bf16.mxu0 0
          %1038 = vmatmul.mubr.bf16.gmra.mrb[0].mxu0 %v880
          %v1039 = vpop.f32.mrb[0].mxu0
          %v1040 = vadd.f32 %v908, %v1039
          %v1041 = vpop.f32.mrb[0].mxu0
          %v1042 = vadd.f32 %v912, %v1041
          %v1043 = vpop.f32.mrb[0].mxu0
          %v1044 = vadd.f32 %v908, %v1043
          %v1045 = vpop.f32.mrb[0].mxu0
          %v1046 = vadd.f32 %v912, %v1045
          %1047 = vmatprep.mubr.bf16.mxu0 0
          %1048 = vmatmul.mubr.bf16.gmra.mrb[0].mxu0 %v881
          %v1049 = vpop.f32.mrb[0].mxu0
          %v1050 = vadd.f32 %v908, %v1049
          %v1051 = vpop.f32.mrb[0].mxu0
          %v1052 = vadd.f32 %v912, %v1051
          %v1053 = vpop.f32.mrb[0].mxu0
          %v1054 = vadd.f32 %v908, %v1053
          %v1055 = vpop.f32.mrb[0].mxu0
          %v1056 = vadd.f32 %v912, %v1055
          %1057 = vmatprep.mubr.bf16.mxu0 0
          %1058 = vmatmul.mubr.bf16.gmra.mrb[0].mxu0 %v882
          %v1059 = vpop.f32.mrb[0].mxu0
          %v1060 = vadd.f32 %v908, %v1059
          %v1061 = vpop.f32.mrb[0].mxu0
          %v1062 = vadd.f32 %v912, %v1061
          %v1063 = vpop.f32.mrb[0].mxu0
          %v1064 = vadd.f32 %v908, %v1063
          %v1065 = vpop.f32.mrb[0].mxu0
          %v1066 = vadd.f32 %v912, %v1065
          %1067 = vmatprep.mubr.bf16.mxu0 0
          %1068 = vmatmul.mubr.bf16.gmra.mrb[0].mxu0 %v883
          %v1069 = vpop.f32.mrb[0].mxu0
          %v1070 = vadd.f32 %v908, %v1069
          %v1071 = vpop.f32.mrb[0].mxu0
          %v1072 = vadd.f32 %v912, %v1071
          %v1073 = vpop.f32.mrb[0].mxu0
          %v1074 = vadd.f32 %v908, %v1073
          %v1075 = vpop.f32.mrb[0].mxu0
          %v1076 = vadd.f32 %v912, %v1075
          %1077 = vmatprep.mubr.bf16.mxu0 0
          %1078 = vmatmul.mubr.bf16.gmra.mrb[0].mxu0 %v884
          %v1079 = vpop.f32.mrb[0].mxu0
          %v1080 = vadd.f32 %v908, %v1079
          %v1081 = vpop.f32.mrb[0].mxu0
          %v1082 = vadd.f32 %v912, %v1081
          %v1083 = vpop.f32.mrb[0].mxu0
          %v1084 = vadd.f32 %v908, %v1083
          %v1085 = vpop.f32.mrb[0].mxu0
          %v1086 = vadd.f32 %v912, %v1085
          %1087 = vmatprep.mubr.bf16.mxu0 0
          %1088 = vmatmul.mubr.bf16.gmra.mrb[0].mxu0 %v885
          %v1089 = vpop.f32.mrb[0].mxu0
          %v1090 = vadd.f32 %v908, %v1089
          %v1091 = vpop.f32.mrb[0].mxu0
          %v1092 = vadd.f32 %v912, %v1091
          %v1093 = vpop.f32.mrb[0].mxu0
          %v1094 = vadd.f32 %v908, %v1093
          %v1095 = vpop.f32.mrb[0].mxu0
          %v1096 = vadd.f32 %v912, %v1095
          %1097 = vmatprep.mubr.bf16.mxu0 0
          %1098 = vmatmul.mubr.bf16.gmra.mrb[0].mxu0 %v886
          %v1099 = vpop.f32.mrb[0].mxu0
          %v1100 = vadd.f32 %v908, %v1099
          %v1101 = vpop.f32.mrb[0].mxu0
          %v1102 = vadd.f32 %v912, %v1101
          %v1103 = vpop.f32.mrb[0].mxu0
          %v1104 = vadd.f32 %v908, %v1103
          %v1105 = vpop.f32.mrb[0].mxu0
          %v1106 = vadd.f32 %v912, %v1105
          %1107 = vdwg.mxu0
          %v1108 = vpack.c.bf16 %v1034, %v1030
          %v1109 = vpack.c.bf16 %v1036, %v1032
          %v1110 = vpack.c.bf16 %v1044, %v1040
          %v1111 = vpack.c.bf16 %v1046, %v1042
          %v1112 = vpack.c.bf16 %v1054, %v1050
          %v1113 = vpack.c.bf16 %v1056, %v1052
          %v1114 = vpack.c.bf16 %v1064, %v1060
          %v1115 = vpack.c.bf16 %v1066, %v1062
          %v1116 = vpack.c.bf16 %v1074, %v1070
          %v1117 = vpack.c.bf16 %v1076, %v1072
          %v1118 = vpack.c.bf16 %v1084, %v1080
          %v1119 = vpack.c.bf16 %v1086, %v1082
          %v1120 = vpack.c.bf16 %v1094, %v1090
          %v1121 = vpack.c.bf16 %v1096, %v1092
          %v1122 = vpack.c.bf16 %v1104, %v1100
          %v1123 = vpack.c.bf16 %v1106, %v1102
          %1124 = vst [vmem:[#allocation2] sm:$0xff] %v1108
          %1125 = vst [vmem:[#allocation2 + $0x8] sm:$0xff] %v1109
          %1126 = vst [vmem:[#allocation2 + $0x10] sm:$0xff] %v1110
          %1127 = vst [vmem:[#allocation2 + $0x18] sm:$0xff] %v1111
          %1128 = vst [vmem:[#allocation2 + $0x20] sm:$0xff] %v1112
          %1129 = vst [vmem:[#allocation2 + $0x28] sm:$0xff] %v1113
          %1130 = vst [vmem:[#allocation2 + $0x30] sm:$0xff] %v1114
          %1131 = vst [vmem:[#allocation2 + $0x38] sm:$0xff] %v1115
          %1132 = vst [vmem:[#allocation2 + $0x40] sm:$0xff] %v1116
          %1133 = vst [vmem:[#allocation2 + $0x48] sm:$0xff] %v1117
          %1134 = vst [vmem:[#allocation2 + $0x50] sm:$0xff] %v1118
          %1135 = vst [vmem:[#allocation2 + $0x58] sm:$0xff] %v1119
          %1136 = vst [vmem:[#allocation2 + $0x60] sm:$0xff] %v1120
          %1137 = vst [vmem:[#allocation2 + $0x68] sm:$0xff] %v1121
          %1138 = vst [vmem:[#allocation2 + $0x70] sm:$0xff] %v1122
          %1139 = vst [vmem:[#allocation2 + $0x78] sm:$0xff] %v1123
        $region92: #{tpu_custom_call.1} parent=71 // pred_fallthru
          _
        %v1140 = vld [vmem:[%s485] sm:$0xf]
        %v1141 = vunpack.c.l.bf16 %v1140
        %v1142 = vld [vmem:[%s3] sm:$0x1]
        %v1143 = vld [vmem:[%s4] sm:$0x1]
        %1144 = vadd.xlane.f32.xlu0 %v1141
        %v1145 = vpop.xlane.xlu0 %1144
        %v1146 = vmul.f32 %v1145, 0.03125
        %v1147 = vsub.f32 %v1141, %v1146
        %v1148 = vmul.f32 %v1147, %v1147
        %1149 = vadd.xlane.f32.xlu0 %v1148
        %v1150 = vpop.xlane.xlu0 %1149
        %v1151 = vmul.f32 %v1146, 96.0
        %v1152 = vmul.f32 %v1151, %v1146
        %v1153 = vsub.f32 %v1150, %v1152
        %v1154 = vmul.f32 %v1153, 0.03125
        %v1155 = vmax.f32 %v1154, 0.0
        %v1156 = vadd.f32 %v1155, 1e-05
        %v1157 = vrsqrt.pop %v1156
        %v1158 = vmul.f32 %v1147, %v1157
        %v1160 = vlaneseq
        %v1161 = vshrl.u32 %v1160, 7
        %v1162 = vsub.s32 0, %v1161
        %v1163 = vrot.slane %v1142, %v1162
        %v1165 = vmul.f32 %v1158, %v1163
        %v1167 = vlaneseq
        %v1168 = vshrl.u32 %v1167, 7
        %v1169 = vsub.s32 0, %v1168
        %v1170 = vrot.slane %v1143, %v1169
        %v1172 = vadd.f32 %v1165, %v1170
        %v1173 = vpack.c.bf16 %v1172, %v1172
        %v1174 = vld [vmem:[#allocation8] sm:$0xf]
        %v1175 = vld [vmem:[#allocation8 + $0x4] sm:$0xf]
        %v1176 = vld [vmem:[#allocation8 + $0x8] sm:$0xf]
        %v1177 = vld [vmem:[#allocation8 + $0xc] sm:$0xf]
        %v1178 = vld [vmem:[#allocation8 + $0x10] sm:$0xf]
        %v1179 = vld [vmem:[#allocation8 + $0x14] sm:$0xf]
        %v1180 = vld [vmem:[#allocation8 + $0x18] sm:$0xf]
        %v1181 = vld [vmem:[#allocation8 + $0x1c] sm:$0xf]
        %v1182 = vld [vmem:[#allocation8 + $0x20] sm:$0xf]
        %v1183 = vld [vmem:[#allocation8 + $0x24] sm:$0xf]
        %v1184 = vld [vmem:[#allocation8 + $0x28] sm:$0xf]
        %v1185 = vld [vmem:[#allocation8 + $0x2c] sm:$0xf]
        %v1186 = vld [vmem:[#allocation8 + $0x30] sm:$0xf]
        %v1187 = vld [vmem:[#allocation8 + $0x34] sm:$0xf]
        %v1188 = vld [vmem:[#allocation8 + $0x38] sm:$0xf]
        %v1189 = vld [vmem:[#allocation8 + $0x3c] sm:$0xf]
        %v1190 = vld [vmem:[%s8] sm:$0x1]
        %v1192 = vlaneseq
        %v1193 = vshrl.u32 %v1192, 7
        %v1194 = vsub.s32 0, %v1193
        %v1195 = vrot.slane %v1190, %v1194
        %v1213 = vunpack.c.l.b16 %v1174
        %v1214 = vunpack.c.l.b16 %v1175
        %v1215 = vunpack.c.l.b16 %v1176
        %v1216 = vunpack.c.l.b16 %v1177
        %v1217 = vunpack.c.l.b16 %v1178
        %v1218 = vunpack.c.l.b16 %v1179
        %v1219 = vunpack.c.l.b16 %v1180
        %v1220 = vunpack.c.l.b16 %v1181
        %v1221 = vunpack.c.l.b16 %v1182
        %v1222 = vunpack.c.l.b16 %v1183
        %v1223 = vunpack.c.l.b16 %v1184
        %v1224 = vunpack.c.l.b16 %v1185
        %v1225 = vunpack.c.l.b16 %v1186
        %v1226 = vunpack.c.l.b16 %v1187
        %v1227 = vunpack.c.l.b16 %v1188
        %v1228 = vunpack.c.l.b16 %v1189
        %v1229 = vpack.c.b16 %v1214, %v1213
        %v1230 = vpack.c.b16 %v1216, %v1215
        %v1231 = vpack.c.b16 %v1218, %v1217
        %v1232 = vpack.c.b16 %v1220, %v1219
        %v1233 = vpack.c.b16 %v1222, %v1221
        %v1234 = vpack.c.b16 %v1224, %v1223
        %v1235 = vpack.c.b16 %v1226, %v1225
        %v1236 = vpack.c.b16 %v1228, %v1227
        %1245 = vmatprep.subr.bf16.mxu0 0
        %1246 = vmatpush1.bf16.msra.mxu0 %v1229
        %1247 = vmatprep.subr.bf16.mxu0 0
        %1248 = vmatpush1.bf16.msra.mxu0 %v1230
        %1249 = vmatprep.subr.bf16.mxu0 0
        %1250 = vmatpush1.bf16.msra.mxu0 %v1231
        %1251 = vmatprep.subr.bf16.mxu0 0
        %1252 = vmatpush1.bf16.msra.mxu0 %v1232
        %1253 = vmatprep.subr.bf16.mxu0 0
        %1254 = vmatpush1.bf16.msra.mxu0 %v1233
        %1255 = vmatprep.subr.bf16.mxu0 0
        %1256 = vmatpush1.bf16.msra.mxu0 %v1234
        %1257 = vmatprep.subr.bf16.mxu0 0
        %1258 = vmatpush1.bf16.msra.mxu0 %v1235
        %1259 = vmatprep.subr.bf16.mxu0 0
        %1260 = vmatpush1.bf16.msra.mxu0 %v1236
        %1261 = vmatprep.subr.bf16.mxu0 0
        %1262 = vmatpush1.bf16.msra.mxu0 0
        %1263 = vmatprep.subr.bf16.mxu0 0
        %1264 = vmatpush1.bf16.msra.mxu0 0
        %1265 = vmatprep.subr.bf16.mxu0 0
        %1266 = vmatpush1.bf16.msra.mxu0 0
        %1267 = vmatprep.subr.bf16.mxu0 0
        %1268 = vmatpush1.bf16.msra.mxu0 0
        %1269 = vmatprep.subr.bf16.mxu0 0
        %1270 = vmatpush1.bf16.msra.mxu0 0
        %1271 = vmatprep.subr.bf16.mxu0 0
        %1272 = vmatpush1.bf16.msra.mxu0 0
        %1273 = vmatprep.subr.bf16.mxu0 0
        %1274 = vmatpush1.bf16.msra.mxu0 0
        %1275 = vmatprep.subr.bf16.mxu0 0
        %1276 = vmatpush1.bf16.msra.mxu0 0
        %1277 = vmatprep.mubr.bf16.mxu0 0
        %1278 = vmatmul.mubr.bf16.gmra.mrb[0].mxu0 %v1173
        %v1279 = vpop.f32.mrb[0].mxu0
        %v1280 = vadd.f32 %v1195, %v1279
        %v1281 = vpop.f32.mrb[0].mxu0
        %v1282 = vpop.f32.mrb[0].mxu0
        %v1283 = vpop.f32.mrb[0].mxu0
        %1284 = vdwg.mxu0
        %v1285 = vpack.c.bf16 %v1280, %v1280
        %v1286 = vld [vmem:[#allocation2] sm:$0xff]
        %v1287 = vld [vmem:[#allocation2 + $0x10] sm:$0xff]
        %v1288 = vld [vmem:[#allocation2 + $0x20] sm:$0xff]
        %v1289 = vld [vmem:[#allocation2 + $0x30] sm:$0xff]
        %v1290 = vld [vmem:[#allocation2 + $0x40] sm:$0xff]
        %v1291 = vld [vmem:[#allocation2 + $0x50] sm:$0xff]
        %v1292 = vld [vmem:[#allocation2 + $0x60] sm:$0xff]
        %v1293 = vld [vmem:[#allocation2 + $0x70] sm:$0xff]
        %v1294 = vld [vmem:[#allocation2 + $0x8] sm:$0xff]
        %v1295 = vld [vmem:[#allocation2 + $0x18] sm:$0xff]
        %v1296 = vld [vmem:[#allocation2 + $0x28] sm:$0xff]
        %v1297 = vld [vmem:[#allocation2 + $0x38] sm:$0xff]
        %v1298 = vld [vmem:[#allocation2 + $0x48] sm:$0xff]
        %v1299 = vld [vmem:[#allocation2 + $0x58] sm:$0xff]
        %v1300 = vld [vmem:[#allocation2 + $0x68] sm:$0xff]
        %v1301 = vld [vmem:[#allocation2 + $0x78] sm:$0xff]
        %v1302 = vld [vmem:[%s555] sm:$0x1]
        %v1304 = vlaneseq
        %v1305 = vshrl.u32 %v1304, 7
        %v1306 = vsub.s32 0, %v1305
        %v1307 = vrot.slane %v1302, %v1306
        %1309 = vmatprep.subr.bf16.mxu0 0
        %1310 = vmatpush1.bf16.xpose.msra.mxu0 %v1286
        %1311 = vmatprep.subr.bf16.mxu0 0
        %1312 = vmatpush1.bf16.xpose.msra.mxu0 %v1287
        %1313 = vmatprep.subr.bf16.mxu0 0
        %1314 = vmatpush1.bf16.xpose.msra.mxu0 %v1288
        %1315 = vmatprep.subr.bf16.mxu0 0
        %1316 = vmatpush1.bf16.xpose.msra.mxu0 %v1289
        %1317 = vmatprep.subr.bf16.mxu0 0
        %1318 = vmatpush1.bf16.xpose.msra.mxu0 %v1290
        %1319 = vmatprep.subr.bf16.mxu0 0
        %1320 = vmatpush1.bf16.xpose.msra.mxu0 %v1291
        %1321 = vmatprep.subr.bf16.mxu0 0
        %1322 = vmatpush1.bf16.xpose.msra.mxu0 %v1292
        %1323 = vmatprep.subr.bf16.mxu0 0
        %1324 = vmatpush1.bf16.xpose.msra.mxu0 %v1293
        %1325 = vmatprep.subr.bf16.mxu0 0
        %1326 = vmatpush1.bf16.xpose.msra.mxu0 0
        %1327 = vmatprep.subr.bf16.mxu0 0
        %1328 = vmatpush1.bf16.xpose.msra.mxu0 0
        %1329 = vmatprep.subr.bf16.mxu0 0
        %1330 = vmatpush1.bf16.xpose.msra.mxu0 0
        %1331 = vmatprep.subr.bf16.mxu0 0
        %1332 = vmatpush1.bf16.xpose.msra.mxu0 0
        %1333 = vmatprep.subr.bf16.mxu0 0
        %1334 = vmatpush1.bf16.xpose.msra.mxu0 0
        %1335 = vmatprep.subr.bf16.mxu0 0
        %1336 = vmatpush1.bf16.xpose.msra.mxu0 0
        %1337 = vmatprep.subr.bf16.mxu0 0
        %1338 = vmatpush1.bf16.xpose.msra.mxu0 0
        %1339 = vmatprep.subr.bf16.mxu0 0
        %1340 = vmatpush1.bf16.xpose.msra.mxu0 0
        %1341 = vmatprep.mubr.bf16.mxu0 0
        %1342 = vmatmul.mubr.bf16.gmra.mrb[0].mxu0 %v1285
        %v1343 = vpop.f32.mrb[0].mxu0
        %v1344 = vadd.f32 %v1307, %v1343
        %v1345 = vpop.f32.mrb[0].mxu0
        %v1346 = vpop.f32.mrb[0].mxu0
        %v1347 = vpop.f32.mrb[0].mxu0
        %1348 = vdwg.mxu0
        %1349 = vmax.xlane.f32.xlu0 %v1344
        %v1350 = vpop.xlane.xlu0 %1349
        %v1351 = vsub.f32 %v1344, %v1350
        %v1352 = vmul.f32 %v1351, 1.442695
        %v1353 = vpow.pop %v1352
        %1354 = vadd.xlane.f32.xlu0 %v1353
        %v1355 = vpop.xlane.xlu0 %1354
        %v1356 = vrcp.pop %v1355
        %v1357 = vmul.f32 %v1353, %v1356
        %v1358 = vpack.c.bf16 %v1357, %v1357
        %1359 = vmatprep.subr.bf16.mxu0 0
        %1360 = vmatpush1.bf16.msra.mxu0 %v1294
        %1361 = vmatprep.subr.bf16.mxu0 0
        %1362 = vmatpush1.bf16.msra.mxu0 %v1295
        %1363 = vmatprep.subr.bf16.mxu0 0
        %1364 = vmatpush1.bf16.msra.mxu0 %v1296
        %1365 = vmatprep.subr.bf16.mxu0 0
        %1366 = vmatpush1.bf16.msra.mxu0 %v1297
        %1367 = vmatprep.subr.bf16.mxu0 0
        %1368 = vmatpush1.bf16.msra.mxu0 %v1298
        %1369 = vmatprep.subr.bf16.mxu0 0
        %1370 = vmatpush1.bf16.msra.mxu0 %v1299
        %1371 = vmatprep.subr.bf16.mxu0 0
        %1372 = vmatpush1.bf16.msra.mxu0 %v1300
        %1373 = vmatprep.subr.bf16.mxu0 0
        %1374 = vmatpush1.bf16.msra.mxu0 %v1301
        %1375 = vmatprep.subr.bf16.mxu0 0
        %1376 = vmatpush1.bf16.msra.mxu0 0
        %1377 = vmatprep.subr.bf16.mxu0 0
        %1378 = vmatpush1.bf16.msra.mxu0 0
        %1379 = vmatprep.subr.bf16.mxu0 0
        %1380 = vmatpush1.bf16.msra.mxu0 0
        %1381 = vmatprep.subr.bf16.mxu0 0
        %1382 = vmatpush1.bf16.msra.mxu0 0
        %1383 = vmatprep.subr.bf16.mxu0 0
        %1384 = vmatpush1.bf16.msra.mxu0 0
        %1385 = vmatprep.subr.bf16.mxu0 0
        %1386 = vmatpush1.bf16.msra.mxu0 0
        %1387 = vmatprep.subr.bf16.mxu0 0
        %1388 = vmatpush1.bf16.msra.mxu0 0
        %1389 = vmatprep.subr.bf16.mxu0 0
        %1390 = vmatpush1.bf16.msra.mxu0 0
        %1391 = vmatprep.mubr.bf16.mxu0 0
        %1392 = vmatmul.mubr.bf16.gmra.mrb[0].mxu0 %v1358
        %v1393 = vpop.f32.mrb[0].mxu0
        %v1394 = vadd.f32 0.0, %v1393
        %v1395 = vpop.f32.mrb[0].mxu0
        %v1396 = vpop.f32.mrb[0].mxu0
        %v1397 = vpop.f32.mrb[0].mxu0
        %1398 = vdwg.mxu0
        %v1399 = vld [vmem:[%s11] sm:$0x1]
        %v1400 = vld [vmem:[%s12] sm:$0x1]
        %1401 = vadd.xlane.f32.xlu0 %v1394
        %v1402 = vpop.xlane.xlu0 %1401
        %v1403 = vmul.f32 %v1402, 0.03125
        %v1404 = vsub.f32 %v1394, %v1403
        %v1405 = vmul.f32 %v1404, %v1404
        %1406 = vadd.xlane.f32.xlu0 %v1405
        %v1407 = vpop.xlane.xlu0 %1406
        %v1408 = vmul.f32 %v1403, 96.0
        %v1409 = vmul.f32 %v1408, %v1403
        %v1410 = vsub.f32 %v1407, %v1409
        %v1411 = vmul.f32 %v1410, 0.03125
        %v1412 = vmax.f32 %v1411, 0.0
        %v1413 = vadd.f32 %v1412, 1e-05
        %v1414 = vrsqrt.pop %v1413
        %v1415 = vmul.f32 %v1404, %v1414
        %v1417 = vlaneseq
        %v1418 = vshrl.u32 %v1417, 7
        %v1419 = vsub.s32 0, %v1418
        %v1420 = vrot.slane %v1399, %v1419
        %v1422 = vmul.f32 %v1415, %v1420
        %v1424 = vlaneseq
        %v1425 = vshrl.u32 %v1424, 7
        %v1426 = vsub.s32 0, %v1425
        %v1427 = vrot.slane %v1400, %v1426
        %v1429 = vadd.f32 %v1422, %v1427
        %v1430 = vpack.c.bf16 %v1429, %v1429
        %1431 = vst [vmem:[%s552] sm:$0xf] %v1430
        %s1432 = sand.u32 %s346, 1
        %s1433 = scalar_lea.sflag [#allocation5], %s1432
        %s1434 = sand.u32 %s346, 1
        %s1435 = smul.addr %s1434, 4
        %s1436 = scalar_lea.vmem [#allocation11], %s1435
        // Predicated region
        $region93: #{tpu_custom_call.1} parent=71 // pred_check
          %p1437 = pneg %p356
        $region94: #{tpu_custom_call.1} parent=71 // pred_check_branch
          %1439 = sbr.rel (%p1437) target = $region96
        $region95: #{tpu_custom_call.1} parent=71 // pred_region
          %s1441 = ssub.s32 64, 64
          %1442 = vsyncadd %s1433, %s1441
          %s1443 = sadd.s32 %s39, %s38
          %s1444 = smul.addr %s1443, 64
          %s1445 = scalar_lea.hbm %s13, %s1444
          %s1447 = sshll.u32 %s1436, 4
          %s1448 = int_to_ptr.vmem [resolvable:$true] %s1447
          %1450 = dma.vmem_to_hbm [thread:$0]  %s1448, 64, %s1445, %s1433
        $region96: #{tpu_custom_call.1} parent=71 // pred_fallthru
          _
      $region72: #{tpu_custom_call.1} parent=5 // pred_fallthru
        _
      %p1451 = scmp.le.s32.totalorder 2, %s29
      // Predicated region
      $region97: #{tpu_custom_call.1} parent=5 // pred_check
        %p1452 = pneg %p1451
      $region98: #{tpu_custom_call.1} parent=5 // pred_check_branch
        %1454 = sbr.rel (%p1452) target = $region100
      $region99: #{tpu_custom_call.1} parent=5 // pred_region
        %s1455 = ssub.s32 %s29, 2
        // Predicated region
        $region101: #{tpu_custom_call.1} parent=99 // pred_check
          %p1456 = pneg %p362
        $region102: #{tpu_custom_call.1} parent=99 // pred_check_branch
          %1458 = sbr.rel (%p1456) target = $region104
        $region103: #{tpu_custom_call.1} parent=99 // pred_region
          %s1459 = sand.u32 %s347, 1
          %s1460 = scalar_lea.sflag [#allocation5], %s1459
          %s1461 = sand.u32 %s347, 1
          %s1462 = smul.addr %s1461, 4
          %s1463 = scalar_lea.vmem [#allocation11], %s1462
          %1464 = dma.done %s1460, 64
        $region104: #{tpu_custom_call.1} parent=99 // pred_fallthru
          _
      $region100: #{tpu_custom_call.1} parent=5 // pred_fallthru
        _
    $region6: #{tpu_custom_call.1} parent=1 // loop_footer
      %s33 = sadd.s32 1, %s29
    $region7: #{tpu_custom_call.1} parent=1 // loop_footer_branch
      %28 = sbr.rel target = $region3
    $region8: #{tpu_custom_call.1} parent=1 // loop_exit
      _
    %1465 = vsyncpa [#allocation4], 1
    %s1466 = scalar_lea.sflag [#allocation4], 1
    %1467 = vsyncpa %s1466, 1
    %1468 = vsyncpa [#allocation7], 1
    %s1469 = scalar_lea.sflag [#allocation7], 1
    %1470 = vsyncpa %s1469, 1
    %1471 = vsyncpa [#allocation10], 1
    %1472 = vsyncpa [#allocation5], 1
    %s1473 = scalar_lea.sflag [#allocation5], 1
    %1474 = vsyncpa %s1473, 1

</llo_original>
